<compile_context>
chip_gen: v7x
topology: tpu7x:2x2x1
jax: 0.10.0
libtpu: 0.0.40
codegen_flags: <defaults>
</compile_context>

<pallas_src>
import functools

import jax
import jax.numpy as jnp
from jax.experimental import pallas as pl
from jax.experimental.pallas import tpu as pltpu

_BN_EPS = 1e-5


# ----------------------------- fused Pallas kernel ---------------------------

def _fused_se_block_kernel(stride, Ho, Wo, Cout, s0, has_proj, *refs):
    """One sample per grid step.

    Spatial positions are flattened over a width-padded grid of Wp = Wo + 2
    columns so every 3x3 tap of a stride-1 conv is a contiguous row slice at a
    static offset (ky*Wp + kx).  conv1's stride is pre-resolved by a parity
    (stride x stride) decomposition of the padded input (done in the wrapper).
    """
    Wp = Wo + 2
    M = Ho * Wp                    # rows of the flattened (padded-width) output
    Lg = (Ho + 3) * Wp             # rows of one parity grid of the padded input

    if has_proj:
        (xg_ref, mask_ref, xs_ref, w1_ref, b1_ref, w2_ref, b2_ref,
         wfc1_ref, wfc2_ref, wsc_ref, bsc_ref, o_ref, xf_ref, p2_ref) = refs
    else:
        (xg_ref, mask_ref, xs_ref, w1_ref, b1_ref, w2_ref, b2_ref,
         wfc1_ref, wfc2_ref, o_ref, xf_ref, p2_ref) = refs

    mask = mask_ref[...]           # (M, 1) f32: 1.0 on valid cols, 0.0 on pads

    # Upcast the bf16 input block once into f32 scratch: HBM->VMEM DMA stays at
    # bf16 width while the 9 shifted tap slices below read unpacked f32 rows
    # (no sublane-offset slicing of packed bf16).
    xf_ref[...] = xg_ref[...].astype(jnp.float32)

    # ---- conv1 (3x3, stride s) as 9 shifted-slice matmuls; bn1 scale folded.
    acc1 = None
    for ky in range(3):
        for kx in range(3):
            g = (ky % stride) * stride + (kx % stride)          # parity grid id
            off = g * Lg + (ky // stride) * Wp + (kx // stride)
            lhs = xf_ref[pl.ds(off, M), :].astype(jnp.bfloat16)
            d = jnp.dot(lhs, w1_ref[ky * 3 + kx],
                        preferred_element_type=jnp.float32)
            acc1 = d if acc1 is None else acc1 + d
    out1 = jnp.maximum(acc1 + b1_ref[...], 0.0) * mask          # relu + zero pad

    # ---- stage out1 in VMEM as conv2's zero-padded input (never hits HBM).
    # Only the halo rows need zeroing; the interior is rewritten every step.
    scratch_rows = p2_ref.shape[0]
    tail = ((s0 + M) // 8) * 8                                  # 8-aligned start
    p2_ref[pl.ds(0, s0), :] = jnp.zeros((s0, Cout), jnp.float32)
    p2_ref[pl.ds(tail, scratch_rows - tail), :] = jnp.zeros(
        (scratch_rows - tail, Cout), jnp.float32)
    p2_ref[pl.ds(s0, M), :] = out1

    # ---- conv2 (3x3, stride 1); bn2 scale folded into w2.
    base = s0 - Wp - 1
    acc2 = None
    for ky in range(3):
        for kx in range(3):
            lhs = p2_ref[pl.ds(base + ky * Wp + kx, M), :].astype(jnp.bfloat16)
            d = jnp.dot(lhs, w2_ref[ky * 3 + kx],
                        preferred_element_type=jnp.float32)
            acc2 = d if acc2 is None else acc2 + d
    out2 = acc2 + b2_ref[...]

    # ---- Squeeze-Excite (pool over valid positions only; tiny FCs in f32).
    pooled = jnp.sum(out2 * mask, axis=0, keepdims=True) * (1.0 / (Ho * Wo))
    y = jnp.maximum(jnp.dot(pooled, wfc1_ref[...],
                            preferred_element_type=jnp.float32), 0.0)
    y = jax.nn.sigmoid(jnp.dot(y, wfc2_ref[...],
                               preferred_element_type=jnp.float32))

    # ---- shortcut (1x1 conv + bn projection, or identity) + add + final relu.
    if has_proj:
        sc = jnp.dot(xs_ref[...], wsc_ref[...],
                     preferred_element_type=jnp.float32) + bsc_ref[...]
    else:
        sc = xs_ref[...].astype(jnp.float32)
    # NOTE: the two flat-layout pad columns of out2 are NOT zeroed here; the
    # wrapper slices them off.  Mask them if a consumer ever reads this layout.
    o_ref[...] = jnp.maximum(out2 * y + sc, 0.0)


# ------------------------------ JAX wrapper -----------------------------------

def _fold_bn(bn):
    gamma, beta, mean, var = bn
    scale = gamma * jax.lax.rsqrt(var + _BN_EPS)
    bias = beta - mean * scale
    return scale[None, :], bias[None, :]            # (1, C) each


def _nbytes(a):
    return int(a.size) * a.dtype.itemsize


def residual_se_basic_block(x_nchw, params, *, stride):
    """Forward pass of ResidualSEBasicBlock. Input/output NCHW like PyTorch."""
    # TODO(synk): training-mode BatchNorm (batch statistics + running-stat
    # update) is not modeled; inference-mode folded BN is used.
    # Activations are staged in bf16 (halves HBM traffic of the wrapper passes
    # and of the kernel's streaming inputs).
    x = jnp.transpose(x_nchw, (0, 2, 3, 1)).astype(jnp.bfloat16)  # NCHW -> NHWC
    N, H, W, Cin = x.shape
    Cout = params["w1"].shape[0]
    Cr = params["fc1"].shape[0]

    Ho = (H - 1) // stride + 1
    Wo = (W - 1) // stride + 1
    Wp = Wo + 2                        # padded-width flat layout
    Hg = Ho + 3                        # parity-grid rows (flat-layout slack incl.)
    Lg = Hg * Wp
    M = Ho * Wp
    G = stride * stride
    s0 = ((Wp + 1 + 7) // 8) * 8       # sublane-aligned start of out1 in scratch
    scratch_rows = ((s0 + M + Wp + 1 + 7) // 8) * 8

    # Fold BN scales into conv weights; weights go to the MXU as bf16.
    s1, b1 = _fold_bn(params["bn1"])
    s2, b2 = _fold_bn(params["bn2"])
    w1m = (jnp.transpose(params["w1"], (2, 3, 1, 0)).reshape(9, Cin, Cout)
           * s1).astype(jnp.bfloat16)
    w2m = (jnp.transpose(params["w2"], (2, 3, 1, 0)).reshape(9, Cout, Cout)
           * s2).astype(jnp.bfloat16)
    wfc1 = params["fc1"].T.astype(jnp.float32)      # (Cout, Cr)
    wfc2 = params["fc2"].T.astype(jnp.float32)      # (Cr, Cout)

    # Parity-decomposed, zero-padded, spatially-flattened input (bf16).  Total
    # bytes == half the f32 input bytes: NO 9x im2col materialisation.
    pad_h = stride * Hg - (H + 1)
    pad_w = stride * Wp - (W + 1)
    xp = jnp.pad(x, ((0, 0), (1, pad_h), (1, pad_w), (0, 0)))
    grids = [xp[:, py::stride, px::stride, :][:, :Hg, :Wp, :]
             for py in range(stride) for px in range(stride)]
    xg = jnp.stack(grids, axis=1).reshape(N, G * Lg, Cin)

    # Validity mask for the two flat-layout padding columns.
    col = jnp.arange(M, dtype=jnp.int32) % Wp
    mask = (col < Wo).astype(jnp.float32)[:, None]            # (M, 1)

    # Shortcut input in the same flattened padded-width layout as the output.
    xs = x[:, ::stride, ::stride, :]
    xs = jnp.pad(xs, ((0, 0), (0, 0), (0, Wp - Wo), (0, 0))).reshape(N, M, Cin)

    has_proj = "w_sc" in params
    extra_args, extra_specs = [], []
    if has_proj:
        ssc, bsc = _fold_bn(params["bn_sc"])
        wscm = (params["w_sc"][:, :, 0, 0].T * ssc).astype(jnp.bfloat16)
        extra_args = [wscm, bsc]
        extra_specs = [pl.BlockSpec((Cin, Cout), lambda b: (0, 0)),
                       pl.BlockSpec((1, Cout), lambda b: (0, 0))]

    kernel = functools.partial(_fused_se_block_kernel, stride, Ho, Wo, Cout,
                               s0, has_proj)
    in_specs = [
        pl.BlockSpec((None, G * Lg, Cin), lambda b: (b, 0, 0)),      # xg (bf16)
        pl.BlockSpec((M, 1), lambda b: (0, 0)),                      # mask
        pl.BlockSpec((None, M, Cin), lambda b: (b, 0, 0)),           # shortcut
        pl.BlockSpec((9, Cin, Cout), lambda b: (0, 0, 0)),           # w1 (bf16)
        pl.BlockSpec((1, Cout), lambda b: (0, 0)),                   # b1
        pl.BlockSpec((9, Cout, Cout), lambda b: (0, 0, 0)),          # w2 (bf16)
        pl.BlockSpec((1, Cout), lambda b: (0, 0)),                   # b2
        pl.BlockSpec((Cout, Cr), lambda b: (0, 0)),                  # SE fc1
        pl.BlockSpec((Cr, Cout), lambda b: (0, 0)),                  # SE fc2
    ] + extra_specs

    # VMEM budget from the actual per-step footprint (double-buffered inputs +
    # output block + scratch), with 2x headroom for layout padding; capped at
    # 64 MiB so the same budget is valid on v7x.
    per_step = (_nbytes(xg) // N + _nbytes(xs) // N + _nbytes(mask)
                + _nbytes(w1m) + _nbytes(b1) + _nbytes(w2m) + _nbytes(b2)
                + _nbytes(wfc1) + _nbytes(wfc2)
                + sum(_nbytes(a) for a in extra_args)
                + M * Cout * 4)                                 # output block
    scratch_bytes = G * Lg * Cin * 4 + scratch_rows * Cout * 4
    vmem_limit = int(min(64 << 20,
                         max(16 << 20, 2 * (2 * per_step + scratch_bytes))))

    out_flat = pl.pallas_call(
        kernel,
        out_shape=jax.ShapeDtypeStruct((N, M, Cout), jnp.float32),
        grid=(N,),
        in_specs=in_specs,
        out_specs=pl.BlockSpec((None, M, Cout), lambda b: (b, 0, 0)),
        scratch_shapes=[pltpu.VMEM((G * Lg, Cin), jnp.float32),      # xf (f32)
                        pltpu.VMEM((scratch_rows, Cout), jnp.float32)],  # p2
        compiler_params=pltpu.CompilerParams(
            dimension_semantics=("parallel",),
            vmem_limit_bytes=vmem_limit),
    )(xg, mask, xs, w1m, b1, w2m, b2, wfc1, wfc2, *extra_args)

    # Drop the 2 flat-layout padding columns and return NCHW.
    out = out_flat.reshape(N, Ho, Wp, Cout)[:, :, :Wo, :]
    return jnp.transpose(out, (0, 3, 1, 2))


# ------------------------------ parameters ------------------------------------

def init_params(key, in_planes, out_planes, stride, reduction):
    """Deterministic synthetic parameters with the same shapes as the torch module."""
    cr = out_planes // reduction
    ks = jax.random.split(key, 8)

    def conv_w(k, co, ci, kh, kw):
        fan_in = ci * kh * kw
        return jax.random.normal(k, (co, ci, kh, kw), jnp.float32) * (2.0 / fan_in) ** 0.5

    def bn_params(k, c):
        k1, k2, k3, k4 = jax.random.split(k, 4)
        gamma = 1.0 + 0.2 * jax.random.normal(k1, (c,), jnp.float32)
        beta = 0.1 * jax.random.normal(k2, (c,), jnp.float32)
        mean = 0.1 * jax.random.normal(k3, (c,), jnp.float32)
        var = 0.5 + jax.random.uniform(k4, (c,), jnp.float32)
        return gamma, beta, mean, var

    params = {
        "w1": conv_w(ks[0], out_planes, in_planes, 3, 3),
        "bn1": bn_params(ks[1], out_planes),
        "w2": conv_w(ks[2], out_planes, out_planes, 3, 3),
        "bn2": bn_params(ks[3], out_planes),
        # SE Linear weights in PyTorch layout (out_features, in_features), no bias
        "fc1": jax.random.normal(ks[4], (cr, out_planes), jnp.float32) * (1.0 / out_planes) ** 0.5,
        "fc2": jax.random.normal(ks[5], (out_planes, cr), jnp.float32) * (1.0 / max(cr, 1)) ** 0.5,
    }
    if stride != 1 or in_planes != out_planes:
        params["w_sc"] = conv_w(ks[6], out_planes, in_planes, 1, 1)
        params["bn_sc"] = bn_params(ks[7], out_planes)
    return params


# ------------------------------ pure-JAX reference ----------------------------

def reference_block(x, params, *, stride):
    dn = ("NCHW", "OIHW", "NCHW")

    def conv(inp, w, s, pad):
        return jax.lax.conv_general_dilated(inp, w, (s, s), pad, dimension_numbers=dn)

    def bn(inp, bnp):
        scale, bias = _fold_bn(bnp)
        return inp * scale[0][None, :, None, None] + bias[0][None, :, None, None]

    out = jax.nn.relu(bn(conv(x, params["w1"], stride, [(1, 1), (1, 1)]), params["bn1"]))
    out = bn(conv(out, params["w2"], 1, [(1, 1), (1, 1)]), params["bn2"])
    y = out.mean(axis=(2, 3))                               # (N, C)
    y = jax.nn.relu(y @ params["fc1"].T)
    y = jax.nn.sigmoid(y @ params["fc2"].T)
    out = out * y[:, :, None, None]
    if "w_sc" in params:
        sc = bn(conv(x, params["w_sc"], stride, [(0, 0), (0, 0)]), params["bn_sc"])
    else:
        sc = x
    return jax.nn.relu(out + sc)


# ------------------------------ demo / check ----------------------------------

if __name__ == "__main__":
    key = jax.random.PRNGKey(0)
    kx, kp1, kp2, kx2 = jax.random.split(key, 4)
    fwd = jax.jit(residual_se_basic_block, static_argnames=("stride",))

    # Case 1: downsampling block (stride 2, channel expansion -> projection shortcut)
    N, Cin, H, W, Cout, stride, reduction = 2, 16, 16, 16, 32, 2, 4
    x = jax.random.normal(kx, (N, Cin, H, W), jnp.float32)
    params = init_params(kp1, Cin, Cout, stride, reduction)
    out = jax.block_until_ready(fwd(x, params, stride=stride))
    ref = reference_block(x, params, stride=stride)
    assert out.shape == (N, Cout, H // stride, W // stride)
    # bf16 MXU operands + bf16-staged activations -> ~1e-1 tolerance vs f32 ref.
    assert jnp.allclose(out, ref, atol=1e-1, rtol=1e-1), float(jnp.max(jnp.abs(out - ref)))

    # Case 2: identity-shortcut block (stride 1, same channel count)
    N2, C2, H2 = 2, 32, 8
    x2 = jax.random.normal(kx2, (N2, C2, H2, H2), jnp.float32)
    params2 = init_params(kp2, C2, C2, 1, reduction)
    out2 = jax.block_until_ready(fwd(x2, params2, stride=1))
    ref2 = reference_block(x2, params2, stride=1)
    assert out2.shape == x2.shape
    assert jnp.allclose(out2, ref2, atol=1e-1, rtol=1e-1), float(jnp.max(jnp.abs(out2 - ref2)))

    print("KERNEL_OK")
</pallas_src>

<mosaic_0001>
module attributes {stable_mosaic.version = 11 : i64} {
  func.func @_fused_se_block_kernel(%arg0: i32, %arg1: memref<1x440x16xbf16, #tpu.memory_space<vmem>>, %arg2: memref<80x1xf32, #tpu.memory_space<vmem>>, %arg3: memref<1x80x16xbf16, #tpu.memory_space<vmem>>, %arg4: memref<9x16x32xbf16, #tpu.memory_space<vmem>>, %arg5: memref<1x32xf32, #tpu.memory_space<vmem>>, %arg6: memref<9x32x32xbf16, #tpu.memory_space<vmem>>, %arg7: memref<1x32xf32, #tpu.memory_space<vmem>>, %arg8: memref<32x8xf32, #tpu.memory_space<vmem>>, %arg9: memref<8x32xf32, #tpu.memory_space<vmem>>, %arg10: memref<16x32xbf16, #tpu.memory_space<vmem>>, %arg11: memref<1x32xf32, #tpu.memory_space<vmem>>, %arg12: memref<1x80x32xf32, #tpu.memory_space<vmem>>, %arg13: memref<440x16xf32, #tpu.memory_space<vmem>>, %arg14: memref<112x32xf32, #tpu.memory_space<vmem>>) attributes {dimension_semantics = [#tpu.dimension_semantics<parallel>], iteration_bounds = array<i64: 2>, scalar_prefetch = 0 : i64, scratch_operands = 2 : i64, tpu.core_type = #tpu.core_type<tc>, window_params = [{transform_indices = @transform_0, window_bounds = array<i64: 1, 440, 16>}, {pipeline_mode = #tpu.pipeline_mode<synchronous>, transform_indices = @transform_1, window_bounds = array<i64: 80, 1>}, {transform_indices = @transform_2, window_bounds = array<i64: 1, 80, 16>}, {pipeline_mode = #tpu.pipeline_mode<synchronous>, transform_indices = @transform_3, window_bounds = array<i64: 9, 16, 32>}, {pipeline_mode = #tpu.pipeline_mode<synchronous>, transform_indices = @transform_4, window_bounds = array<i64: 1, 32>}, {pipeline_mode = #tpu.pipeline_mode<synchronous>, transform_indices = @transform_5, window_bounds = array<i64: 9, 32, 32>}, {pipeline_mode = #tpu.pipeline_mode<synchronous>, transform_indices = @transform_6, window_bounds = array<i64: 1, 32>}, {pipeline_mode = #tpu.pipeline_mode<synchronous>, transform_indices = @transform_7, window_bounds = array<i64: 32, 8>}, {pipeline_mode = #tpu.pipeline_mode<synchronous>, transform_indices = @transform_8, window_bounds = array<i64: 8, 32>}, {pipeline_mode = #tpu.pipeline_mode<synchronous>, transform_indices = @transform_9, window_bounds = array<i64: 16, 32>}, {pipeline_mode = #tpu.pipeline_mode<synchronous>, transform_indices = @transform_10, window_bounds = array<i64: 1, 32>}, {transform_indices = @transform_11, window_bounds = array<i64: 1, 80, 32>}]} {
    %c0 = arith.constant 0 : index
    %c0_0 = arith.constant 0 : index
    %0 = vector.load %arg2[%c0, %c0_0] : memref<80x1xf32, #tpu.memory_space<vmem>>, vector<80x1xf32>
    %c0_1 = arith.constant 0 : index
    %c0_2 = arith.constant 0 : index
    %c0_3 = arith.constant 0 : index
    %1 = vector.load %arg1[%c0_1, %c0_2, %c0_3] : memref<1x440x16xbf16, #tpu.memory_space<vmem>>, vector<1x440x16xbf16>
    %2 = vector.shape_cast %1 : vector<1x440x16xbf16> to vector<440x16xbf16>
    %3 = arith.extf %2 : vector<440x16xbf16> to vector<440x16xf32>
    %c0_4 = arith.constant 0 : index
    %c0_5 = arith.constant 0 : index
    %4 = vector.load %arg13[%c0_4, %c0_5] : memref<440x16xf32, #tpu.memory_space<vmem>>, vector<440x16xf32>
    tpu.vector_store %arg13[%c0_4, %c0_5], %3 {strides = array<i32>} : memref<440x16xf32, #tpu.memory_space<vmem>>, vector<440x16xf32>,
    %c0_6 = arith.constant 0 : index
    %c0_7 = arith.constant 0 : index
    %5 = vector.load %arg13[%c0_6, %c0_7] : memref<440x16xf32, #tpu.memory_space<vmem>>, vector<80x16xf32>
    %6 = arith.truncf %5 : vector<80x16xf32> to vector<80x16xbf16>
    %c0_8 = arith.constant 0 : index
    %c0_9 = arith.constant 0 : index
    %c0_10 = arith.constant 0 : index
    %7 = vector.load %arg4[%c0_8, %c0_9, %c0_10] : memref<9x16x32xbf16, #tpu.memory_space<vmem>>, vector<1x16x32xbf16>
    %8 = vector.shape_cast %7 : vector<1x16x32xbf16> to vector<16x32xbf16>
    %cst = arith.constant dense<0.000000e+00> : vector<80x32xf32>
    %9 = tpu.matmul %6, %8, %cst {dimension_numbers = #tpu.dot_dimension_numbers<[1], [0], [0], [1], [0, 0, 1, 1], [], []>} : vector<80x16xbf16>, vector<16x32xbf16>, vector<80x32xf32> -> vector<80x32xf32>
    %c110 = arith.constant 110 : index
    %c0_11 = arith.constant 0 : index
    %10 = vector.load %arg13[%c110, %c0_11] : memref<440x16xf32, #tpu.memory_space<vmem>>, vector<80x16xf32>
    %11 = arith.truncf %10 : vector<80x16xf32> to vector<80x16xbf16>
    %c1 = arith.constant 1 : index
    %c0_12 = arith.constant 0 : index
    %c0_13 = arith.constant 0 : index
    %12 = vector.load %arg4[%c1, %c0_12, %c0_13] : memref<9x16x32xbf16, #tpu.memory_space<vmem>>, vector<1x16x32xbf16>
    %13 = vector.shape_cast %12 : vector<1x16x32xbf16> to vector<16x32xbf16>
    %cst_14 = arith.constant dense<0.000000e+00> : vector<80x32xf32>
    %14 = tpu.matmul %11, %13, %cst_14 {dimension_numbers = #tpu.dot_dimension_numbers<[1], [0], [0], [1], [0, 0, 1, 1], [], []>} : vector<80x16xbf16>, vector<16x32xbf16>, vector<80x32xf32> -> vector<80x32xf32>
    %15 = arith.addf %9, %14 : vector<80x32xf32>
    %c1_15 = arith.constant 1 : index
    %c0_16 = arith.constant 0 : index
    %16 = vector.load %arg13[%c1_15, %c0_16] : memref<440x16xf32, #tpu.memory_space<vmem>>, vector<80x16xf32>
    %17 = arith.truncf %16 : vector<80x16xf32> to vector<80x16xbf16>
    %c2 = arith.constant 2 : index
    %c0_17 = arith.constant 0 : index
    %c0_18 = arith.constant 0 : index
    %18 = vector.load %arg4[%c2, %c0_17, %c0_18] : memref<9x16x32xbf16, #tpu.memory_space<vmem>>, vector<1x16x32xbf16>
    %19 = vector.shape_cast %18 : vector<1x16x32xbf16> to vector<16x32xbf16>
    %cst_19 = arith.constant dense<0.000000e+00> : vector<80x32xf32>
    %20 = tpu.matmul %17, %19, %cst_19 {dimension_numbers = #tpu.dot_dimension_numbers<[1], [0], [0], [1], [0, 0, 1, 1], [], []>} : vector<80x16xbf16>, vector<16x32xbf16>, vector<80x32xf32> -> vector<80x32xf32>
    %21 = arith.addf %15, %20 : vector<80x32xf32>
    %c220 = arith.constant 220 : index
    %c0_20 = arith.constant 0 : index
    %22 = vector.load %arg13[%c220, %c0_20] : memref<440x16xf32, #tpu.memory_space<vmem>>, vector<80x16xf32>
    %23 = arith.truncf %22 : vector<80x16xf32> to vector<80x16xbf16>
    %c3 = arith.constant 3 : index
    %c0_21 = arith.constant 0 : index
    %c0_22 = arith.constant 0 : index
    %24 = vector.load %arg4[%c3, %c0_21, %c0_22] : memref<9x16x32xbf16, #tpu.memory_space<vmem>>, vector<1x16x32xbf16>
    %25 = vector.shape_cast %24 : vector<1x16x32xbf16> to vector<16x32xbf16>
    %cst_23 = arith.constant dense<0.000000e+00> : vector<80x32xf32>
    %26 = tpu.matmul %23, %25, %cst_23 {dimension_numbers = #tpu.dot_dimension_numbers<[1], [0], [0], [1], [0, 0, 1, 1], [], []>} : vector<80x16xbf16>, vector<16x32xbf16>, vector<80x32xf32> -> vector<80x32xf32>
    %27 = arith.addf %21, %26 : vector<80x32xf32>
    %c330 = arith.constant 330 : index
    %c0_24 = arith.constant 0 : index
    %28 = vector.load %arg13[%c330, %c0_24] : memref<440x16xf32, #tpu.memory_space<vmem>>, vector<80x16xf32>
    %29 = arith.truncf %28 : vector<80x16xf32> to vector<80x16xbf16>
    %c4 = arith.constant 4 : index
    %c0_25 = arith.constant 0 : index
    %c0_26 = arith.constant 0 : index
    %30 = vector.load %arg4[%c4, %c0_25, %c0_26] : memref<9x16x32xbf16, #tpu.memory_space<vmem>>, vector<1x16x32xbf16>
    %31 = vector.shape_cast %30 : vector<1x16x32xbf16> to vector<16x32xbf16>
    %cst_27 = arith.constant dense<0.000000e+00> : vector<80x32xf32>
    %32 = tpu.matmul %29, %31, %cst_27 {dimension_numbers = #tpu.dot_dimension_numbers<[1], [0], [0], [1], [0, 0, 1, 1], [], []>} : vector<80x16xbf16>, vector<16x32xbf16>, vector<80x32xf32> -> vector<80x32xf32>
    %33 = arith.addf %27, %32 : vector<80x32xf32>
    %c221 = arith.constant 221 : index
    %c0_28 = arith.constant 0 : index
    %34 = vector.load %arg13[%c221, %c0_28] : memref<440x16xf32, #tpu.memory_space<vmem>>, vector<80x16xf32>
    %35 = arith.truncf %34 : vector<80x16xf32> to vector<80x16xbf16>
    %c5 = arith.constant 5 : index
    %c0_29 = arith.constant 0 : index
    %c0_30 = arith.constant 0 : index
    %36 = vector.load %arg4[%c5, %c0_29, %c0_30] : memref<9x16x32xbf16, #tpu.memory_space<vmem>>, vector<1x16x32xbf16>
    %37 = vector.shape_cast %36 : vector<1x16x32xbf16> to vector<16x32xbf16>
    %cst_31 = arith.constant dense<0.000000e+00> : vector<80x32xf32>
    %38 = tpu.matmul %35, %37, %cst_31 {dimension_numbers = #tpu.dot_dimension_numbers<[1], [0], [0], [1], [0, 0, 1, 1], [], []>} : vector<80x16xbf16>, vector<16x32xbf16>, vector<80x32xf32> -> vector<80x32xf32>
    %39 = arith.addf %33, %38 : vector<80x32xf32>
    %c10 = arith.constant 10 : index
    %c0_32 = arith.constant 0 : index
    %40 = vector.load %arg13[%c10, %c0_32] : memref<440x16xf32, #tpu.memory_space<vmem>>, vector<80x16xf32>
    %41 = arith.truncf %40 : vector<80x16xf32> to vector<80x16xbf16>
    %c6 = arith.constant 6 : index
    %c0_33 = arith.constant 0 : index
    %c0_34 = arith.constant 0 : index
    %42 = vector.load %arg4[%c6, %c0_33, %c0_34] : memref<9x16x32xbf16, #tpu.memory_space<vmem>>, vector<1x16x32xbf16>
    %43 = vector.shape_cast %42 : vector<1x16x32xbf16> to vector<16x32xbf16>
    %cst_35 = arith.constant dense<0.000000e+00> : vector<80x32xf32>
    %44 = tpu.matmul %41, %43, %cst_35 {dimension_numbers = #tpu.dot_dimension_numbers<[1], [0], [0], [1], [0, 0, 1, 1], [], []>} : vector<80x16xbf16>, vector<16x32xbf16>, vector<80x32xf32> -> vector<80x32xf32>
    %45 = arith.addf %39, %44 : vector<80x32xf32>
    %c120 = arith.constant 120 : index
    %c0_36 = arith.constant 0 : index
    %46 = vector.load %arg13[%c120, %c0_36] : memref<440x16xf32, #tpu.memory_space<vmem>>, vector<80x16xf32>
    %47 = arith.truncf %46 : vector<80x16xf32> to vector<80x16xbf16>
    %c7 = arith.constant 7 : index
    %c0_37 = arith.constant 0 : index
    %c0_38 = arith.constant 0 : index
    %48 = vector.load %arg4[%c7, %c0_37, %c0_38] : memref<9x16x32xbf16, #tpu.memory_space<vmem>>, vector<1x16x32xbf16>
    %49 = vector.shape_cast %48 : vector<1x16x32xbf16> to vector<16x32xbf16>
    %cst_39 = arith.constant dense<0.000000e+00> : vector<80x32xf32>
    %50 = tpu.matmul %47, %49, %cst_39 {dimension_numbers = #tpu.dot_dimension_numbers<[1], [0], [0], [1], [0, 0, 1, 1], [], []>} : vector<80x16xbf16>, vector<16x32xbf16>, vector<80x32xf32> -> vector<80x32xf32>
    %51 = arith.addf %45, %50 : vector<80x32xf32>
    %c11 = arith.constant 11 : index
    %c0_40 = arith.constant 0 : index
    %52 = vector.load %arg13[%c11, %c0_40] : memref<440x16xf32, #tpu.memory_space<vmem>>, vector<80x16xf32>
    %53 = arith.truncf %52 : vector<80x16xf32> to vector<80x16xbf16>
    %c8 = arith.constant 8 : index
    %c0_41 = arith.constant 0 : index
    %c0_42 = arith.constant 0 : index
    %54 = vector.load %arg4[%c8, %c0_41, %c0_42] : memref<9x16x32xbf16, #tpu.memory_space<vmem>>, vector<1x16x32xbf16>
    %55 = vector.shape_cast %54 : vector<1x16x32xbf16> to vector<16x32xbf16>
    %cst_43 = arith.constant dense<0.000000e+00> : vector<80x32xf32>
    %56 = tpu.matmul %53, %55, %cst_43 {dimension_numbers = #tpu.dot_dimension_numbers<[1], [0], [0], [1], [0, 0, 1, 1], [], []>} : vector<80x16xbf16>, vector<16x32xbf16>, vector<80x32xf32> -> vector<80x32xf32>
    %57 = arith.addf %51, %56 : vector<80x32xf32>
    %c0_44 = arith.constant 0 : index
    %c0_45 = arith.constant 0 : index
    %58 = vector.load %arg5[%c0_44, %c0_45] : memref<1x32xf32, #tpu.memory_space<vmem>>, vector<1x32xf32>
    %59 = vector.broadcast %58 : vector<1x32xf32> to vector<80x32xf32>
    %60 = arith.addf %57, %59 : vector<80x32xf32>
    %cst_46 = arith.constant 0.000000e+00 : f32
    %61 = vector.broadcast %cst_46 : f32 to vector<80x32xf32>
    %62 = arith.maximumf %60, %61 : vector<80x32xf32>
    %63 = vector.broadcast %0 : vector<80x1xf32> to vector<80x32xf32>
    %64 = arith.mulf %62, %63 : vector<80x32xf32>
    %cst_47 = arith.constant 0.000000e+00 : f32
    %65 = vector.broadcast %cst_47 : f32 to vector<16x32xf32>
    %c0_48 = arith.constant 0 : index
    %c0_49 = arith.constant 0 : index
    %66 = vector.load %arg14[%c0_48, %c0_49] : memref<112x32xf32, #tpu.memory_space<vmem>>, vector<16x32xf32>
    tpu.vector_store %arg14[%c0_48, %c0_49], %65 {strides = array<i32>} : memref<112x32xf32, #tpu.memory_space<vmem>>, vector<16x32xf32>,
    %cst_50 = arith.constant 0.000000e+00 : f32
    %67 = vector.broadcast %cst_50 : f32 to vector<16x32xf32>
    %c96 = arith.constant 96 : index
    %c0_51 = arith.constant 0 : index
    %68 = vector.load %arg14[%c96, %c0_51] : memref<112x32xf32, #tpu.memory_space<vmem>>, vector<16x32xf32>
    tpu.vector_store %arg14[%c96, %c0_51], %67 {strides = array<i32>} : memref<112x32xf32, #tpu.memory_space<vmem>>, vector<16x32xf32>,
    %c16 = arith.constant 16 : index
    %c0_52 = arith.constant 0 : index
    %69 = vector.load %arg14[%c16, %c0_52] : memref<112x32xf32, #tpu.memory_space<vmem>>, vector<80x32xf32>
    tpu.vector_store %arg14[%c16, %c0_52], %64 {strides = array<i32>} : memref<112x32xf32, #tpu.memory_space<vmem>>, vector<80x32xf32>,
    %c5_53 = arith.constant 5 : index
    %c0_54 = arith.constant 0 : index
    %70 = vector.load %arg14[%c5_53, %c0_54] : memref<112x32xf32, #tpu.memory_space<vmem>>, vector<80x32xf32>
    %71 = arith.truncf %70 : vector<80x32xf32> to vector<80x32xbf16>
    %c0_55 = arith.constant 0 : index
    %c0_56 = arith.constant 0 : index
    %c0_57 = arith.constant 0 : index
    %72 = vector.load %arg6[%c0_55, %c0_56, %c0_57] : memref<9x32x32xbf16, #tpu.memory_space<vmem>>, vector<1x32x32xbf16>
    %73 = vector.shape_cast %72 : vector<1x32x32xbf16> to vector<32x32xbf16>
    %cst_58 = arith.constant dense<0.000000e+00> : vector<80x32xf32>
    %74 = tpu.matmul %71, %73, %cst_58 {dimension_numbers = #tpu.dot_dimension_numbers<[1], [0], [0], [1], [0, 0, 1, 1], [], []>} : vector<80x32xbf16>, vector<32x32xbf16>, vector<80x32xf32> -> vector<80x32xf32>
    %c6_59 = arith.constant 6 : index
    %c0_60 = arith.constant 0 : index
    %75 = vector.load %arg14[%c6_59, %c0_60] : memref<112x32xf32, #tpu.memory_space<vmem>>, vector<80x32xf32>
    %76 = arith.truncf %75 : vector<80x32xf32> to vector<80x32xbf16>
    %c1_61 = arith.constant 1 : index
    %c0_62 = arith.constant 0 : index
    %c0_63 = arith.constant 0 : index
    %77 = vector.load %arg6[%c1_61, %c0_62, %c0_63] : memref<9x32x32xbf16, #tpu.memory_space<vmem>>, vector<1x32x32xbf16>
    %78 = vector.shape_cast %77 : vector<1x32x32xbf16> to vector<32x32xbf16>
    %cst_64 = arith.constant dense<0.000000e+00> : vector<80x32xf32>
    %79 = tpu.matmul %76, %78, %cst_64 {dimension_numbers = #tpu.dot_dimension_numbers<[1], [0], [0], [1], [0, 0, 1, 1], [], []>} : vector<80x32xbf16>, vector<32x32xbf16>, vector<80x32xf32> -> vector<80x32xf32>
    %80 = arith.addf %74, %79 : vector<80x32xf32>
    %c7_65 = arith.constant 7 : index
    %c0_66 = arith.constant 0 : index
    %81 = vector.load %arg14[%c7_65, %c0_66] : memref<112x32xf32, #tpu.memory_space<vmem>>, vector<80x32xf32>
    %82 = arith.truncf %81 : vector<80x32xf32> to vector<80x32xbf16>
    %c2_67 = arith.constant 2 : index
    %c0_68 = arith.constant 0 : index
    %c0_69 = arith.constant 0 : index
    %83 = vector.load %arg6[%c2_67, %c0_68, %c0_69] : memref<9x32x32xbf16, #tpu.memory_space<vmem>>, vector<1x32x32xbf16>
    %84 = vector.shape_cast %83 : vector<1x32x32xbf16> to vector<32x32xbf16>
    %cst_70 = arith.constant dense<0.000000e+00> : vector<80x32xf32>
    %85 = tpu.matmul %82, %84, %cst_70 {dimension_numbers = #tpu.dot_dimension_numbers<[1], [0], [0], [1], [0, 0, 1, 1], [], []>} : vector<80x32xbf16>, vector<32x32xbf16>, vector<80x32xf32> -> vector<80x32xf32>
    %86 = arith.addf %80, %85 : vector<80x32xf32>
    %c15 = arith.constant 15 : index
    %c0_71 = arith.constant 0 : index
    %87 = vector.load %arg14[%c15, %c0_71] : memref<112x32xf32, #tpu.memory_space<vmem>>, vector<80x32xf32>
    %88 = arith.truncf %87 : vector<80x32xf32> to vector<80x32xbf16>
    %c3_72 = arith.constant 3 : index
    %c0_73 = arith.constant 0 : index
    %c0_74 = arith.constant 0 : index
    %89 = vector.load %arg6[%c3_72, %c0_73, %c0_74] : memref<9x32x32xbf16, #tpu.memory_space<vmem>>, vector<1x32x32xbf16>
    %90 = vector.shape_cast %89 : vector<1x32x32xbf16> to vector<32x32xbf16>
    %cst_75 = arith.constant dense<0.000000e+00> : vector<80x32xf32>
    %91 = tpu.matmul %88, %90, %cst_75 {dimension_numbers = #tpu.dot_dimension_numbers<[1], [0], [0], [1], [0, 0, 1, 1], [], []>} : vector<80x32xbf16>, vector<32x32xbf16>, vector<80x32xf32> -> vector<80x32xf32>
    %92 = arith.addf %86, %91 : vector<80x32xf32>
    %c16_76 = arith.constant 16 : index
    %c0_77 = arith.constant 0 : index
    %93 = vector.load %arg14[%c16_76, %c0_77] : memref<112x32xf32, #tpu.memory_space<vmem>>, vector<80x32xf32>
    %94 = arith.truncf %93 : vector<80x32xf32> to vector<80x32xbf16>
    %c4_78 = arith.constant 4 : index
    %c0_79 = arith.constant 0 : index
    %c0_80 = arith.constant 0 : index
    %95 = vector.load %arg6[%c4_78, %c0_79, %c0_80] : memref<9x32x32xbf16, #tpu.memory_space<vmem>>, vector<1x32x32xbf16>
    %96 = vector.shape_cast %95 : vector<1x32x32xbf16> to vector<32x32xbf16>
    %cst_81 = arith.constant dense<0.000000e+00> : vector<80x32xf32>
    %97 = tpu.matmul %94, %96, %cst_81 {dimension_numbers = #tpu.dot_dimension_numbers<[1], [0], [0], [1], [0, 0, 1, 1], [], []>} : vector<80x32xbf16>, vector<32x32xbf16>, vector<80x32xf32> -> vector<80x32xf32>
    %98 = arith.addf %92, %97 : vector<80x32xf32>
    %c17 = arith.constant 17 : index
    %c0_82 = arith.constant 0 : index
    %99 = vector.load %arg14[%c17, %c0_82] : memref<112x32xf32, #tpu.memory_space<vmem>>, vector<80x32xf32>
    %100 = arith.truncf %99 : vector<80x32xf32> to vector<80x32xbf16>
    %c5_83 = arith.constant 5 : index
    %c0_84 = arith.constant 0 : index
    %c0_85 = arith.constant 0 : index
    %101 = vector.load %arg6[%c5_83, %c0_84, %c0_85] : memref<9x32x32xbf16, #tpu.memory_space<vmem>>, vector<1x32x32xbf16>
    %102 = vector.shape_cast %101 : vector<1x32x32xbf16> to vector<32x32xbf16>
    %cst_86 = arith.constant dense<0.000000e+00> : vector<80x32xf32>
    %103 = tpu.matmul %100, %102, %cst_86 {dimension_numbers = #tpu.dot_dimension_numbers<[1], [0], [0], [1], [0, 0, 1, 1], [], []>} : vector<80x32xbf16>, vector<32x32xbf16>, vector<80x32xf32> -> vector<80x32xf32>
    %104 = arith.addf %98, %103 : vector<80x32xf32>
    %c25 = arith.constant 25 : index
    %c0_87 = arith.constant 0 : index
    %105 = vector.load %arg14[%c25, %c0_87] : memref<112x32xf32, #tpu.memory_space<vmem>>, vector<80x32xf32>
    %106 = arith.truncf %105 : vector<80x32xf32> to vector<80x32xbf16>
    %c6_88 = arith.constant 6 : index
    %c0_89 = arith.constant 0 : index
    %c0_90 = arith.constant 0 : index
    %107 = vector.load %arg6[%c6_88, %c0_89, %c0_90] : memref<9x32x32xbf16, #tpu.memory_space<vmem>>, vector<1x32x32xbf16>
    %108 = vector.shape_cast %107 : vector<1x32x32xbf16> to vector<32x32xbf16>
    %cst_91 = arith.constant dense<0.000000e+00> : vector<80x32xf32>
    %109 = tpu.matmul %106, %108, %cst_91 {dimension_numbers = #tpu.dot_dimension_numbers<[1], [0], [0], [1], [0, 0, 1, 1], [], []>} : vector<80x32xbf16>, vector<32x32xbf16>, vector<80x32xf32> -> vector<80x32xf32>
    %110 = arith.addf %104, %109 : vector<80x32xf32>
    %c26 = arith.constant 26 : index
    %c0_92 = arith.constant 0 : index
    %111 = vector.load %arg14[%c26, %c0_92] : memref<112x32xf32, #tpu.memory_space<vmem>>, vector<80x32xf32>
    %112 = arith.truncf %111 : vector<80x32xf32> to vector<80x32xbf16>
    %c7_93 = arith.constant 7 : index
    %c0_94 = arith.constant 0 : index
    %c0_95 = arith.constant 0 : index
    %113 = vector.load %arg6[%c7_93, %c0_94, %c0_95] : memref<9x32x32xbf16, #tpu.memory_space<vmem>>, vector<1x32x32xbf16>
    %114 = vector.shape_cast %113 : vector<1x32x32xbf16> to vector<32x32xbf16>
    %cst_96 = arith.constant dense<0.000000e+00> : vector<80x32xf32>
    %115 = tpu.matmul %112, %114, %cst_96 {dimension_numbers = #tpu.dot_dimension_numbers<[1], [0], [0], [1], [0, 0, 1, 1], [], []>} : vector<80x32xbf16>, vector<32x32xbf16>, vector<80x32xf32> -> vector<80x32xf32>
    %116 = arith.addf %110, %115 : vector<80x32xf32>
    %c27 = arith.constant 27 : index
    %c0_97 = arith.constant 0 : index
    %117 = vector.load %arg14[%c27, %c0_97] : memref<112x32xf32, #tpu.memory_space<vmem>>, vector<80x32xf32>
    %118 = arith.truncf %117 : vector<80x32xf32> to vector<80x32xbf16>
    %c8_98 = arith.constant 8 : index
    %c0_99 = arith.constant 0 : index
    %c0_100 = arith.constant 0 : index
    %119 = vector.load %arg6[%c8_98, %c0_99, %c0_100] : memref<9x32x32xbf16, #tpu.memory_space<vmem>>, vector<1x32x32xbf16>
    %120 = vector.shape_cast %119 : vector<1x32x32xbf16> to vector<32x32xbf16>
    %cst_101 = arith.constant dense<0.000000e+00> : vector<80x32xf32>
    %121 = tpu.matmul %118, %120, %cst_101 {dimension_numbers = #tpu.dot_dimension_numbers<[1], [0], [0], [1], [0, 0, 1, 1], [], []>} : vector<80x32xbf16>, vector<32x32xbf16>, vector<80x32xf32> -> vector<80x32xf32>
    %122 = arith.addf %116, %121 : vector<80x32xf32>
    %c0_102 = arith.constant 0 : index
    %c0_103 = arith.constant 0 : index
    %123 = vector.load %arg7[%c0_102, %c0_103] : memref<1x32xf32, #tpu.memory_space<vmem>>, vector<1x32xf32>
    %124 = vector.broadcast %123 : vector<1x32xf32> to vector<80x32xf32>
    %125 = arith.addf %122, %124 : vector<80x32xf32>
    %126 = vector.broadcast %0 : vector<80x1xf32> to vector<80x32xf32>
    %127 = arith.mulf %125, %126 : vector<80x32xf32>
    %cst_104 = arith.constant dense<0.000000e+00> : vector<32xf32>
    %128 = vector.multi_reduction <add>, %127, %cst_104 [0] : vector<80x32xf32> to vector<32xf32>
    %129 = vector.shape_cast %128 : vector<32xf32> to vector<1x32xf32>
    %cst_105 = arith.constant 1.562500e-02 : f32
    %130 = vector.broadcast %cst_105 : f32 to vector<1x32xf32>
    %131 = arith.mulf %129, %130 : vector<1x32xf32>
    %c0_106 = arith.constant 0 : index
    %c0_107 = arith.constant 0 : index
    %132 = vector.load %arg8[%c0_106, %c0_107] : memref<32x8xf32, #tpu.memory_space<vmem>>, vector<32x8xf32>
    %cst_108 = arith.constant dense<0.000000e+00> : vector<1x8xf32>
    %133 = tpu.matmul %131, %132, %cst_108 {dimension_numbers = #tpu.dot_dimension_numbers<[1], [0], [0], [1], [0, 0, 1, 1], [], []>} : vector<1x32xf32>, vector<32x8xf32>, vector<1x8xf32> -> vector<1x8xf32>
    %cst_109 = arith.constant 0.000000e+00 : f32
    %134 = vector.broadcast %cst_109 : f32 to vector<1x8xf32>
    %135 = arith.maximumf %133, %134 : vector<1x8xf32>
    %c0_110 = arith.constant 0 : index
    %c0_111 = arith.constant 0 : index
    %136 = vector.load %arg9[%c0_110, %c0_111] : memref<8x32xf32, #tpu.memory_space<vmem>>, vector<8x32xf32>
    %cst_112 = arith.constant dense<0.000000e+00> : vector<1x32xf32>
    %137 = tpu.matmul %135, %136, %cst_112 {dimension_numbers = #tpu.dot_dimension_numbers<[1], [0], [0], [1], [0, 0, 1, 1], [], []>} : vector<1x8xf32>, vector<8x32xf32>, vector<1x32xf32> -> vector<1x32xf32>
    %138 = arith.negf %137 : vector<1x32xf32>
    %139 = math.exp %138 : vector<1x32xf32>
    %cst_113 = arith.constant 1.000000e+00 : f32
    %140 = vector.broadcast %cst_113 : f32 to vector<1x32xf32>
    %141 = arith.addf %140, %139 : vector<1x32xf32>
    %142 = arith.divf %140, %141 : vector<1x32xf32>
    %c0_114 = arith.constant 0 : index
    %c0_115 = arith.constant 0 : index
    %c0_116 = arith.constant 0 : index
    %143 = vector.load %arg3[%c0_114, %c0_115, %c0_116] : memref<1x80x16xbf16, #tpu.memory_space<vmem>>, vector<1x80x16xbf16>
    %144 = vector.shape_cast %143 : vector<1x80x16xbf16> to vector<80x16xbf16>
    %c0_117 = arith.constant 0 : index
    %c0_118 = arith.constant 0 : index
    %145 = vector.load %arg10[%c0_117, %c0_118] : memref<16x32xbf16, #tpu.memory_space<vmem>>, vector<16x32xbf16>
    %cst_119 = arith.constant dense<0.000000e+00> : vector<80x32xf32>
    %146 = tpu.matmul %144, %145, %cst_119 {dimension_numbers = #tpu.dot_dimension_numbers<[1], [0], [0], [1], [0, 0, 1, 1], [], []>} : vector<80x16xbf16>, vector<16x32xbf16>, vector<80x32xf32> -> vector<80x32xf32>
    %c0_120 = arith.constant 0 : index
    %c0_121 = arith.constant 0 : index
    %147 = vector.load %arg11[%c0_120, %c0_121] : memref<1x32xf32, #tpu.memory_space<vmem>>, vector<1x32xf32>
    %148 = vector.broadcast %147 : vector<1x32xf32> to vector<80x32xf32>
    %149 = arith.addf %146, %148 : vector<80x32xf32>
    %150 = vector.broadcast %142 : vector<1x32xf32> to vector<80x32xf32>
    %151 = arith.mulf %125, %150 : vector<80x32xf32>
    %152 = arith.addf %151, %149 : vector<80x32xf32>
    %cst_122 = arith.constant 0.000000e+00 : f32
    %153 = vector.broadcast %cst_122 : f32 to vector<80x32xf32>
    %154 = arith.maximumf %152, %153 : vector<80x32xf32>
    %c0_123 = arith.constant 0 : index
    %c0_124 = arith.constant 0 : index
    %c0_125 = arith.constant 0 : index
    %155 = vector.load %arg12[%c0_123, %c0_124, %c0_125] : memref<1x80x32xf32, #tpu.memory_space<vmem>>, vector<1x80x32xf32>
    %156 = vector.shape_cast %155 : vector<1x80x32xf32> to vector<80x32xf32>
    %157 = vector.shape_cast %154 : vector<80x32xf32> to vector<1x80x32xf32>
    tpu.vector_store %arg12[%c0_123, %c0_124, %c0_125], %157 {strides = array<i32>} : memref<1x80x32xf32, #tpu.memory_space<vmem>>, vector<1x80x32xf32>,
    return
  }
  func.func @transform_0(%arg0: i32) -> (i32, i32, i32) {
    %c0_i32 = arith.constant 0 : i32
    %c0_i32_0 = arith.constant 0 : i32
    %c0_i32_1 = arith.constant 0 : i32
    return %arg0, %c0_i32, %c0_i32_0 : i32, i32, i32
  }
  func.func @transform_1(%arg0: i32) -> (i32, i32) {
    %c0_i32 = arith.constant 0 : i32
    %c0_i32_0 = arith.constant 0 : i32
    %c0_i32_1 = arith.constant 0 : i32
    return %c0_i32, %c0_i32_0 : i32, i32
  }
  func.func @transform_2(%arg0: i32) -> (i32, i32, i32) {
    %c0_i32 = arith.constant 0 : i32
    %c0_i32_0 = arith.constant 0 : i32
    %c0_i32_1 = arith.constant 0 : i32
    return %arg0, %c0_i32, %c0_i32_0 : i32, i32, i32
  }
  func.func @transform_3(%arg0: i32) -> (i32, i32, i32) {
    %c0_i32 = arith.constant 0 : i32
    %c0_i32_0 = arith.constant 0 : i32
    %c0_i32_1 = arith.constant 0 : i32
    %c0_i32_2 = arith.constant 0 : i32
    return %c0_i32, %c0_i32_0, %c0_i32_1 : i32, i32, i32
  }
  func.func @transform_4(%arg0: i32) -> (i32, i32) {
    %c0_i32 = arith.constant 0 : i32
    %c0_i32_0 = arith.constant 0 : i32
    %c0_i32_1 = arith.constant 0 : i32
    return %c0_i32, %c0_i32_0 : i32, i32
  }
  func.func @transform_5(%arg0: i32) -> (i32, i32, i32) {
    %c0_i32 = arith.constant 0 : i32
    %c0_i32_0 = arith.constant 0 : i32
    %c0_i32_1 = arith.constant 0 : i32
    %c0_i32_2 = arith.constant 0 : i32
    return %c0_i32, %c0_i32_0, %c0_i32_1 : i32, i32, i32
  }
  func.func @transform_6(%arg0: i32) -> (i32, i32) {
    %c0_i32 = arith.constant 0 : i32
    %c0_i32_0 = arith.constant 0 : i32
    %c0_i32_1 = arith.constant 0 : i32
    return %c0_i32, %c0_i32_0 : i32, i32
  }
  func.func @transform_7(%arg0: i32) -> (i32, i32) {
    %c0_i32 = arith.constant 0 : i32
    %c0_i32_0 = arith.constant 0 : i32
    %c0_i32_1 = arith.constant 0 : i32
    return %c0_i32, %c0_i32_0 : i32, i32
  }
  func.func @transform_8(%arg0: i32) -> (i32, i32) {
    %c0_i32 = arith.constant 0 : i32
    %c0_i32_0 = arith.constant 0 : i32
    %c0_i32_1 = arith.constant 0 : i32
    return %c0_i32, %c0_i32_0 : i32, i32
  }
  func.func @transform_9(%arg0: i32) -> (i32, i32) {
    %c0_i32 = arith.constant 0 : i32
    %c0_i32_0 = arith.constant 0 : i32
    %c0_i32_1 = arith.constant 0 : i32
    return %c0_i32, %c0_i32_0 : i32, i32
  }
  func.func @transform_10(%arg0: i32) -> (i32, i32) {
    %c0_i32 = arith.constant 0 : i32
    %c0_i32_0 = arith.constant 0 : i32
    %c0_i32_1 = arith.constant 0 : i32
    return %c0_i32, %c0_i32_0 : i32, i32
  }
  func.func @transform_11(%arg0: i32) -> (i32, i32, i32) {
    %c0_i32 = arith.constant 0 : i32
    %c0_i32_0 = arith.constant 0 : i32
    %c0_i32_1 = arith.constant 0 : i32
    return %arg0, %c0_i32, %c0_i32_0 : i32, i32, i32
  }
}

</mosaic_0001>

<llo_original>
// kernel: residual_se_basic_block.1
$region0: #{residual_se_basic_block.1}
  #allocation0 [shape = 'u32[]', space=smem, size = 0x4, offset = 0x4, fixed_abs, tag = 'smem constant byte address 0x4 - core index']
  #allocation1 [shape = 'u32[144,128]{1,0:T(1,128)}', space=vmem, size = 0x12000, scoped, tag = 'internal scratch']
  #allocation2 [shape = 'f32[440,16]{1,0:T(8,128)}', space=vmem, size = 0x37000, scoped, tag = 'scratch operand']
  #allocation3 [shape = 'f32[112,32]{1,0:T(8,128)}', space=vmem, size = 0xe000, scoped, tag = 'scratch operand']
  %s0 = inlined_call_operand.vmem [shape: bf16[2,440,16], index: 0, kind: input, shape index: {}]
  %s1 = inlined_call_operand.vmem [shape: f32[80,1], index: 1, kind: input, shape index: {}]
  %s2 = inlined_call_operand.vmem [shape: bf16[2,80,16], index: 2, kind: input, shape index: {}]
  %s3 = inlined_call_operand.vmem [shape: bf16[9,16,32], index: 3, kind: input, shape index: {}]
  %s4 = inlined_call_operand.vmem [shape: f32[1,32], index: 4, kind: input, shape index: {}]
  %s5 = inlined_call_operand.vmem [shape: bf16[9,32,32], index: 5, kind: input, shape index: {}]
  %s6 = inlined_call_operand.vmem [shape: f32[1,32], index: 6, kind: input, shape index: {}]
  %s7 = inlined_call_operand.vmem [shape: f32[32,8], index: 7, kind: input, shape index: {}]
  %s8 = inlined_call_operand.vmem [shape: f32[8,32], index: 8, kind: input, shape index: {}]
  %s9 = inlined_call_operand.vmem [shape: bf16[16,32], index: 9, kind: input, shape index: {}]
  %s10 = inlined_call_operand.vmem [shape: f32[1,32], index: 10, kind: input, shape index: {}]
  %s11 = inlined_call_operand.vmem [shape: f32[2,80,32], index: 11, kind: output, shape index: {}]
  %s12 = sld [smem:[#allocation0]]
  $region77: #{residual_se_basic_block.1} parent=0
    _
  %s14 = ssub.s32 1, %s12
  %s15 = scalar_select 0, %s14, %s12
  loop: start=0, step=1, limit=4
  $region2: #{residual_se_basic_block.1} parent=0 // loop_pre_header
    _
  $region3: #{residual_se_basic_block.1} parent=0 // loop_header
    %s17 = sphi 0, %s21
    %p18 = scmp.ge.s32.totalorder %s17, 4
    %s27 = sphi 0, %s29
    %s30 = sphi 0, %s27
    %s31 = sphi 0, %s30
    %s47 = sphi 0, %s31
    %s51 = sphi 0, %s51
    %s53 = sphi 0, %s51
    %s54 = sphi 0, %s53
    %s68 = sphi 0, %s54
    %s74 = sphi 0, %s76
    %s77 = sphi 0, %s74
    %s78 = sphi 0, %s77
    %s94 = sphi 0, %s78
    %s98 = sphi 0, %s98
    %s100 = sphi 0, %s98
    %s101 = sphi 0, %s100
    %s115 = sphi 0, %s101
    %s119 = sphi 0, %s119
    %s121 = sphi 0, %s119
    %s122 = sphi 0, %s121
    %s136 = sphi 0, %s122
    %s140 = sphi 0, %s140
    %s142 = sphi 0, %s140
    %s143 = sphi 0, %s142
    %s157 = sphi 0, %s143
    %s161 = sphi 0, %s161
    %s163 = sphi 0, %s161
    %s164 = sphi 0, %s163
    %s178 = sphi 0, %s164
    %s182 = sphi 0, %s182
    %s184 = sphi 0, %s182
    %s185 = sphi 0, %s184
    %s199 = sphi 0, %s185
    %s203 = sphi 0, %s203
    %s205 = sphi 0, %s203
    %s206 = sphi 0, %s205
    %s220 = sphi 0, %s206
    %s224 = sphi 0, %s224
    %s226 = sphi 0, %s224
    %s227 = sphi 0, %s226
    %s241 = sphi 0, %s227
    %s245 = sphi 0, %s245
    %s247 = sphi 0, %s245
    %s248 = sphi 0, %s247
    %s262 = sphi 0, %s248
    %s268 = sphi 0, %s270
    %s271 = sphi 0, %s268
    %s272 = sphi 0, %s271
    %s288 = sphi 0, %s272
  $region4: #{residual_se_basic_block.1} parent=0 // loop_header_branch
    %20 = sbr.rel (%p18) target = $region8
  $region5: #{residual_se_basic_block.1} parent=0 // loop_body
    %s22 = ssub.s32 %s17, 1
    %s23 = ssub.s32 %s17, 2
    %s24 = sadd.s32 %s17, 1
    %s25 = ssub.s32 %s17, %s24
    %p26 = scmp.eq.s32.totalorder %s25, 0
    %s28 = sadd.s32 %s27, 1
    %s29 = scalar_select %p26, %s27, %s28
    %p32 = pneg %p26
    %p33 = scmp.eq.s32.totalorder %s17, 1
    %p34 = por %p32, %p33
    %p35 = scmp.ne.s32.totalorder %s27, %s30
    %p36 = scmp.eq.s32.totalorder %s17, 0
    %p37 = por %p35, %p36
    %p38 = scmp.ne.s32.totalorder %s27, %s30
    %p39 = scmp.eq.s32.totalorder %s22, 1
    %p40 = por %p38, %p39
    %p41 = scmp.ne.s32.totalorder %s30, %s31
    %p42 = scmp.eq.s32.totalorder %s22, 0
    %p43 = por %p41, %p42
    %p44 = scmp.ne.s32.totalorder %s30, %s31
    %p45 = scmp.eq.s32.totalorder %s23, 1
    %p46 = por %p44, %p45
    %p48 = scmp.ne.s32.totalorder %s31, %s47
    %p49 = scmp.eq.s32.totalorder %s23, 0
    %p50 = por %p48, %p49
    %s52 = sadd.s32 %s51, 1
    %p55 = scmp.eq.s32.totalorder %s17, 1
    %p56 = scmp.ne.s32.totalorder %s51, %s53
    %p57 = scmp.eq.s32.totalorder %s17, 0
    %p58 = por %p56, %p57
    %p59 = scmp.ne.s32.totalorder %s51, %s53
    %p60 = scmp.eq.s32.totalorder %s22, 1
    %p61 = por %p59, %p60
    %p62 = scmp.ne.s32.totalorder %s53, %s54
    %p63 = scmp.eq.s32.totalorder %s22, 0
    %p64 = por %p62, %p63
    %p65 = scmp.ne.s32.totalorder %s53, %s54
    %p66 = scmp.eq.s32.totalorder %s23, 1
    %p67 = por %p65, %p66
    %p69 = scmp.ne.s32.totalorder %s54, %s68
    %p70 = scmp.eq.s32.totalorder %s23, 0
    %p71 = por %p69, %p70
    %s72 = ssub.s32 %s17, %s24
    %p73 = scmp.eq.s32.totalorder %s72, 0
    %s75 = sadd.s32 %s74, 1
    %s76 = scalar_select %p73, %s74, %s75
    %p79 = pneg %p73
    %p80 = scmp.eq.s32.totalorder %s17, 1
    %p81 = por %p79, %p80
    %p82 = scmp.ne.s32.totalorder %s74, %s77
    %p83 = scmp.eq.s32.totalorder %s17, 0
    %p84 = por %p82, %p83
    %p85 = scmp.ne.s32.totalorder %s74, %s77
    %p86 = scmp.eq.s32.totalorder %s22, 1
    %p87 = por %p85, %p86
    %p88 = scmp.ne.s32.totalorder %s77, %s78
    %p89 = scmp.eq.s32.totalorder %s22, 0
    %p90 = por %p88, %p89
    %p91 = scmp.ne.s32.totalorder %s77, %s78
    %p92 = scmp.eq.s32.totalorder %s23, 1
    %p93 = por %p91, %p92
    %p95 = scmp.ne.s32.totalorder %s78, %s94
    %p96 = scmp.eq.s32.totalorder %s23, 0
    %p97 = por %p95, %p96
    %s99 = sadd.s32 %s98, 1
    %p102 = scmp.eq.s32.totalorder %s17, 1
    %p103 = scmp.ne.s32.totalorder %s98, %s100
    %p104 = scmp.eq.s32.totalorder %s17, 0
    %p105 = por %p103, %p104
    %p106 = scmp.ne.s32.totalorder %s98, %s100
    %p107 = scmp.eq.s32.totalorder %s22, 1
    %p108 = por %p106, %p107
    %p109 = scmp.ne.s32.totalorder %s100, %s101
    %p110 = scmp.eq.s32.totalorder %s22, 0
    %p111 = por %p109, %p110
    %p112 = scmp.ne.s32.totalorder %s100, %s101
    %p113 = scmp.eq.s32.totalorder %s23, 1
    %p114 = por %p112, %p113
    %p116 = scmp.ne.s32.totalorder %s101, %s115
    %p117 = scmp.eq.s32.totalorder %s23, 0
    %p118 = por %p116, %p117
    %s120 = sadd.s32 %s119, 1
    %p123 = scmp.eq.s32.totalorder %s17, 1
    %p124 = scmp.ne.s32.totalorder %s119, %s121
    %p125 = scmp.eq.s32.totalorder %s17, 0
    %p126 = por %p124, %p125
    %p127 = scmp.ne.s32.totalorder %s119, %s121
    %p128 = scmp.eq.s32.totalorder %s22, 1
    %p129 = por %p127, %p128
    %p130 = scmp.ne.s32.totalorder %s121, %s122
    %p131 = scmp.eq.s32.totalorder %s22, 0
    %p132 = por %p130, %p131
    %p133 = scmp.ne.s32.totalorder %s121, %s122
    %p134 = scmp.eq.s32.totalorder %s23, 1
    %p135 = por %p133, %p134
    %p137 = scmp.ne.s32.totalorder %s122, %s136
    %p138 = scmp.eq.s32.totalorder %s23, 0
    %p139 = por %p137, %p138
    %s141 = sadd.s32 %s140, 1
    %p144 = scmp.eq.s32.totalorder %s17, 1
    %p145 = scmp.ne.s32.totalorder %s140, %s142
    %p146 = scmp.eq.s32.totalorder %s17, 0
    %p147 = por %p145, %p146
    %p148 = scmp.ne.s32.totalorder %s140, %s142
    %p149 = scmp.eq.s32.totalorder %s22, 1
    %p150 = por %p148, %p149
    %p151 = scmp.ne.s32.totalorder %s142, %s143
    %p152 = scmp.eq.s32.totalorder %s22, 0
    %p153 = por %p151, %p152
    %p154 = scmp.ne.s32.totalorder %s142, %s143
    %p155 = scmp.eq.s32.totalorder %s23, 1
    %p156 = por %p154, %p155
    %p158 = scmp.ne.s32.totalorder %s143, %s157
    %p159 = scmp.eq.s32.totalorder %s23, 0
    %p160 = por %p158, %p159
    %s162 = sadd.s32 %s161, 1
    %p165 = scmp.eq.s32.totalorder %s17, 1
    %p166 = scmp.ne.s32.totalorder %s161, %s163
    %p167 = scmp.eq.s32.totalorder %s17, 0
    %p168 = por %p166, %p167
    %p169 = scmp.ne.s32.totalorder %s161, %s163
    %p170 = scmp.eq.s32.totalorder %s22, 1
    %p171 = por %p169, %p170
    %p172 = scmp.ne.s32.totalorder %s163, %s164
    %p173 = scmp.eq.s32.totalorder %s22, 0
    %p174 = por %p172, %p173
    %p175 = scmp.ne.s32.totalorder %s163, %s164
    %p176 = scmp.eq.s32.totalorder %s23, 1
    %p177 = por %p175, %p176
    %p179 = scmp.ne.s32.totalorder %s164, %s178
    %p180 = scmp.eq.s32.totalorder %s23, 0
    %p181 = por %p179, %p180
    %s183 = sadd.s32 %s182, 1
    %p186 = scmp.eq.s32.totalorder %s17, 1
    %p187 = scmp.ne.s32.totalorder %s182, %s184
    %p188 = scmp.eq.s32.totalorder %s17, 0
    %p189 = por %p187, %p188
    %p190 = scmp.ne.s32.totalorder %s182, %s184
    %p191 = scmp.eq.s32.totalorder %s22, 1
    %p192 = por %p190, %p191
    %p193 = scmp.ne.s32.totalorder %s184, %s185
    %p194 = scmp.eq.s32.totalorder %s22, 0
    %p195 = por %p193, %p194
    %p196 = scmp.ne.s32.totalorder %s184, %s185
    %p197 = scmp.eq.s32.totalorder %s23, 1
    %p198 = por %p196, %p197
    %p200 = scmp.ne.s32.totalorder %s185, %s199
    %p201 = scmp.eq.s32.totalorder %s23, 0
    %p202 = por %p200, %p201
    %s204 = sadd.s32 %s203, 1
    %p207 = scmp.eq.s32.totalorder %s17, 1
    %p208 = scmp.ne.s32.totalorder %s203, %s205
    %p209 = scmp.eq.s32.totalorder %s17, 0
    %p210 = por %p208, %p209
    %p211 = scmp.ne.s32.totalorder %s203, %s205
    %p212 = scmp.eq.s32.totalorder %s22, 1
    %p213 = por %p211, %p212
    %p214 = scmp.ne.s32.totalorder %s205, %s206
    %p215 = scmp.eq.s32.totalorder %s22, 0
    %p216 = por %p214, %p215
    %p217 = scmp.ne.s32.totalorder %s205, %s206
    %p218 = scmp.eq.s32.totalorder %s23, 1
    %p219 = por %p217, %p218
    %p221 = scmp.ne.s32.totalorder %s206, %s220
    %p222 = scmp.eq.s32.totalorder %s23, 0
    %p223 = por %p221, %p222
    %s225 = sadd.s32 %s224, 1
    %p228 = scmp.eq.s32.totalorder %s17, 1
    %p229 = scmp.ne.s32.totalorder %s224, %s226
    %p230 = scmp.eq.s32.totalorder %s17, 0
    %p231 = por %p229, %p230
    %p232 = scmp.ne.s32.totalorder %s224, %s226
    %p233 = scmp.eq.s32.totalorder %s22, 1
    %p234 = por %p232, %p233
    %p235 = scmp.ne.s32.totalorder %s226, %s227
    %p236 = scmp.eq.s32.totalorder %s22, 0
    %p237 = por %p235, %p236
    %p238 = scmp.ne.s32.totalorder %s226, %s227
    %p239 = scmp.eq.s32.totalorder %s23, 1
    %p240 = por %p238, %p239
    %p242 = scmp.ne.s32.totalorder %s227, %s241
    %p243 = scmp.eq.s32.totalorder %s23, 0
    %p244 = por %p242, %p243
    %s246 = sadd.s32 %s245, 1
    %p249 = scmp.eq.s32.totalorder %s17, 1
    %p250 = scmp.ne.s32.totalorder %s245, %s247
    %p251 = scmp.eq.s32.totalorder %s17, 0
    %p252 = por %p250, %p251
    %p253 = scmp.ne.s32.totalorder %s245, %s247
    %p254 = scmp.eq.s32.totalorder %s22, 1
    %p255 = por %p253, %p254
    %p256 = scmp.ne.s32.totalorder %s247, %s248
    %p257 = scmp.eq.s32.totalorder %s22, 0
    %p258 = por %p256, %p257
    %p259 = scmp.ne.s32.totalorder %s247, %s248
    %p260 = scmp.eq.s32.totalorder %s23, 1
    %p261 = por %p259, %p260
    %p263 = scmp.ne.s32.totalorder %s248, %s262
    %p264 = scmp.eq.s32.totalorder %s23, 0
    %p265 = por %p263, %p264
    %s266 = ssub.s32 %s17, %s24
    %p267 = scmp.eq.s32.totalorder %s266, 0
    %s269 = sadd.s32 %s268, 1
    %s270 = scalar_select %p267, %s268, %s269
    %p273 = pneg %p267
    %p274 = scmp.eq.s32.totalorder %s17, 1
    %p275 = por %p273, %p274
    %p276 = scmp.ne.s32.totalorder %s268, %s271
    %p277 = scmp.eq.s32.totalorder %s17, 0
    %p278 = por %p276, %p277
    %p279 = scmp.ne.s32.totalorder %s268, %s271
    %p280 = scmp.eq.s32.totalorder %s22, 1
    %p281 = por %p279, %p280
    %p282 = scmp.ne.s32.totalorder %s271, %s272
    %p283 = scmp.eq.s32.totalorder %s22, 0
    %p284 = por %p282, %p283
    %p285 = scmp.ne.s32.totalorder %s271, %s272
    %p286 = scmp.eq.s32.totalorder %s23, 1
    %p287 = por %p285, %p286
    %p289 = scmp.ne.s32.totalorder %s272, %s288
    %p290 = scmp.eq.s32.totalorder %s23, 0
    %p291 = por %p289, %p290
    %p292 = scmp.le.s32.totalorder 1, %s17
    %p293 = scmp.lt.s32.totalorder %s17, 3
    %p294 = pnand %p292, %p293
    %p295 = pneg %p294
    // Predicated region
    $region9: #{residual_se_basic_block.1} parent=5 // pred_check
      _
    $region10: #{residual_se_basic_block.1} parent=5 // pred_check_branch
      %297 = sbr.rel (%p294) target = $region12
    $region11: #{residual_se_basic_block.1} parent=5 // pred_region
      %s298 = ssub.s32 %s17, 1
      // Predicated region
      $region13: #{residual_se_basic_block.1} parent=11 // pred_check
        %p299 = pneg %p64
      $region14: #{residual_se_basic_block.1} parent=11 // pred_check_branch
        %301 = sbr.rel (%p299) target = $region16
      $region15: #{residual_se_basic_block.1} parent=11 // pred_region
        _
      $region16: #{residual_se_basic_block.1} parent=11 // pred_fallthru
        _
      // Predicated region
      $region17: #{residual_se_basic_block.1} parent=11 // pred_check
        %p302 = pneg %p111
      $region18: #{residual_se_basic_block.1} parent=11 // pred_check_branch
        %304 = sbr.rel (%p302) target = $region20
      $region19: #{residual_se_basic_block.1} parent=11 // pred_region
        _
      $region20: #{residual_se_basic_block.1} parent=11 // pred_fallthru
        _
      // Predicated region
      $region21: #{residual_se_basic_block.1} parent=11 // pred_check
        %p305 = pneg %p132
      $region22: #{residual_se_basic_block.1} parent=11 // pred_check_branch
        %307 = sbr.rel (%p305) target = $region24
      $region23: #{residual_se_basic_block.1} parent=11 // pred_region
        _
      $region24: #{residual_se_basic_block.1} parent=11 // pred_fallthru
        _
      // Predicated region
      $region25: #{residual_se_basic_block.1} parent=11 // pred_check
        %p308 = pneg %p153
      $region26: #{residual_se_basic_block.1} parent=11 // pred_check_branch
        %310 = sbr.rel (%p308) target = $region28
      $region27: #{residual_se_basic_block.1} parent=11 // pred_region
        _
      $region28: #{residual_se_basic_block.1} parent=11 // pred_fallthru
        _
      // Predicated region
      $region29: #{residual_se_basic_block.1} parent=11 // pred_check
        %p311 = pneg %p174
      $region30: #{residual_se_basic_block.1} parent=11 // pred_check_branch
        %313 = sbr.rel (%p311) target = $region32
      $region31: #{residual_se_basic_block.1} parent=11 // pred_region
        _
      $region32: #{residual_se_basic_block.1} parent=11 // pred_fallthru
        _
      // Predicated region
      $region33: #{residual_se_basic_block.1} parent=11 // pred_check
        %p314 = pneg %p195
      $region34: #{residual_se_basic_block.1} parent=11 // pred_check_branch
        %316 = sbr.rel (%p314) target = $region36
      $region35: #{residual_se_basic_block.1} parent=11 // pred_region
        _
      $region36: #{residual_se_basic_block.1} parent=11 // pred_fallthru
        _
      // Predicated region
      $region37: #{residual_se_basic_block.1} parent=11 // pred_check
        %p317 = pneg %p216
      $region38: #{residual_se_basic_block.1} parent=11 // pred_check_branch
        %319 = sbr.rel (%p317) target = $region40
      $region39: #{residual_se_basic_block.1} parent=11 // pred_region
        _
      $region40: #{residual_se_basic_block.1} parent=11 // pred_fallthru
        _
      // Predicated region
      $region41: #{residual_se_basic_block.1} parent=11 // pred_check
        %p320 = pneg %p237
      $region42: #{residual_se_basic_block.1} parent=11 // pred_check_branch
        %322 = sbr.rel (%p320) target = $region44
      $region43: #{residual_se_basic_block.1} parent=11 // pred_region
        _
      $region44: #{residual_se_basic_block.1} parent=11 // pred_fallthru
        _
      // Predicated region
      $region45: #{residual_se_basic_block.1} parent=11 // pred_check
        %p323 = pneg %p258
      $region46: #{residual_se_basic_block.1} parent=11 // pred_check_branch
        %325 = sbr.rel (%p323) target = $region48
      $region47: #{residual_se_basic_block.1} parent=11 // pred_region
        _
      $region48: #{residual_se_basic_block.1} parent=11 // pred_fallthru
        _
    $region12: #{residual_se_basic_block.1} parent=5 // pred_fallthru
      _
    %p326 = scmp.lt.s32.totalorder %s17, 2
    // Predicated region
    $region49: #{residual_se_basic_block.1} parent=5 // pred_check
      %p327 = pneg %p326
    $region50: #{residual_se_basic_block.1} parent=5 // pred_check_branch
      %329 = sbr.rel (%p327) target = $region52
    $region51: #{residual_se_basic_block.1} parent=5 // pred_region
      // Predicated region
      $region53: #{residual_se_basic_block.1} parent=51 // pred_check
        %p330 = pneg %p37
      $region54: #{residual_se_basic_block.1} parent=51 // pred_check_branch
        %332 = sbr.rel (%p330) target = $region56
      $region55: #{residual_se_basic_block.1} parent=51 // pred_region
        %p333 = scmp.lt.s32.totalorder %s17, 1
        %s334 = scalar_select %p333, %s17, 1
        %s335 = smul.addr %s334, 55
        %s336 = smul.addr %s335, 4
        %s337 = scalar_lea.vmem %s0, %s336
      $region56: #{residual_se_basic_block.1} parent=51 // pred_fallthru
        _
      // Predicated region
      $region57: #{residual_se_basic_block.1} parent=51 // pred_check
        %p338 = pneg %p84
      $region58: #{residual_se_basic_block.1} parent=51 // pred_check_branch
        %340 = sbr.rel (%p338) target = $region60
      $region59: #{residual_se_basic_block.1} parent=51 // pred_region
        %p341 = scmp.lt.s32.totalorder %s17, 1
        %s342 = scalar_select %p341, %s17, 1
        %s343 = smul.addr %s342, 10
        %s344 = smul.addr %s343, 4
        %s345 = scalar_lea.vmem %s2, %s344
      $region60: #{residual_se_basic_block.1} parent=51 // pred_fallthru
        _
    $region52: #{residual_se_basic_block.1} parent=5 // pred_fallthru
      _
    %p346 = scmp.le.s32.totalorder 1, %s17
    %p347 = scmp.lt.s32.totalorder %s17, 3
    %p348 = pnand %p346, %p347
    %p349 = pneg %p348
    // Predicated region
    $region61: #{residual_se_basic_block.1} parent=5 // pred_check
      _
    $region62: #{residual_se_basic_block.1} parent=5 // pred_check_branch
      %351 = sbr.rel (%p348) target = $region64
    $region63: #{residual_se_basic_block.1} parent=5 // pred_region
      %s352 = ssub.s32 %s17, 1
      %p353 = scmp.lt.s32.totalorder %s22, 1
      %s354 = scalar_select %p353, %s22, 1
      %s355 = smul.addr %s354, 55
      %s356 = smul.addr %s355, 4
      %s357 = scalar_lea.vmem %s0, %s356
      %p358 = pneg %p43
      %p359 = pneg %p40
      %p360 = pneg %p64
      %p361 = pneg %p61
      %p362 = scmp.lt.s32.totalorder %s22, 1
      %s363 = scalar_select %p362, %s22, 1
      %s364 = smul.addr %s363, 10
      %s365 = smul.addr %s364, 4
      %s366 = scalar_lea.vmem %s2, %s365
      %p367 = pneg %p90
      %p368 = pneg %p87
      %p369 = pneg %p111
      %p370 = pneg %p108
      %p371 = pneg %p132
      %p372 = pneg %p129
      %p373 = pneg %p153
      %p374 = pneg %p150
      %p375 = pneg %p174
      %p376 = pneg %p171
      %p377 = pneg %p195
      %p378 = pneg %p192
      %p379 = pneg %p216
      %p380 = pneg %p213
      %p381 = pneg %p237
      %p382 = pneg %p234
      %p383 = pneg %p258
      %p384 = pneg %p255
      %p385 = pneg %p284
      %p386 = pneg %p281
      %p387 = scmp.lt.s32.totalorder %s22, 1
      %s388 = scalar_select %p387, %s22, 1
      %s389 = smul.addr %s388, 10
      %s390 = smul.addr %s389, 8
      %s391 = scalar_lea.vmem %s11, %s390
      %p392 = scmp.lt.s32.totalorder %s22, 1
      %s393 = scalar_select %p392, %s22, 1
      %s394 = smul.addr %s393, 55
      %s395 = smul.addr %s394, 4
      %s396 = scalar_lea.vmem %s0, %s395
      %p397 = scmp.lt.s32.totalorder %s22, 1
      %s398 = scalar_select %p397, %s22, 1
      %s399 = smul.addr %s398, 10
      %s400 = smul.addr %s399, 4
      %s401 = scalar_lea.vmem %s2, %s400
      %p402 = scmp.lt.s32.totalorder %s22, 1
      %s403 = scalar_select %p402, %s22, 1
      %s404 = smul.addr %s403, 10
      %s405 = smul.addr %s404, 8
      %s406 = scalar_lea.vmem %s11, %s405
      %v408 = vld [vmem:[%s1] sm:$0xff]
      %v409 = vld [vmem:[%s1 + $0x8] sm:$0xff]
      %v410 = vld [vmem:[%s1 + $0x10] sm:$0xff]
      %v411 = vld [vmem:[%s1 + $0x18] sm:$0xff]
      %v412 = vld [vmem:[%s1 + $0x20] sm:$0xff]
      %v413 = vld [vmem:[%s1 + $0x28] sm:$0xff]
      %v414 = vld [vmem:[%s1 + $0x30] sm:$0xff]
      %v415 = vld [vmem:[%s1 + $0x38] sm:$0xff]
      %v416 = vld [vmem:[%s1 + $0x40] sm:$0xff]
      %v417 = vld [vmem:[%s1 + $0x48] sm:$0xff]
      %v418 = vld [vmem:[%s396] sm:$0xf]
      %v419 = vld [vmem:[%s396 + $0x4] sm:$0xf]
      %v420 = vld [vmem:[%s396 + $0x8] sm:$0xf]
      %v421 = vld [vmem:[%s396 + $0xc] sm:$0xf]
      %v422 = vld [vmem:[%s396 + $0x10] sm:$0xf]
      %v423 = vld [vmem:[%s396 + $0x14] sm:$0xf]
      %v424 = vld [vmem:[%s396 + $0x18] sm:$0xf]
      %v425 = vld [vmem:[%s396 + $0x1c] sm:$0xf]
      %v426 = vld [vmem:[%s396 + $0x20] sm:$0xf]
      %v427 = vld [vmem:[%s396 + $0x24] sm:$0xf]
      %v428 = vld [vmem:[%s396 + $0x28] sm:$0xf]
      %v429 = vld [vmem:[%s396 + $0x2c] sm:$0xf]
      %v430 = vld [vmem:[%s396 + $0x30] sm:$0xf]
      %v431 = vld [vmem:[%s396 + $0x34] sm:$0xf]
      %v432 = vld [vmem:[%s396 + $0x38] sm:$0xf]
      %v433 = vld [vmem:[%s396 + $0x3c] sm:$0xf]
      %v434 = vld [vmem:[%s396 + $0x40] sm:$0xf]
      %v435 = vld [vmem:[%s396 + $0x44] sm:$0xf]
      %v436 = vld [vmem:[%s396 + $0x48] sm:$0xf]
      %v437 = vld [vmem:[%s396 + $0x4c] sm:$0xf]
      %v438 = vld [vmem:[%s396 + $0x50] sm:$0xf]
      %v439 = vld [vmem:[%s396 + $0x54] sm:$0xf]
      %v440 = vld [vmem:[%s396 + $0x58] sm:$0xf]
      %v441 = vld [vmem:[%s396 + $0x5c] sm:$0xf]
      %v442 = vld [vmem:[%s396 + $0x60] sm:$0xf]
      %v443 = vld [vmem:[%s396 + $0x64] sm:$0xf]
      %v444 = vld [vmem:[%s396 + $0x68] sm:$0xf]
      %v445 = vld [vmem:[%s396 + $0x6c] sm:$0xf]
      %v446 = vld [vmem:[%s396 + $0x70] sm:$0xf]
      %v447 = vld [vmem:[%s396 + $0x74] sm:$0xf]
      %v448 = vld [vmem:[%s396 + $0x78] sm:$0xf]
      %v449 = vld [vmem:[%s396 + $0x7c] sm:$0xf]
      %v450 = vld [vmem:[%s396 + $0x80] sm:$0xf]
      %v451 = vld [vmem:[%s396 + $0x84] sm:$0xf]
      %v452 = vld [vmem:[%s396 + $0x88] sm:$0xf]
      %v453 = vld [vmem:[%s396 + $0x8c] sm:$0xf]
      %v454 = vld [vmem:[%s396 + $0x90] sm:$0xf]
      %v455 = vld [vmem:[%s396 + $0x94] sm:$0xf]
      %v456 = vld [vmem:[%s396 + $0x98] sm:$0xf]
      %v457 = vld [vmem:[%s396 + $0x9c] sm:$0xf]
      %v458 = vld [vmem:[%s396 + $0xa0] sm:$0xf]
      %v459 = vld [vmem:[%s396 + $0xa4] sm:$0xf]
      %v460 = vld [vmem:[%s396 + $0xa8] sm:$0xf]
      %v461 = vld [vmem:[%s396 + $0xac] sm:$0xf]
      %v462 = vld [vmem:[%s396 + $0xb0] sm:$0xf]
      %v463 = vld [vmem:[%s396 + $0xb4] sm:$0xf]
      %v464 = vld [vmem:[%s396 + $0xb8] sm:$0xf]
      %v465 = vld [vmem:[%s396 + $0xbc] sm:$0xf]
      %v466 = vld [vmem:[%s396 + $0xc0] sm:$0xf]
      %v467 = vld [vmem:[%s396 + $0xc4] sm:$0xf]
      %v468 = vld [vmem:[%s396 + $0xc8] sm:$0xf]
      %v469 = vld [vmem:[%s396 + $0xcc] sm:$0xf]
      %v470 = vld [vmem:[%s396 + $0xd0] sm:$0xf]
      %v471 = vld [vmem:[%s396 + $0xd4] sm:$0xf]
      %v472 = vld [vmem:[%s396 + $0xd8] sm:$0xf]
      %v473 = vunpack.c.l.bf16 %v418
      %v474 = vunpack.c.l.bf16 %v419
      %v475 = vunpack.c.l.bf16 %v420
      %v476 = vunpack.c.l.bf16 %v421
      %v477 = vunpack.c.l.bf16 %v422
      %v478 = vunpack.c.l.bf16 %v423
      %v479 = vunpack.c.l.bf16 %v424
      %v480 = vunpack.c.l.bf16 %v425
      %v481 = vunpack.c.l.bf16 %v426
      %v482 = vunpack.c.l.bf16 %v427
      %v483 = vunpack.c.l.bf16 %v428
      %v484 = vunpack.c.l.bf16 %v429
      %v485 = vunpack.c.l.bf16 %v430
      %v486 = vunpack.c.l.bf16 %v431
      %v487 = vunpack.c.l.bf16 %v432
      %v488 = vunpack.c.l.bf16 %v433
      %v489 = vunpack.c.l.bf16 %v434
      %v490 = vunpack.c.l.bf16 %v435
      %v491 = vunpack.c.l.bf16 %v436
      %v492 = vunpack.c.l.bf16 %v437
      %v493 = vunpack.c.l.bf16 %v438
      %v494 = vunpack.c.l.bf16 %v439
      %v495 = vunpack.c.l.bf16 %v440
      %v496 = vunpack.c.l.bf16 %v441
      %v497 = vunpack.c.l.bf16 %v442
      %v498 = vunpack.c.l.bf16 %v443
      %v499 = vunpack.c.l.bf16 %v444
      %v500 = vunpack.c.l.bf16 %v445
      %v501 = vunpack.c.l.bf16 %v446
      %v502 = vunpack.c.l.bf16 %v447
      %v503 = vunpack.c.l.bf16 %v448
      %v504 = vunpack.c.l.bf16 %v449
      %v505 = vunpack.c.l.bf16 %v450
      %v506 = vunpack.c.l.bf16 %v451
      %v507 = vunpack.c.l.bf16 %v452
      %v508 = vunpack.c.l.bf16 %v453
      %v509 = vunpack.c.l.bf16 %v454
      %v510 = vunpack.c.l.bf16 %v455
      %v511 = vunpack.c.l.bf16 %v456
      %v512 = vunpack.c.l.bf16 %v457
      %v513 = vunpack.c.l.bf16 %v458
      %v514 = vunpack.c.l.bf16 %v459
      %v515 = vunpack.c.l.bf16 %v460
      %v516 = vunpack.c.l.bf16 %v461
      %v517 = vunpack.c.l.bf16 %v462
      %v518 = vunpack.c.l.bf16 %v463
      %v519 = vunpack.c.l.bf16 %v464
      %v520 = vunpack.c.l.bf16 %v465
      %v521 = vunpack.c.l.bf16 %v466
      %v522 = vunpack.c.l.bf16 %v467
      %v523 = vunpack.c.l.bf16 %v468
      %v524 = vunpack.c.l.bf16 %v469
      %v525 = vunpack.c.l.bf16 %v470
      %v526 = vunpack.c.l.bf16 %v471
      %v527 = vunpack.c.l.bf16 %v472
      %vm528 = vcmask 130048
      %529 = vst.msk [vmem:[#allocation2] sm:$0xff] %vm528, %v473
      %530 = vst.msk [vmem:[#allocation2 + $0x8] sm:$0xff] %vm528, %v474
      %531 = vst.msk [vmem:[#allocation2 + $0x10] sm:$0xff] %vm528, %v475
      %532 = vst.msk [vmem:[#allocation2 + $0x18] sm:$0xff] %vm528, %v476
      %533 = vst.msk [vmem:[#allocation2 + $0x20] sm:$0xff] %vm528, %v477
      %534 = vst.msk [vmem:[#allocation2 + $0x28] sm:$0xff] %vm528, %v478
      %535 = vst.msk [vmem:[#allocation2 + $0x30] sm:$0xff] %vm528, %v479
      %536 = vst.msk [vmem:[#allocation2 + $0x38] sm:$0xff] %vm528, %v480
      %537 = vst.msk [vmem:[#allocation2 + $0x40] sm:$0xff] %vm528, %v481
      %538 = vst.msk [vmem:[#allocation2 + $0x48] sm:$0xff] %vm528, %v482
      %539 = vst.msk [vmem:[#allocation2 + $0x50] sm:$0xff] %vm528, %v483
      %540 = vst.msk [vmem:[#allocation2 + $0x58] sm:$0xff] %vm528, %v484
      %541 = vst.msk [vmem:[#allocation2 + $0x60] sm:$0xff] %vm528, %v485
      %542 = vst.msk [vmem:[#allocation2 + $0x68] sm:$0xff] %vm528, %v486
      %543 = vst.msk [vmem:[#allocation2 + $0x70] sm:$0xff] %vm528, %v487
      %544 = vst.msk [vmem:[#allocation2 + $0x78] sm:$0xff] %vm528, %v488
      %545 = vst.msk [vmem:[#allocation2 + $0x80] sm:$0xff] %vm528, %v489
      %546 = vst.msk [vmem:[#allocation2 + $0x88] sm:$0xff] %vm528, %v490
      %547 = vst.msk [vmem:[#allocation2 + $0x90] sm:$0xff] %vm528, %v491
      %548 = vst.msk [vmem:[#allocation2 + $0x98] sm:$0xff] %vm528, %v492
      %549 = vst.msk [vmem:[#allocation2 + $0xa0] sm:$0xff] %vm528, %v493
      %550 = vst.msk [vmem:[#allocation2 + $0xa8] sm:$0xff] %vm528, %v494
      %551 = vst.msk [vmem:[#allocation2 + $0xb0] sm:$0xff] %vm528, %v495
      %552 = vst.msk [vmem:[#allocation2 + $0xb8] sm:$0xff] %vm528, %v496
      %553 = vst.msk [vmem:[#allocation2 + $0xc0] sm:$0xff] %vm528, %v497
      %554 = vst.msk [vmem:[#allocation2 + $0xc8] sm:$0xff] %vm528, %v498
      %555 = vst.msk [vmem:[#allocation2 + $0xd0] sm:$0xff] %vm528, %v499
      %556 = vst.msk [vmem:[#allocation2 + $0xd8] sm:$0xff] %vm528, %v500
      %557 = vst.msk [vmem:[#allocation2 + $0xe0] sm:$0xff] %vm528, %v501
      %558 = vst.msk [vmem:[#allocation2 + $0xe8] sm:$0xff] %vm528, %v502
      %559 = vst.msk [vmem:[#allocation2 + $0xf0] sm:$0xff] %vm528, %v503
      %560 = vst.msk [vmem:[#allocation2 + $0xf8] sm:$0xff] %vm528, %v504
      %561 = vst.msk [vmem:[#allocation2 + $0x100] sm:$0xff] %vm528, %v505
      %562 = vst.msk [vmem:[#allocation2 + $0x108] sm:$0xff] %vm528, %v506
      %563 = vst.msk [vmem:[#allocation2 + $0x110] sm:$0xff] %vm528, %v507
      %564 = vst.msk [vmem:[#allocation2 + $0x118] sm:$0xff] %vm528, %v508
      %565 = vst.msk [vmem:[#allocation2 + $0x120] sm:$0xff] %vm528, %v509
      %566 = vst.msk [vmem:[#allocation2 + $0x128] sm:$0xff] %vm528, %v510
      %567 = vst.msk [vmem:[#allocation2 + $0x130] sm:$0xff] %vm528, %v511
      %568 = vst.msk [vmem:[#allocation2 + $0x138] sm:$0xff] %vm528, %v512
      %569 = vst.msk [vmem:[#allocation2 + $0x140] sm:$0xff] %vm528, %v513
      %570 = vst.msk [vmem:[#allocation2 + $0x148] sm:$0xff] %vm528, %v514
      %571 = vst.msk [vmem:[#allocation2 + $0x150] sm:$0xff] %vm528, %v515
      %572 = vst.msk [vmem:[#allocation2 + $0x158] sm:$0xff] %vm528, %v516
      %573 = vst.msk [vmem:[#allocation2 + $0x160] sm:$0xff] %vm528, %v517
      %574 = vst.msk [vmem:[#allocation2 + $0x168] sm:$0xff] %vm528, %v518
      %575 = vst.msk [vmem:[#allocation2 + $0x170] sm:$0xff] %vm528, %v519
      %576 = vst.msk [vmem:[#allocation2 + $0x178] sm:$0xff] %vm528, %v520
      %577 = vst.msk [vmem:[#allocation2 + $0x180] sm:$0xff] %vm528, %v521
      %578 = vst.msk [vmem:[#allocation2 + $0x188] sm:$0xff] %vm528, %v522
      %579 = vst.msk [vmem:[#allocation2 + $0x190] sm:$0xff] %vm528, %v523
      %580 = vst.msk [vmem:[#allocation2 + $0x198] sm:$0xff] %vm528, %v524
      %581 = vst.msk [vmem:[#allocation2 + $0x1a0] sm:$0xff] %vm528, %v525
      %582 = vst.msk [vmem:[#allocation2 + $0x1a8] sm:$0xff] %vm528, %v526
      %583 = vst.msk [vmem:[#allocation2 + $0x1b0] sm:$0xff] %vm528, %v527
      %v584 = vld [vmem:[#allocation2] sm:$0xff]
      %v585 = vld [vmem:[#allocation2 + $0x8] sm:$0xff]
      %v586 = vld [vmem:[#allocation2 + $0x10] sm:$0xff]
      %v587 = vld [vmem:[#allocation2 + $0x18] sm:$0xff]
      %v588 = vld [vmem:[#allocation2 + $0x20] sm:$0xff]
      %v589 = vld [vmem:[#allocation2 + $0x28] sm:$0xff]
      %v590 = vld [vmem:[#allocation2 + $0x30] sm:$0xff]
      %v591 = vld [vmem:[#allocation2 + $0x38] sm:$0xff]
      %v592 = vld [vmem:[#allocation2 + $0x40] sm:$0xff]
      %v593 = vld [vmem:[#allocation2 + $0x48] sm:$0xff]
      %v594 = vpack.c.bf16 %v585, %v584
      %v595 = vpack.c.bf16 %v587, %v586
      %v596 = vpack.c.bf16 %v589, %v588
      %v597 = vpack.c.bf16 %v591, %v590
      %v598 = vpack.c.bf16 %v593, %v592
      %v599 = vld [vmem:[%s3] sm:$0xf]
      %v600 = vld [vmem:[%s3 + $0x4] sm:$0xf]
      %v601 = vld [vmem:[#allocation2 + $0x6e] sm:$0xff]
      %v602 = vld [vmem:[#allocation2 + $0x76] sm:$0xff]
      %v603 = vld [vmem:[#allocation2 + $0x7e] sm:$0xff]
      %v604 = vld [vmem:[#allocation2 + $0x86] sm:$0xff]
      %v605 = vld [vmem:[#allocation2 + $0x8e] sm:$0xff]
      %v606 = vld [vmem:[#allocation2 + $0x96] sm:$0xff]
      %v607 = vld [vmem:[#allocation2 + $0x9e] sm:$0xff]
      %v608 = vld [vmem:[#allocation2 + $0xa6] sm:$0xff]
      %v609 = vld [vmem:[#allocation2 + $0xae] sm:$0xff]
      %v610 = vld [vmem:[#allocation2 + $0xb6] sm:$0xff]
      %v611 = vpack.c.bf16 %v602, %v601
      %v612 = vpack.c.bf16 %v604, %v603
      %v613 = vpack.c.bf16 %v606, %v605
      %v614 = vpack.c.bf16 %v608, %v607
      %v615 = vpack.c.bf16 %v610, %v609
      %s616 = scalar_lea.vmem %s3, 8
      %v617 = vld [vmem:[%s616] sm:$0xf]
      %v618 = vld [vmem:[%s616 + $0x4] sm:$0xf]
      %v621 = vunpack.c.l.b16 %v617
      %v622 = vunpack.c.l.b16 %v618
      %v623 = vpack.c.b16 %v622, %v621
      %v626 = vsel %vm528, %v611, 0
      %v629 = vsel %vm528, %v612, 0
      %v632 = vsel %vm528, %v613, 0
      %v635 = vsel %vm528, %v614, 0
      %v638 = vsel %vm528, %v615, 0
      %640 = vmatprep.subr.bf16.mxu0 0
      %641 = vmatpush1.bf16.msra.mxu0 %v623
      %642 = vmatprep.subr.bf16.mxu0 0
      %643 = vmatpush1.bf16.msra.mxu0 0
      %644 = vmatprep.subr.bf16.mxu0 0
      %645 = vmatpush1.bf16.msra.mxu0 0
      %646 = vmatprep.subr.bf16.mxu0 0
      %647 = vmatpush1.bf16.msra.mxu0 0
      %648 = vmatprep.subr.bf16.mxu0 0
      %649 = vmatpush1.bf16.msra.mxu0 0
      %650 = vmatprep.subr.bf16.mxu0 0
      %651 = vmatpush1.bf16.msra.mxu0 0
      %652 = vmatprep.subr.bf16.mxu0 0
      %653 = vmatpush1.bf16.msra.mxu0 0
      %654 = vmatprep.subr.bf16.mxu0 0
      %655 = vmatpush1.bf16.msra.mxu0 0
      %656 = vmatprep.subr.bf16.mxu0 0
      %657 = vmatpush1.bf16.msra.mxu0 0
      %658 = vmatprep.subr.bf16.mxu0 0
      %659 = vmatpush1.bf16.msra.mxu0 0
      %660 = vmatprep.subr.bf16.mxu0 0
      %661 = vmatpush1.bf16.msra.mxu0 0
      %662 = vmatprep.subr.bf16.mxu0 0
      %663 = vmatpush1.bf16.msra.mxu0 0
      %664 = vmatprep.subr.bf16.mxu0 0
      %665 = vmatpush1.bf16.msra.mxu0 0
      %666 = vmatprep.subr.bf16.mxu0 0
      %667 = vmatpush1.bf16.msra.mxu0 0
      %668 = vmatprep.subr.bf16.mxu0 0
      %669 = vmatpush1.bf16.msra.mxu0 0
      %670 = vmatprep.subr.bf16.mxu0 0
      %671 = vmatpush1.bf16.msra.mxu0 0
      %672 = vmatprep.mubr.bf16.mxu0 0
      %673 = vmatmul.mubr.bf16.gmra.mrb[0].mxu0 %v626
      %v674 = vpop.f32.mrb[0].mxu0
      %v675 = vadd.f32 0.0, %v674
      %v676 = vpop.f32.mrb[0].mxu0
      %v677 = vpop.f32.mrb[0].mxu0
      %v678 = vadd.f32 0.0, %v677
      %v679 = vpop.f32.mrb[0].mxu0
      %680 = vmatprep.mubr.bf16.mxu0 0
      %681 = vmatmul.mubr.bf16.gmra.mrb[0].mxu0 %v629
      %v682 = vpop.f32.mrb[0].mxu0
      %v683 = vadd.f32 0.0, %v682
      %v684 = vpop.f32.mrb[0].mxu0
      %v685 = vpop.f32.mrb[0].mxu0
      %v686 = vadd.f32 0.0, %v685
      %v687 = vpop.f32.mrb[0].mxu0
      %688 = vmatprep.mubr.bf16.mxu0 0
      %689 = vmatmul.mubr.bf16.gmra.mrb[0].mxu0 %v632
      %v690 = vpop.f32.mrb[0].mxu0
      %v691 = vadd.f32 0.0, %v690
      %v692 = vpop.f32.mrb[0].mxu0
      %v693 = vpop.f32.mrb[0].mxu0
      %v694 = vadd.f32 0.0, %v693
      %v695 = vpop.f32.mrb[0].mxu0
      %696 = vmatprep.mubr.bf16.mxu0 0
      %697 = vmatmul.mubr.bf16.gmra.mrb[0].mxu0 %v635
      %v698 = vpop.f32.mrb[0].mxu0
      %v699 = vadd.f32 0.0, %v698
      %v700 = vpop.f32.mrb[0].mxu0
      %v701 = vpop.f32.mrb[0].mxu0
      %v702 = vadd.f32 0.0, %v701
      %v703 = vpop.f32.mrb[0].mxu0
      %704 = vmatprep.mubr.bf16.mxu0 0
      %705 = vmatmul.mubr.bf16.gmra.mrb[0].mxu0 %v638
      %v706 = vpop.f32.mrb[0].mxu0
      %v707 = vadd.f32 0.0, %v706
      %v708 = vpop.f32.mrb[0].mxu0
      %v709 = vpop.f32.mrb[0].mxu0
      %v710 = vadd.f32 0.0, %v709
      %v711 = vpop.f32.mrb[0].mxu0
      %712 = vdwg.mxu0
      %v715 = vunpack.c.l.b16 %v599
      %v716 = vunpack.c.l.b16 %v600
      %v717 = vpack.c.b16 %v716, %v715
      %v720 = vsel %vm528, %v594, 0
      %v723 = vsel %vm528, %v595, 0
      %v726 = vsel %vm528, %v596, 0
      %v729 = vsel %vm528, %v597, 0
      %v732 = vsel %vm528, %v598, 0
      %734 = vmatprep.subr.bf16.mxu0 0
      %735 = vmatpush1.bf16.msra.mxu0 %v717
      %736 = vmatprep.subr.bf16.mxu0 0
      %737 = vmatpush1.bf16.msra.mxu0 0
      %738 = vmatprep.subr.bf16.mxu0 0
      %739 = vmatpush1.bf16.msra.mxu0 0
      %740 = vmatprep.subr.bf16.mxu0 0
      %741 = vmatpush1.bf16.msra.mxu0 0
      %742 = vmatprep.subr.bf16.mxu0 0
      %743 = vmatpush1.bf16.msra.mxu0 0
      %744 = vmatprep.subr.bf16.mxu0 0
      %745 = vmatpush1.bf16.msra.mxu0 0
      %746 = vmatprep.subr.bf16.mxu0 0
      %747 = vmatpush1.bf16.msra.mxu0 0
      %748 = vmatprep.subr.bf16.mxu0 0
      %749 = vmatpush1.bf16.msra.mxu0 0
      %750 = vmatprep.subr.bf16.mxu0 0
      %751 = vmatpush1.bf16.msra.mxu0 0
      %752 = vmatprep.subr.bf16.mxu0 0
      %753 = vmatpush1.bf16.msra.mxu0 0
      %754 = vmatprep.subr.bf16.mxu0 0
      %755 = vmatpush1.bf16.msra.mxu0 0
      %756 = vmatprep.subr.bf16.mxu0 0
      %757 = vmatpush1.bf16.msra.mxu0 0
      %758 = vmatprep.subr.bf16.mxu0 0
      %759 = vmatpush1.bf16.msra.mxu0 0
      %760 = vmatprep.subr.bf16.mxu0 0
      %761 = vmatpush1.bf16.msra.mxu0 0
      %762 = vmatprep.subr.bf16.mxu0 0
      %763 = vmatpush1.bf16.msra.mxu0 0
      %764 = vmatprep.subr.bf16.mxu0 0
      %765 = vmatpush1.bf16.msra.mxu0 0
      %766 = vmatprep.mubr.bf16.mxu0 0
      %767 = vmatmul.mubr.bf16.gmra.mrb[0].mxu0 %v720
      %v768 = vpop.f32.mrb[0].mxu0
      %v769 = vadd.f32 %v675, %v768
      %v770 = vpop.f32.mrb[0].mxu0
      %v771 = vpop.f32.mrb[0].mxu0
      %v772 = vadd.f32 %v678, %v771
      %v773 = vpop.f32.mrb[0].mxu0
      %774 = vmatprep.mubr.bf16.mxu0 0
      %775 = vmatmul.mubr.bf16.gmra.mrb[0].mxu0 %v723
      %v776 = vpop.f32.mrb[0].mxu0
      %v777 = vadd.f32 %v683, %v776
      %v778 = vpop.f32.mrb[0].mxu0
      %v779 = vpop.f32.mrb[0].mxu0
      %v780 = vadd.f32 %v686, %v779
      %v781 = vpop.f32.mrb[0].mxu0
      %782 = vmatprep.mubr.bf16.mxu0 0
      %783 = vmatmul.mubr.bf16.gmra.mrb[0].mxu0 %v726
      %v784 = vpop.f32.mrb[0].mxu0
      %v785 = vadd.f32 %v691, %v784
      %v786 = vpop.f32.mrb[0].mxu0
      %v787 = vpop.f32.mrb[0].mxu0
      %v788 = vadd.f32 %v694, %v787
      %v789 = vpop.f32.mrb[0].mxu0
      %790 = vmatprep.mubr.bf16.mxu0 0
      %791 = vmatmul.mubr.bf16.gmra.mrb[0].mxu0 %v729
      %v792 = vpop.f32.mrb[0].mxu0
      %v793 = vadd.f32 %v699, %v792
      %v794 = vpop.f32.mrb[0].mxu0
      %v795 = vpop.f32.mrb[0].mxu0
      %v796 = vadd.f32 %v702, %v795
      %v797 = vpop.f32.mrb[0].mxu0
      %798 = vmatprep.mubr.bf16.mxu0 0
      %799 = vmatmul.mubr.bf16.gmra.mrb[0].mxu0 %v732
      %v800 = vpop.f32.mrb[0].mxu0
      %v801 = vadd.f32 %v707, %v800
      %v802 = vpop.f32.mrb[0].mxu0
      %v803 = vpop.f32.mrb[0].mxu0
      %v804 = vadd.f32 %v710, %v803
      %v805 = vpop.f32.mrb[0].mxu0
      %806 = vdwg.mxu0
      %v807 = vld [vmem:[#allocation2 + $0x1] sm:$0xff]
      %v808 = vld [vmem:[#allocation2 + $0x9] sm:$0xff]
      %v809 = vld [vmem:[#allocation2 + $0x11] sm:$0xff]
      %v810 = vld [vmem:[#allocation2 + $0x19] sm:$0xff]
      %v811 = vld [vmem:[#allocation2 + $0x21] sm:$0xff]
      %v812 = vld [vmem:[#allocation2 + $0x29] sm:$0xff]
      %v813 = vld [vmem:[#allocation2 + $0x31] sm:$0xff]
      %v814 = vld [vmem:[#allocation2 + $0x39] sm:$0xff]
      %v815 = vld [vmem:[#allocation2 + $0x41] sm:$0xff]
      %v816 = vld [vmem:[#allocation2 + $0x49] sm:$0xff]
      %v817 = vpack.c.bf16 %v808, %v807
      %v818 = vpack.c.bf16 %v810, %v809
      %v819 = vpack.c.bf16 %v812, %v811
      %v820 = vpack.c.bf16 %v814, %v813
      %v821 = vpack.c.bf16 %v816, %v815
      %s822 = scalar_lea.vmem %s3, 16
      %v823 = vld [vmem:[%s822] sm:$0xf]
      %v824 = vld [vmem:[%s822 + $0x4] sm:$0xf]
      %v827 = vunpack.c.l.b16 %v823
      %v828 = vunpack.c.l.b16 %v824
      %v829 = vpack.c.b16 %v828, %v827
      %v832 = vsel %vm528, %v817, 0
      %v835 = vsel %vm528, %v818, 0
      %v838 = vsel %vm528, %v819, 0
      %v841 = vsel %vm528, %v820, 0
      %v844 = vsel %vm528, %v821, 0
      %846 = vmatprep.subr.bf16.mxu0 0
      %847 = vmatpush1.bf16.msra.mxu0 %v829
      %848 = vmatprep.subr.bf16.mxu0 0
      %849 = vmatpush1.bf16.msra.mxu0 0
      %850 = vmatprep.subr.bf16.mxu0 0
      %851 = vmatpush1.bf16.msra.mxu0 0
      %852 = vmatprep.subr.bf16.mxu0 0
      %853 = vmatpush1.bf16.msra.mxu0 0
      %854 = vmatprep.subr.bf16.mxu0 0
      %855 = vmatpush1.bf16.msra.mxu0 0
      %856 = vmatprep.subr.bf16.mxu0 0
      %857 = vmatpush1.bf16.msra.mxu0 0
      %858 = vmatprep.subr.bf16.mxu0 0
      %859 = vmatpush1.bf16.msra.mxu0 0
      %860 = vmatprep.subr.bf16.mxu0 0
      %861 = vmatpush1.bf16.msra.mxu0 0
      %862 = vmatprep.subr.bf16.mxu0 0
      %863 = vmatpush1.bf16.msra.mxu0 0
      %864 = vmatprep.subr.bf16.mxu0 0
      %865 = vmatpush1.bf16.msra.mxu0 0
      %866 = vmatprep.subr.bf16.mxu0 0
      %867 = vmatpush1.bf16.msra.mxu0 0
      %868 = vmatprep.subr.bf16.mxu0 0
      %869 = vmatpush1.bf16.msra.mxu0 0
      %870 = vmatprep.subr.bf16.mxu0 0
      %871 = vmatpush1.bf16.msra.mxu0 0
      %872 = vmatprep.subr.bf16.mxu0 0
      %873 = vmatpush1.bf16.msra.mxu0 0
      %874 = vmatprep.subr.bf16.mxu0 0
      %875 = vmatpush1.bf16.msra.mxu0 0
      %876 = vmatprep.subr.bf16.mxu0 0
      %877 = vmatpush1.bf16.msra.mxu0 0
      %878 = vmatprep.mubr.bf16.mxu0 0
      %879 = vmatmul.mubr.bf16.gmra.mrb[0].mxu0 %v832
      %v880 = vpop.f32.mrb[0].mxu0
      %v881 = vadd.f32 0.0, %v880
      %v882 = vpop.f32.mrb[0].mxu0
      %v883 = vpop.f32.mrb[0].mxu0
      %v884 = vadd.f32 0.0, %v883
      %v885 = vpop.f32.mrb[0].mxu0
      %886 = vmatprep.mubr.bf16.mxu0 0
      %887 = vmatmul.mubr.bf16.gmra.mrb[0].mxu0 %v835
      %v888 = vpop.f32.mrb[0].mxu0
      %v889 = vadd.f32 0.0, %v888
      %v890 = vpop.f32.mrb[0].mxu0
      %v891 = vpop.f32.mrb[0].mxu0
      %v892 = vadd.f32 0.0, %v891
      %v893 = vpop.f32.mrb[0].mxu0
      %894 = vmatprep.mubr.bf16.mxu0 0
      %895 = vmatmul.mubr.bf16.gmra.mrb[0].mxu0 %v838
      %v896 = vpop.f32.mrb[0].mxu0
      %v897 = vadd.f32 0.0, %v896
      %v898 = vpop.f32.mrb[0].mxu0
      %v899 = vpop.f32.mrb[0].mxu0
      %v900 = vadd.f32 0.0, %v899
      %v901 = vpop.f32.mrb[0].mxu0
      %902 = vmatprep.mubr.bf16.mxu0 0
      %903 = vmatmul.mubr.bf16.gmra.mrb[0].mxu0 %v841
      %v904 = vpop.f32.mrb[0].mxu0
      %v905 = vadd.f32 0.0, %v904
      %v906 = vpop.f32.mrb[0].mxu0
      %v907 = vpop.f32.mrb[0].mxu0
      %v908 = vadd.f32 0.0, %v907
      %v909 = vpop.f32.mrb[0].mxu0
      %910 = vmatprep.mubr.bf16.mxu0 0
      %911 = vmatmul.mubr.bf16.gmra.mrb[0].mxu0 %v844
      %v912 = vpop.f32.mrb[0].mxu0
      %v913 = vadd.f32 0.0, %v912
      %v914 = vpop.f32.mrb[0].mxu0
      %v915 = vpop.f32.mrb[0].mxu0
      %v916 = vadd.f32 0.0, %v915
      %v917 = vpop.f32.mrb[0].mxu0
      %918 = vdwg.mxu0
      %v919 = vadd.f32 %v769, %v881
      %v920 = vadd.f32 %v772, %v884
      %v921 = vadd.f32 %v777, %v889
      %v922 = vadd.f32 %v780, %v892
      %v923 = vadd.f32 %v785, %v897
      %v924 = vadd.f32 %v788, %v900
      %v925 = vadd.f32 %v793, %v905
      %v926 = vadd.f32 %v796, %v908
      %v927 = vadd.f32 %v801, %v913
      %v928 = vadd.f32 %v804, %v916
      %v929 = vld [vmem:[#allocation2 + $0xdc] sm:$0xff]
      %v930 = vld [vmem:[#allocation2 + $0xe4] sm:$0xff]
      %v931 = vld [vmem:[#allocation2 + $0xec] sm:$0xff]
      %v932 = vld [vmem:[#allocation2 + $0xf4] sm:$0xff]
      %v933 = vld [vmem:[#allocation2 + $0xfc] sm:$0xff]
      %v934 = vld [vmem:[#allocation2 + $0x104] sm:$0xff]
      %v935 = vld [vmem:[#allocation2 + $0x10c] sm:$0xff]
      %v936 = vld [vmem:[#allocation2 + $0x114] sm:$0xff]
      %v937 = vld [vmem:[#allocation2 + $0x11c] sm:$0xff]
      %v938 = vld [vmem:[#allocation2 + $0x124] sm:$0xff]
      %v939 = vpack.c.bf16 %v930, %v929
      %v940 = vpack.c.bf16 %v932, %v931
      %v941 = vpack.c.bf16 %v934, %v933
      %v942 = vpack.c.bf16 %v936, %v935
      %v943 = vpack.c.bf16 %v938, %v937
      %s944 = scalar_lea.vmem %s3, 24
      %v945 = vld [vmem:[%s944] sm:$0xf]
      %v946 = vld [vmem:[%s944 + $0x4] sm:$0xf]
      %v949 = vunpack.c.l.b16 %v945
      %v950 = vunpack.c.l.b16 %v946
      %v951 = vpack.c.b16 %v950, %v949
      %v954 = vsel %vm528, %v939, 0
      %v957 = vsel %vm528, %v940, 0
      %v960 = vsel %vm528, %v941, 0
      %v963 = vsel %vm528, %v942, 0
      %v966 = vsel %vm528, %v943, 0
      %968 = vmatprep.subr.bf16.mxu0 0
      %969 = vmatpush1.bf16.msra.mxu0 %v951
      %970 = vmatprep.subr.bf16.mxu0 0
      %971 = vmatpush1.bf16.msra.mxu0 0
      %972 = vmatprep.subr.bf16.mxu0 0
      %973 = vmatpush1.bf16.msra.mxu0 0
      %974 = vmatprep.subr.bf16.mxu0 0
      %975 = vmatpush1.bf16.msra.mxu0 0
      %976 = vmatprep.subr.bf16.mxu0 0
      %977 = vmatpush1.bf16.msra.mxu0 0
      %978 = vmatprep.subr.bf16.mxu0 0
      %979 = vmatpush1.bf16.msra.mxu0 0
      %980 = vmatprep.subr.bf16.mxu0 0
      %981 = vmatpush1.bf16.msra.mxu0 0
      %982 = vmatprep.subr.bf16.mxu0 0
      %983 = vmatpush1.bf16.msra.mxu0 0
      %984 = vmatprep.subr.bf16.mxu0 0
      %985 = vmatpush1.bf16.msra.mxu0 0
      %986 = vmatprep.subr.bf16.mxu0 0
      %987 = vmatpush1.bf16.msra.mxu0 0
      %988 = vmatprep.subr.bf16.mxu0 0
      %989 = vmatpush1.bf16.msra.mxu0 0
      %990 = vmatprep.subr.bf16.mxu0 0
      %991 = vmatpush1.bf16.msra.mxu0 0
      %992 = vmatprep.subr.bf16.mxu0 0
      %993 = vmatpush1.bf16.msra.mxu0 0
      %994 = vmatprep.subr.bf16.mxu0 0
      %995 = vmatpush1.bf16.msra.mxu0 0
      %996 = vmatprep.subr.bf16.mxu0 0
      %997 = vmatpush1.bf16.msra.mxu0 0
      %998 = vmatprep.subr.bf16.mxu0 0
      %999 = vmatpush1.bf16.msra.mxu0 0
      %1000 = vmatprep.mubr.bf16.mxu0 0
      %1001 = vmatmul.mubr.bf16.gmra.mrb[0].mxu0 %v954
      %v1002 = vpop.f32.mrb[0].mxu0
      %v1003 = vadd.f32 0.0, %v1002
      %v1004 = vpop.f32.mrb[0].mxu0
      %v1005 = vpop.f32.mrb[0].mxu0
      %v1006 = vadd.f32 0.0, %v1005
      %v1007 = vpop.f32.mrb[0].mxu0
      %1008 = vmatprep.mubr.bf16.mxu0 0
      %1009 = vmatmul.mubr.bf16.gmra.mrb[0].mxu0 %v957
      %v1010 = vpop.f32.mrb[0].mxu0
      %v1011 = vadd.f32 0.0, %v1010
      %v1012 = vpop.f32.mrb[0].mxu0
      %v1013 = vpop.f32.mrb[0].mxu0
      %v1014 = vadd.f32 0.0, %v1013
      %v1015 = vpop.f32.mrb[0].mxu0
      %1016 = vmatprep.mubr.bf16.mxu0 0
      %1017 = vmatmul.mubr.bf16.gmra.mrb[0].mxu0 %v960
      %v1018 = vpop.f32.mrb[0].mxu0
      %v1019 = vadd.f32 0.0, %v1018
      %v1020 = vpop.f32.mrb[0].mxu0
      %v1021 = vpop.f32.mrb[0].mxu0
      %v1022 = vadd.f32 0.0, %v1021
      %v1023 = vpop.f32.mrb[0].mxu0
      %1024 = vmatprep.mubr.bf16.mxu0 0
      %1025 = vmatmul.mubr.bf16.gmra.mrb[0].mxu0 %v963
      %v1026 = vpop.f32.mrb[0].mxu0
      %v1027 = vadd.f32 0.0, %v1026
      %v1028 = vpop.f32.mrb[0].mxu0
      %v1029 = vpop.f32.mrb[0].mxu0
      %v1030 = vadd.f32 0.0, %v1029
      %v1031 = vpop.f32.mrb[0].mxu0
      %1032 = vmatprep.mubr.bf16.mxu0 0
      %1033 = vmatmul.mubr.bf16.gmra.mrb[0].mxu0 %v966
      %v1034 = vpop.f32.mrb[0].mxu0
      %v1035 = vadd.f32 0.0, %v1034
      %v1036 = vpop.f32.mrb[0].mxu0
      %v1037 = vpop.f32.mrb[0].mxu0
      %v1038 = vadd.f32 0.0, %v1037
      %v1039 = vpop.f32.mrb[0].mxu0
      %1040 = vdwg.mxu0
      %v1041 = vadd.f32 %v919, %v1003
      %v1042 = vadd.f32 %v920, %v1006
      %v1043 = vadd.f32 %v921, %v1011
      %v1044 = vadd.f32 %v922, %v1014
      %v1045 = vadd.f32 %v923, %v1019
      %v1046 = vadd.f32 %v924, %v1022
      %v1047 = vadd.f32 %v925, %v1027
      %v1048 = vadd.f32 %v926, %v1030
      %v1049 = vadd.f32 %v927, %v1035
      %v1050 = vadd.f32 %v928, %v1038
      %v1051 = vld [vmem:[#allocation2 + $0x14a] sm:$0xff]
      %v1052 = vld [vmem:[#allocation2 + $0x152] sm:$0xff]
      %v1053 = vld [vmem:[#allocation2 + $0x15a] sm:$0xff]
      %v1054 = vld [vmem:[#allocation2 + $0x162] sm:$0xff]
      %v1055 = vld [vmem:[#allocation2 + $0x16a] sm:$0xff]
      %v1056 = vld [vmem:[#allocation2 + $0x172] sm:$0xff]
      %v1057 = vld [vmem:[#allocation2 + $0x17a] sm:$0xff]
      %v1058 = vld [vmem:[#allocation2 + $0x182] sm:$0xff]
      %v1059 = vld [vmem:[#allocation2 + $0x18a] sm:$0xff]
      %v1060 = vld [vmem:[#allocation2 + $0x192] sm:$0xff]
      %v1061 = vpack.c.bf16 %v1052, %v1051
      %v1062 = vpack.c.bf16 %v1054, %v1053
      %v1063 = vpack.c.bf16 %v1056, %v1055
      %v1064 = vpack.c.bf16 %v1058, %v1057
      %v1065 = vpack.c.bf16 %v1060, %v1059
      %s1066 = scalar_lea.vmem %s3, 32
      %v1067 = vld [vmem:[%s1066] sm:$0xf]
      %v1068 = vld [vmem:[%s1066 + $0x4] sm:$0xf]
      %v1071 = vunpack.c.l.b16 %v1067
      %v1072 = vunpack.c.l.b16 %v1068
      %v1073 = vpack.c.b16 %v1072, %v1071
      %v1076 = vsel %vm528, %v1061, 0
      %v1079 = vsel %vm528, %v1062, 0
      %v1082 = vsel %vm528, %v1063, 0
      %v1085 = vsel %vm528, %v1064, 0
      %v1088 = vsel %vm528, %v1065, 0
      %1090 = vmatprep.subr.bf16.mxu0 0
      %1091 = vmatpush1.bf16.msra.mxu0 %v1073
      %1092 = vmatprep.subr.bf16.mxu0 0
      %1093 = vmatpush1.bf16.msra.mxu0 0
      %1094 = vmatprep.subr.bf16.mxu0 0
      %1095 = vmatpush1.bf16.msra.mxu0 0
      %1096 = vmatprep.subr.bf16.mxu0 0
      %1097 = vmatpush1.bf16.msra.mxu0 0
      %1098 = vmatprep.subr.bf16.mxu0 0
      %1099 = vmatpush1.bf16.msra.mxu0 0
      %1100 = vmatprep.subr.bf16.mxu0 0
      %1101 = vmatpush1.bf16.msra.mxu0 0
      %1102 = vmatprep.subr.bf16.mxu0 0
      %1103 = vmatpush1.bf16.msra.mxu0 0
      %1104 = vmatprep.subr.bf16.mxu0 0
      %1105 = vmatpush1.bf16.msra.mxu0 0
      %1106 = vmatprep.subr.bf16.mxu0 0
      %1107 = vmatpush1.bf16.msra.mxu0 0
      %1108 = vmatprep.subr.bf16.mxu0 0
      %1109 = vmatpush1.bf16.msra.mxu0 0
      %1110 = vmatprep.subr.bf16.mxu0 0
      %1111 = vmatpush1.bf16.msra.mxu0 0
      %1112 = vmatprep.subr.bf16.mxu0 0
      %1113 = vmatpush1.bf16.msra.mxu0 0
      %1114 = vmatprep.subr.bf16.mxu0 0
      %1115 = vmatpush1.bf16.msra.mxu0 0
      %1116 = vmatprep.subr.bf16.mxu0 0
      %1117 = vmatpush1.bf16.msra.mxu0 0
      %1118 = vmatprep.subr.bf16.mxu0 0
      %1119 = vmatpush1.bf16.msra.mxu0 0
      %1120 = vmatprep.subr.bf16.mxu0 0
      %1121 = vmatpush1.bf16.msra.mxu0 0
      %1122 = vmatprep.mubr.bf16.mxu0 0
      %1123 = vmatmul.mubr.bf16.gmra.mrb[0].mxu0 %v1076
      %v1124 = vpop.f32.mrb[0].mxu0
      %v1125 = vadd.f32 0.0, %v1124
      %v1126 = vpop.f32.mrb[0].mxu0
      %v1127 = vpop.f32.mrb[0].mxu0
      %v1128 = vadd.f32 0.0, %v1127
      %v1129 = vpop.f32.mrb[0].mxu0
      %1130 = vmatprep.mubr.bf16.mxu0 0
      %1131 = vmatmul.mubr.bf16.gmra.mrb[0].mxu0 %v1079
      %v1132 = vpop.f32.mrb[0].mxu0
      %v1133 = vadd.f32 0.0, %v1132
      %v1134 = vpop.f32.mrb[0].mxu0
      %v1135 = vpop.f32.mrb[0].mxu0
      %v1136 = vadd.f32 0.0, %v1135
      %v1137 = vpop.f32.mrb[0].mxu0
      %1138 = vmatprep.mubr.bf16.mxu0 0
      %1139 = vmatmul.mubr.bf16.gmra.mrb[0].mxu0 %v1082
      %v1140 = vpop.f32.mrb[0].mxu0
      %v1141 = vadd.f32 0.0, %v1140
      %v1142 = vpop.f32.mrb[0].mxu0
      %v1143 = vpop.f32.mrb[0].mxu0
      %v1144 = vadd.f32 0.0, %v1143
      %v1145 = vpop.f32.mrb[0].mxu0
      %1146 = vmatprep.mubr.bf16.mxu0 0
      %1147 = vmatmul.mubr.bf16.gmra.mrb[0].mxu0 %v1085
      %v1148 = vpop.f32.mrb[0].mxu0
      %v1149 = vadd.f32 0.0, %v1148
      %v1150 = vpop.f32.mrb[0].mxu0
      %v1151 = vpop.f32.mrb[0].mxu0
      %v1152 = vadd.f32 0.0, %v1151
      %v1153 = vpop.f32.mrb[0].mxu0
      %1154 = vmatprep.mubr.bf16.mxu0 0
      %1155 = vmatmul.mubr.bf16.gmra.mrb[0].mxu0 %v1088
      %v1156 = vpop.f32.mrb[0].mxu0
      %v1157 = vadd.f32 0.0, %v1156
      %v1158 = vpop.f32.mrb[0].mxu0
      %v1159 = vpop.f32.mrb[0].mxu0
      %v1160 = vadd.f32 0.0, %v1159
      %v1161 = vpop.f32.mrb[0].mxu0
      %1162 = vdwg.mxu0
      %v1163 = vadd.f32 %v1041, %v1125
      %v1164 = vadd.f32 %v1042, %v1128
      %v1165 = vadd.f32 %v1043, %v1133
      %v1166 = vadd.f32 %v1044, %v1136
      %v1167 = vadd.f32 %v1045, %v1141
      %v1168 = vadd.f32 %v1046, %v1144
      %v1169 = vadd.f32 %v1047, %v1149
      %v1170 = vadd.f32 %v1048, %v1152
      %v1171 = vadd.f32 %v1049, %v1157
      %v1172 = vadd.f32 %v1050, %v1160
      %v1173 = vld [vmem:[#allocation2 + $0xdd] sm:$0xff]
      %v1174 = vld [vmem:[#allocation2 + $0xe5] sm:$0xff]
      %v1175 = vld [vmem:[#allocation2 + $0xed] sm:$0xff]
      %v1176 = vld [vmem:[#allocation2 + $0xf5] sm:$0xff]
      %v1177 = vld [vmem:[#allocation2 + $0xfd] sm:$0xff]
      %v1178 = vld [vmem:[#allocation2 + $0x105] sm:$0xff]
      %v1179 = vld [vmem:[#allocation2 + $0x10d] sm:$0xff]
      %v1180 = vld [vmem:[#allocation2 + $0x115] sm:$0xff]
      %v1181 = vld [vmem:[#allocation2 + $0x11d] sm:$0xff]
      %v1182 = vld [vmem:[#allocation2 + $0x125] sm:$0xff]
      %v1183 = vpack.c.bf16 %v1174, %v1173
      %v1184 = vpack.c.bf16 %v1176, %v1175
      %v1185 = vpack.c.bf16 %v1178, %v1177
      %v1186 = vpack.c.bf16 %v1180, %v1179
      %v1187 = vpack.c.bf16 %v1182, %v1181
      %s1188 = scalar_lea.vmem %s3, 40
      %v1189 = vld [vmem:[%s1188] sm:$0xf]
      %v1190 = vld [vmem:[%s1188 + $0x4] sm:$0xf]
      %v1193 = vunpack.c.l.b16 %v1189
      %v1194 = vunpack.c.l.b16 %v1190
      %v1195 = vpack.c.b16 %v1194, %v1193
      %v1198 = vsel %vm528, %v1183, 0
      %v1201 = vsel %vm528, %v1184, 0
      %v1204 = vsel %vm528, %v1185, 0
      %v1207 = vsel %vm528, %v1186, 0
      %v1210 = vsel %vm528, %v1187, 0
      %1212 = vmatprep.subr.bf16.mxu0 0
      %1213 = vmatpush1.bf16.msra.mxu0 %v1195
      %1214 = vmatprep.subr.bf16.mxu0 0
      %1215 = vmatpush1.bf16.msra.mxu0 0
      %1216 = vmatprep.subr.bf16.mxu0 0
      %1217 = vmatpush1.bf16.msra.mxu0 0
      %1218 = vmatprep.subr.bf16.mxu0 0
      %1219 = vmatpush1.bf16.msra.mxu0 0
      %1220 = vmatprep.subr.bf16.mxu0 0
      %1221 = vmatpush1.bf16.msra.mxu0 0
      %1222 = vmatprep.subr.bf16.mxu0 0
      %1223 = vmatpush1.bf16.msra.mxu0 0
      %1224 = vmatprep.subr.bf16.mxu0 0
      %1225 = vmatpush1.bf16.msra.mxu0 0
      %1226 = vmatprep.subr.bf16.mxu0 0
      %1227 = vmatpush1.bf16.msra.mxu0 0
      %1228 = vmatprep.subr.bf16.mxu0 0
      %1229 = vmatpush1.bf16.msra.mxu0 0
      %1230 = vmatprep.subr.bf16.mxu0 0
      %1231 = vmatpush1.bf16.msra.mxu0 0
      %1232 = vmatprep.subr.bf16.mxu0 0
      %1233 = vmatpush1.bf16.msra.mxu0 0
      %1234 = vmatprep.subr.bf16.mxu0 0
      %1235 = vmatpush1.bf16.msra.mxu0 0
      %1236 = vmatprep.subr.bf16.mxu0 0
      %1237 = vmatpush1.bf16.msra.mxu0 0
      %1238 = vmatprep.subr.bf16.mxu0 0
      %1239 = vmatpush1.bf16.msra.mxu0 0
      %1240 = vmatprep.subr.bf16.mxu0 0
      %1241 = vmatpush1.bf16.msra.mxu0 0
      %1242 = vmatprep.subr.bf16.mxu0 0
      %1243 = vmatpush1.bf16.msra.mxu0 0
      %1244 = vmatprep.mubr.bf16.mxu0 0
      %1245 = vmatmul.mubr.bf16.gmra.mrb[0].mxu0 %v1198
      %v1246 = vpop.f32.mrb[0].mxu0
      %v1247 = vadd.f32 0.0, %v1246
      %v1248 = vpop.f32.mrb[0].mxu0
      %v1249 = vpop.f32.mrb[0].mxu0
      %v1250 = vadd.f32 0.0, %v1249
      %v1251 = vpop.f32.mrb[0].mxu0
      %1252 = vmatprep.mubr.bf16.mxu0 0
      %1253 = vmatmul.mubr.bf16.gmra.mrb[0].mxu0 %v1201
      %v1254 = vpop.f32.mrb[0].mxu0
      %v1255 = vadd.f32 0.0, %v1254
      %v1256 = vpop.f32.mrb[0].mxu0
      %v1257 = vpop.f32.mrb[0].mxu0
      %v1258 = vadd.f32 0.0, %v1257
      %v1259 = vpop.f32.mrb[0].mxu0
      %1260 = vmatprep.mubr.bf16.mxu0 0
      %1261 = vmatmul.mubr.bf16.gmra.mrb[0].mxu0 %v1204
      %v1262 = vpop.f32.mrb[0].mxu0
      %v1263 = vadd.f32 0.0, %v1262
      %v1264 = vpop.f32.mrb[0].mxu0
      %v1265 = vpop.f32.mrb[0].mxu0
      %v1266 = vadd.f32 0.0, %v1265
      %v1267 = vpop.f32.mrb[0].mxu0
      %1268 = vmatprep.mubr.bf16.mxu0 0
      %1269 = vmatmul.mubr.bf16.gmra.mrb[0].mxu0 %v1207
      %v1270 = vpop.f32.mrb[0].mxu0
      %v1271 = vadd.f32 0.0, %v1270
      %v1272 = vpop.f32.mrb[0].mxu0
      %v1273 = vpop.f32.mrb[0].mxu0
      %v1274 = vadd.f32 0.0, %v1273
      %v1275 = vpop.f32.mrb[0].mxu0
      %1276 = vmatprep.mubr.bf16.mxu0 0
      %1277 = vmatmul.mubr.bf16.gmra.mrb[0].mxu0 %v1210
      %v1278 = vpop.f32.mrb[0].mxu0
      %v1279 = vadd.f32 0.0, %v1278
      %v1280 = vpop.f32.mrb[0].mxu0
      %v1281 = vpop.f32.mrb[0].mxu0
      %v1282 = vadd.f32 0.0, %v1281
      %v1283 = vpop.f32.mrb[0].mxu0
      %1284 = vdwg.mxu0
      %v1285 = vadd.f32 %v1163, %v1247
      %v1286 = vadd.f32 %v1164, %v1250
      %v1287 = vadd.f32 %v1165, %v1255
      %v1288 = vadd.f32 %v1166, %v1258
      %v1289 = vadd.f32 %v1167, %v1263
      %v1290 = vadd.f32 %v1168, %v1266
      %v1291 = vadd.f32 %v1169, %v1271
      %v1292 = vadd.f32 %v1170, %v1274
      %v1293 = vadd.f32 %v1171, %v1279
      %v1294 = vadd.f32 %v1172, %v1282
      %v1295 = vld [vmem:[#allocation2 + $0xa] sm:$0xff]
      %v1296 = vld [vmem:[#allocation2 + $0x12] sm:$0xff]
      %v1297 = vld [vmem:[#allocation2 + $0x1a] sm:$0xff]
      %v1298 = vld [vmem:[#allocation2 + $0x22] sm:$0xff]
      %v1299 = vld [vmem:[#allocation2 + $0x2a] sm:$0xff]
      %v1300 = vld [vmem:[#allocation2 + $0x32] sm:$0xff]
      %v1301 = vld [vmem:[#allocation2 + $0x3a] sm:$0xff]
      %v1302 = vld [vmem:[#allocation2 + $0x42] sm:$0xff]
      %v1303 = vld [vmem:[#allocation2 + $0x4a] sm:$0xff]
      %v1304 = vld [vmem:[#allocation2 + $0x52] sm:$0xff]
      %v1305 = vpack.c.bf16 %v1296, %v1295
      %v1306 = vpack.c.bf16 %v1298, %v1297
      %v1307 = vpack.c.bf16 %v1300, %v1299
      %v1308 = vpack.c.bf16 %v1302, %v1301
      %v1309 = vpack.c.bf16 %v1304, %v1303
      %s1310 = scalar_lea.vmem %s3, 48
      %v1311 = vld [vmem:[%s1310] sm:$0xf]
      %v1312 = vld [vmem:[%s1310 + $0x4] sm:$0xf]
      %v1315 = vunpack.c.l.b16 %v1311
      %v1316 = vunpack.c.l.b16 %v1312
      %v1317 = vpack.c.b16 %v1316, %v1315
      %v1320 = vsel %vm528, %v1305, 0
      %v1323 = vsel %vm528, %v1306, 0
      %v1326 = vsel %vm528, %v1307, 0
      %v1329 = vsel %vm528, %v1308, 0
      %v1332 = vsel %vm528, %v1309, 0
      %1334 = vmatprep.subr.bf16.mxu0 0
      %1335 = vmatpush1.bf16.msra.mxu0 %v1317
      %1336 = vmatprep.subr.bf16.mxu0 0
      %1337 = vmatpush1.bf16.msra.mxu0 0
      %1338 = vmatprep.subr.bf16.mxu0 0
      %1339 = vmatpush1.bf16.msra.mxu0 0
      %1340 = vmatprep.subr.bf16.mxu0 0
      %1341 = vmatpush1.bf16.msra.mxu0 0
      %1342 = vmatprep.subr.bf16.mxu0 0
      %1343 = vmatpush1.bf16.msra.mxu0 0
      %1344 = vmatprep.subr.bf16.mxu0 0
      %1345 = vmatpush1.bf16.msra.mxu0 0
      %1346 = vmatprep.subr.bf16.mxu0 0
      %1347 = vmatpush1.bf16.msra.mxu0 0
      %1348 = vmatprep.subr.bf16.mxu0 0
      %1349 = vmatpush1.bf16.msra.mxu0 0
      %1350 = vmatprep.subr.bf16.mxu0 0
      %1351 = vmatpush1.bf16.msra.mxu0 0
      %1352 = vmatprep.subr.bf16.mxu0 0
      %1353 = vmatpush1.bf16.msra.mxu0 0
      %1354 = vmatprep.subr.bf16.mxu0 0
      %1355 = vmatpush1.bf16.msra.mxu0 0
      %1356 = vmatprep.subr.bf16.mxu0 0
      %1357 = vmatpush1.bf16.msra.mxu0 0
      %1358 = vmatprep.subr.bf16.mxu0 0
      %1359 = vmatpush1.bf16.msra.mxu0 0
      %1360 = vmatprep.subr.bf16.mxu0 0
      %1361 = vmatpush1.bf16.msra.mxu0 0
      %1362 = vmatprep.subr.bf16.mxu0 0
      %1363 = vmatpush1.bf16.msra.mxu0 0
      %1364 = vmatprep.subr.bf16.mxu0 0
      %1365 = vmatpush1.bf16.msra.mxu0 0
      %1366 = vmatprep.mubr.bf16.mxu0 0
      %1367 = vmatmul.mubr.bf16.gmra.mrb[0].mxu0 %v1320
      %v1368 = vpop.f32.mrb[0].mxu0
      %v1369 = vadd.f32 0.0, %v1368
      %v1370 = vpop.f32.mrb[0].mxu0
      %v1371 = vpop.f32.mrb[0].mxu0
      %v1372 = vadd.f32 0.0, %v1371
      %v1373 = vpop.f32.mrb[0].mxu0
      %1374 = vmatprep.mubr.bf16.mxu0 0
      %1375 = vmatmul.mubr.bf16.gmra.mrb[0].mxu0 %v1323
      %v1376 = vpop.f32.mrb[0].mxu0
      %v1377 = vadd.f32 0.0, %v1376
      %v1378 = vpop.f32.mrb[0].mxu0
      %v1379 = vpop.f32.mrb[0].mxu0
      %v1380 = vadd.f32 0.0, %v1379
      %v1381 = vpop.f32.mrb[0].mxu0
      %1382 = vmatprep.mubr.bf16.mxu0 0
      %1383 = vmatmul.mubr.bf16.gmra.mrb[0].mxu0 %v1326
      %v1384 = vpop.f32.mrb[0].mxu0
      %v1385 = vadd.f32 0.0, %v1384
      %v1386 = vpop.f32.mrb[0].mxu0
      %v1387 = vpop.f32.mrb[0].mxu0
      %v1388 = vadd.f32 0.0, %v1387
      %v1389 = vpop.f32.mrb[0].mxu0
      %1390 = vmatprep.mubr.bf16.mxu0 0
      %1391 = vmatmul.mubr.bf16.gmra.mrb[0].mxu0 %v1329
      %v1392 = vpop.f32.mrb[0].mxu0
      %v1393 = vadd.f32 0.0, %v1392
      %v1394 = vpop.f32.mrb[0].mxu0
      %v1395 = vpop.f32.mrb[0].mxu0
      %v1396 = vadd.f32 0.0, %v1395
      %v1397 = vpop.f32.mrb[0].mxu0
      %1398 = vmatprep.mubr.bf16.mxu0 0
      %1399 = vmatmul.mubr.bf16.gmra.mrb[0].mxu0 %v1332
      %v1400 = vpop.f32.mrb[0].mxu0
      %v1401 = vadd.f32 0.0, %v1400
      %v1402 = vpop.f32.mrb[0].mxu0
      %v1403 = vpop.f32.mrb[0].mxu0
      %v1404 = vadd.f32 0.0, %v1403
      %v1405 = vpop.f32.mrb[0].mxu0
      %1406 = vdwg.mxu0
      %v1407 = vadd.f32 %v1285, %v1369
      %v1408 = vadd.f32 %v1286, %v1372
      %v1409 = vadd.f32 %v1287, %v1377
      %v1410 = vadd.f32 %v1288, %v1380
      %v1411 = vadd.f32 %v1289, %v1385
      %v1412 = vadd.f32 %v1290, %v1388
      %v1413 = vadd.f32 %v1291, %v1393
      %v1414 = vadd.f32 %v1292, %v1396
      %v1415 = vadd.f32 %v1293, %v1401
      %v1416 = vadd.f32 %v1294, %v1404
      %v1417 = vld [vmem:[#allocation2 + $0x78] sm:$0xff]
      %v1418 = vld [vmem:[#allocation2 + $0x80] sm:$0xff]
      %v1419 = vld [vmem:[#allocation2 + $0x88] sm:$0xff]
      %v1420 = vld [vmem:[#allocation2 + $0x90] sm:$0xff]
      %v1421 = vld [vmem:[#allocation2 + $0x98] sm:$0xff]
      %v1422 = vld [vmem:[#allocation2 + $0xa0] sm:$0xff]
      %v1423 = vld [vmem:[#allocation2 + $0xa8] sm:$0xff]
      %v1424 = vld [vmem:[#allocation2 + $0xb0] sm:$0xff]
      %v1425 = vld [vmem:[#allocation2 + $0xb8] sm:$0xff]
      %v1426 = vld [vmem:[#allocation2 + $0xc0] sm:$0xff]
      %v1427 = vpack.c.bf16 %v1418, %v1417
      %v1428 = vpack.c.bf16 %v1420, %v1419
      %v1429 = vpack.c.bf16 %v1422, %v1421
      %v1430 = vpack.c.bf16 %v1424, %v1423
      %v1431 = vpack.c.bf16 %v1426, %v1425
      %s1432 = scalar_lea.vmem %s3, 56
      %v1433 = vld [vmem:[%s1432] sm:$0xf]
      %v1434 = vld [vmem:[%s1432 + $0x4] sm:$0xf]
      %v1437 = vunpack.c.l.b16 %v1433
      %v1438 = vunpack.c.l.b16 %v1434
      %v1439 = vpack.c.b16 %v1438, %v1437
      %v1442 = vsel %vm528, %v1427, 0
      %v1445 = vsel %vm528, %v1428, 0
      %v1448 = vsel %vm528, %v1429, 0
      %v1451 = vsel %vm528, %v1430, 0
      %v1454 = vsel %vm528, %v1431, 0
      %1456 = vmatprep.subr.bf16.mxu0 0
      %1457 = vmatpush1.bf16.msra.mxu0 %v1439
      %1458 = vmatprep.subr.bf16.mxu0 0
      %1459 = vmatpush1.bf16.msra.mxu0 0
      %1460 = vmatprep.subr.bf16.mxu0 0
      %1461 = vmatpush1.bf16.msra.mxu0 0
      %1462 = vmatprep.subr.bf16.mxu0 0
      %1463 = vmatpush1.bf16.msra.mxu0 0
      %1464 = vmatprep.subr.bf16.mxu0 0
      %1465 = vmatpush1.bf16.msra.mxu0 0
      %1466 = vmatprep.subr.bf16.mxu0 0
      %1467 = vmatpush1.bf16.msra.mxu0 0
      %1468 = vmatprep.subr.bf16.mxu0 0
      %1469 = vmatpush1.bf16.msra.mxu0 0
      %1470 = vmatprep.subr.bf16.mxu0 0
      %1471 = vmatpush1.bf16.msra.mxu0 0
      %1472 = vmatprep.subr.bf16.mxu0 0
      %1473 = vmatpush1.bf16.msra.mxu0 0
      %1474 = vmatprep.subr.bf16.mxu0 0
      %1475 = vmatpush1.bf16.msra.mxu0 0
      %1476 = vmatprep.subr.bf16.mxu0 0
      %1477 = vmatpush1.bf16.msra.mxu0 0
      %1478 = vmatprep.subr.bf16.mxu0 0
      %1479 = vmatpush1.bf16.msra.mxu0 0
      %1480 = vmatprep.subr.bf16.mxu0 0
      %1481 = vmatpush1.bf16.msra.mxu0 0
      %1482 = vmatprep.subr.bf16.mxu0 0
      %1483 = vmatpush1.bf16.msra.mxu0 0
      %1484 = vmatprep.subr.bf16.mxu0 0
      %1485 = vmatpush1.bf16.msra.mxu0 0
      %1486 = vmatprep.subr.bf16.mxu0 0
      %1487 = vmatpush1.bf16.msra.mxu0 0
      %1488 = vmatprep.mubr.bf16.mxu0 0
      %1489 = vmatmul.mubr.bf16.gmra.mrb[0].mxu0 %v1442
      %v1490 = vpop.f32.mrb[0].mxu0
      %v1491 = vadd.f32 0.0, %v1490
      %v1492 = vpop.f32.mrb[0].mxu0
      %v1493 = vpop.f32.mrb[0].mxu0
      %v1494 = vadd.f32 0.0, %v1493
      %v1495 = vpop.f32.mrb[0].mxu0
      %1496 = vmatprep.mubr.bf16.mxu0 0
      %1497 = vmatmul.mubr.bf16.gmra.mrb[0].mxu0 %v1445
      %v1498 = vpop.f32.mrb[0].mxu0
      %v1499 = vadd.f32 0.0, %v1498
      %v1500 = vpop.f32.mrb[0].mxu0
      %v1501 = vpop.f32.mrb[0].mxu0
      %v1502 = vadd.f32 0.0, %v1501
      %v1503 = vpop.f32.mrb[0].mxu0
      %1504 = vmatprep.mubr.bf16.mxu0 0
      %1505 = vmatmul.mubr.bf16.gmra.mrb[0].mxu0 %v1448
      %v1506 = vpop.f32.mrb[0].mxu0
      %v1507 = vadd.f32 0.0, %v1506
      %v1508 = vpop.f32.mrb[0].mxu0
      %v1509 = vpop.f32.mrb[0].mxu0
      %v1510 = vadd.f32 0.0, %v1509
      %v1511 = vpop.f32.mrb[0].mxu0
      %1512 = vmatprep.mubr.bf16.mxu0 0
      %1513 = vmatmul.mubr.bf16.gmra.mrb[0].mxu0 %v1451
      %v1514 = vpop.f32.mrb[0].mxu0
      %v1515 = vadd.f32 0.0, %v1514
      %v1516 = vpop.f32.mrb[0].mxu0
      %v1517 = vpop.f32.mrb[0].mxu0
      %v1518 = vadd.f32 0.0, %v1517
      %v1519 = vpop.f32.mrb[0].mxu0
      %1520 = vmatprep.mubr.bf16.mxu0 0
      %1521 = vmatmul.mubr.bf16.gmra.mrb[0].mxu0 %v1454
      %v1522 = vpop.f32.mrb[0].mxu0
      %v1523 = vadd.f32 0.0, %v1522
      %v1524 = vpop.f32.mrb[0].mxu0
      %v1525 = vpop.f32.mrb[0].mxu0
      %v1526 = vadd.f32 0.0, %v1525
      %v1527 = vpop.f32.mrb[0].mxu0
      %1528 = vdwg.mxu0
      %v1529 = vadd.f32 %v1407, %v1491
      %v1530 = vadd.f32 %v1408, %v1494
      %v1531 = vadd.f32 %v1409, %v1499
      %v1532 = vadd.f32 %v1410, %v1502
      %v1533 = vadd.f32 %v1411, %v1507
      %v1534 = vadd.f32 %v1412, %v1510
      %v1535 = vadd.f32 %v1413, %v1515
      %v1536 = vadd.f32 %v1414, %v1518
      %v1537 = vadd.f32 %v1415, %v1523
      %v1538 = vadd.f32 %v1416, %v1526
      %v1539 = vld [vmem:[#allocation2 + $0xb] sm:$0xff]
      %v1540 = vld [vmem:[#allocation2 + $0x13] sm:$0xff]
      %v1541 = vld [vmem:[#allocation2 + $0x1b] sm:$0xff]
      %v1542 = vld [vmem:[#allocation2 + $0x23] sm:$0xff]
      %v1543 = vld [vmem:[#allocation2 + $0x2b] sm:$0xff]
      %v1544 = vld [vmem:[#allocation2 + $0x33] sm:$0xff]
      %v1545 = vld [vmem:[#allocation2 + $0x3b] sm:$0xff]
      %v1546 = vld [vmem:[#allocation2 + $0x43] sm:$0xff]
      %v1547 = vld [vmem:[#allocation2 + $0x4b] sm:$0xff]
      %v1548 = vld [vmem:[#allocation2 + $0x53] sm:$0xff]
      %v1549 = vpack.c.bf16 %v1540, %v1539
      %v1550 = vpack.c.bf16 %v1542, %v1541
      %v1551 = vpack.c.bf16 %v1544, %v1543
      %v1552 = vpack.c.bf16 %v1546, %v1545
      %v1553 = vpack.c.bf16 %v1548, %v1547
      %s1554 = scalar_lea.vmem %s3, 64
      %v1555 = vld [vmem:[%s1554] sm:$0xf]
      %v1556 = vld [vmem:[%s1554 + $0x4] sm:$0xf]
      %v1559 = vunpack.c.l.b16 %v1555
      %v1560 = vunpack.c.l.b16 %v1556
      %v1561 = vpack.c.b16 %v1560, %v1559
      %v1564 = vsel %vm528, %v1549, 0
      %v1567 = vsel %vm528, %v1550, 0
      %v1570 = vsel %vm528, %v1551, 0
      %v1573 = vsel %vm528, %v1552, 0
      %v1576 = vsel %vm528, %v1553, 0
      %1578 = vmatprep.subr.bf16.mxu0 0
      %1579 = vmatpush1.bf16.msra.mxu0 %v1561
      %1580 = vmatprep.subr.bf16.mxu0 0
      %1581 = vmatpush1.bf16.msra.mxu0 0
      %1582 = vmatprep.subr.bf16.mxu0 0
      %1583 = vmatpush1.bf16.msra.mxu0 0
      %1584 = vmatprep.subr.bf16.mxu0 0
      %1585 = vmatpush1.bf16.msra.mxu0 0
      %1586 = vmatprep.subr.bf16.mxu0 0
      %1587 = vmatpush1.bf16.msra.mxu0 0
      %1588 = vmatprep.subr.bf16.mxu0 0
      %1589 = vmatpush1.bf16.msra.mxu0 0
      %1590 = vmatprep.subr.bf16.mxu0 0
      %1591 = vmatpush1.bf16.msra.mxu0 0
      %1592 = vmatprep.subr.bf16.mxu0 0
      %1593 = vmatpush1.bf16.msra.mxu0 0
      %1594 = vmatprep.subr.bf16.mxu0 0
      %1595 = vmatpush1.bf16.msra.mxu0 0
      %1596 = vmatprep.subr.bf16.mxu0 0
      %1597 = vmatpush1.bf16.msra.mxu0 0
      %1598 = vmatprep.subr.bf16.mxu0 0
      %1599 = vmatpush1.bf16.msra.mxu0 0
      %1600 = vmatprep.subr.bf16.mxu0 0
      %1601 = vmatpush1.bf16.msra.mxu0 0
      %1602 = vmatprep.subr.bf16.mxu0 0
      %1603 = vmatpush1.bf16.msra.mxu0 0
      %1604 = vmatprep.subr.bf16.mxu0 0
      %1605 = vmatpush1.bf16.msra.mxu0 0
      %1606 = vmatprep.subr.bf16.mxu0 0
      %1607 = vmatpush1.bf16.msra.mxu0 0
      %1608 = vmatprep.subr.bf16.mxu0 0
      %1609 = vmatpush1.bf16.msra.mxu0 0
      %1610 = vmatprep.mubr.bf16.mxu0 0
      %1611 = vmatmul.mubr.bf16.gmra.mrb[0].mxu0 %v1564
      %v1612 = vpop.f32.mrb[0].mxu0
      %v1613 = vadd.f32 0.0, %v1612
      %v1614 = vpop.f32.mrb[0].mxu0
      %v1615 = vpop.f32.mrb[0].mxu0
      %v1616 = vadd.f32 0.0, %v1615
      %v1617 = vpop.f32.mrb[0].mxu0
      %1618 = vmatprep.mubr.bf16.mxu0 0
      %1619 = vmatmul.mubr.bf16.gmra.mrb[0].mxu0 %v1567
      %v1620 = vpop.f32.mrb[0].mxu0
      %v1621 = vadd.f32 0.0, %v1620
      %v1622 = vpop.f32.mrb[0].mxu0
      %v1623 = vpop.f32.mrb[0].mxu0
      %v1624 = vadd.f32 0.0, %v1623
      %v1625 = vpop.f32.mrb[0].mxu0
      %1626 = vmatprep.mubr.bf16.mxu0 0
      %1627 = vmatmul.mubr.bf16.gmra.mrb[0].mxu0 %v1570
      %v1628 = vpop.f32.mrb[0].mxu0
      %v1629 = vadd.f32 0.0, %v1628
      %v1630 = vpop.f32.mrb[0].mxu0
      %v1631 = vpop.f32.mrb[0].mxu0
      %v1632 = vadd.f32 0.0, %v1631
      %v1633 = vpop.f32.mrb[0].mxu0
      %1634 = vmatprep.mubr.bf16.mxu0 0
      %1635 = vmatmul.mubr.bf16.gmra.mrb[0].mxu0 %v1573
      %v1636 = vpop.f32.mrb[0].mxu0
      %v1637 = vadd.f32 0.0, %v1636
      %v1638 = vpop.f32.mrb[0].mxu0
      %v1639 = vpop.f32.mrb[0].mxu0
      %v1640 = vadd.f32 0.0, %v1639
      %v1641 = vpop.f32.mrb[0].mxu0
      %1642 = vmatprep.mubr.bf16.mxu0 0
      %1643 = vmatmul.mubr.bf16.gmra.mrb[0].mxu0 %v1576
      %v1644 = vpop.f32.mrb[0].mxu0
      %v1645 = vadd.f32 0.0, %v1644
      %v1646 = vpop.f32.mrb[0].mxu0
      %v1647 = vpop.f32.mrb[0].mxu0
      %v1648 = vadd.f32 0.0, %v1647
      %v1649 = vpop.f32.mrb[0].mxu0
      %1650 = vdwg.mxu0
      %v1651 = vadd.f32 %v1529, %v1613
      %v1652 = vadd.f32 %v1530, %v1616
      %v1653 = vadd.f32 %v1531, %v1621
      %v1654 = vadd.f32 %v1532, %v1624
      %v1655 = vadd.f32 %v1533, %v1629
      %v1656 = vadd.f32 %v1534, %v1632
      %v1657 = vadd.f32 %v1535, %v1637
      %v1658 = vadd.f32 %v1536, %v1640
      %v1659 = vadd.f32 %v1537, %v1645
      %v1660 = vadd.f32 %v1538, %v1648
      %v1661 = vld [vmem:[%s4] sm:$0x1]
      %v1663 = vlaneseq
      %v1664 = vshrl.u32 %v1663, 7
      %v1665 = vsub.s32 0, %v1664
      %v1666 = vrot.slane %v1661, %v1665
      %v1668 = vadd.f32 %v1651, %v1666
      %v1669 = vadd.f32 %v1652, %v1666
      %v1670 = vadd.f32 %v1653, %v1666
      %v1671 = vadd.f32 %v1654, %v1666
      %v1672 = vadd.f32 %v1655, %v1666
      %v1673 = vadd.f32 %v1656, %v1666
      %v1674 = vadd.f32 %v1657, %v1666
      %v1675 = vadd.f32 %v1658, %v1666
      %v1676 = vadd.f32 %v1659, %v1666
      %v1677 = vadd.f32 %v1660, %v1666
      %v1678 = vmax.f32 %v1668, 0.0
      %v1679 = vmax.f32 %v1669, 0.0
      %v1680 = vmax.f32 %v1670, 0.0
      %v1681 = vmax.f32 %v1671, 0.0
      %v1682 = vmax.f32 %v1672, 0.0
      %v1683 = vmax.f32 %v1673, 0.0
      %v1684 = vmax.f32 %v1674, 0.0
      %v1685 = vmax.f32 %v1675, 0.0
      %v1686 = vmax.f32 %v1676, 0.0
      %v1687 = vmax.f32 %v1677, 0.0
      %1689 = vset.pattern.permute.xlu0 0
      %1690 = vperm.xlu0 %1689, %v408
      %v1691 = vpop.permute.xlu0 %1690
      %1694 = vset.pattern.permute.xlu0 0
      %1695 = vperm.xlu0 %1694, %v409
      %v1696 = vpop.permute.xlu0 %1695
      %1699 = vset.pattern.permute.xlu0 0
      %1700 = vperm.xlu0 %1699, %v410
      %v1701 = vpop.permute.xlu0 %1700
      %1704 = vset.pattern.permute.xlu0 0
      %1705 = vperm.xlu0 %1704, %v411
      %v1706 = vpop.permute.xlu0 %1705
      %1709 = vset.pattern.permute.xlu0 0
      %1710 = vperm.xlu0 %1709, %v412
      %v1711 = vpop.permute.xlu0 %1710
      %1714 = vset.pattern.permute.xlu0 0
      %1715 = vperm.xlu0 %1714, %v413
      %v1716 = vpop.permute.xlu0 %1715
      %1719 = vset.pattern.permute.xlu0 0
      %1720 = vperm.xlu0 %1719, %v414
      %v1721 = vpop.permute.xlu0 %1720
      %1724 = vset.pattern.permute.xlu0 0
      %1725 = vperm.xlu0 %1724, %v415
      %v1726 = vpop.permute.xlu0 %1725
      %1729 = vset.pattern.permute.xlu0 0
      %1730 = vperm.xlu0 %1729, %v416
      %v1731 = vpop.permute.xlu0 %1730
      %1734 = vset.pattern.permute.xlu0 0
      %1735 = vperm.xlu0 %1734, %v417
      %v1736 = vpop.permute.xlu0 %1735
      %v1738 = vmul.f32 %v1678, %v1691
      %v1739 = vmul.f32 %v1679, %v1696
      %v1740 = vmul.f32 %v1680, %v1701
      %v1741 = vmul.f32 %v1681, %v1706
      %v1742 = vmul.f32 %v1682, %v1711
      %v1743 = vmul.f32 %v1683, %v1716
      %v1744 = vmul.f32 %v1684, %v1721
      %v1745 = vmul.f32 %v1685, %v1726
      %v1746 = vmul.f32 %v1686, %v1731
      %v1747 = vmul.f32 %v1687, %v1736
      %vm1748 = vcmask 261120
      %1749 = vst.msk [vmem:[#allocation3] sm:$0xff] %vm1748, 0.0
      %1750 = vst.msk [vmem:[#allocation3 + $0x8] sm:$0xff] %vm1748, 0.0
      %1751 = vst.msk [vmem:[#allocation3 + $0x60] sm:$0xff] %vm1748, 0.0
      %1752 = vst.msk [vmem:[#allocation3 + $0x68] sm:$0xff] %vm1748, 0.0
      %1753 = vst.msk [vmem:[#allocation3 + $0x10] sm:$0xff] %vm1748, %v1738
      %1754 = vst.msk [vmem:[#allocation3 + $0x18] sm:$0xff] %vm1748, %v1739
      %1755 = vst.msk [vmem:[#allocation3 + $0x20] sm:$0xff] %vm1748, %v1740
      %1756 = vst.msk [vmem:[#allocation3 + $0x28] sm:$0xff] %vm1748, %v1741
      %1757 = vst.msk [vmem:[#allocation3 + $0x30] sm:$0xff] %vm1748, %v1742
      %1758 = vst.msk [vmem:[#allocation3 + $0x38] sm:$0xff] %vm1748, %v1743
      %1759 = vst.msk [vmem:[#allocation3 + $0x40] sm:$0xff] %vm1748, %v1744
      %1760 = vst.msk [vmem:[#allocation3 + $0x48] sm:$0xff] %vm1748, %v1745
      %1761 = vst.msk [vmem:[#allocation3 + $0x50] sm:$0xff] %vm1748, %v1746
      %1762 = vst.msk [vmem:[#allocation3 + $0x58] sm:$0xff] %vm1748, %v1747
      %v1763 = vld [vmem:[#allocation3 + $0x5] sm:$0xff]
      %v1764 = vld [vmem:[#allocation3 + $0xd] sm:$0xff]
      %v1765 = vld [vmem:[#allocation3 + $0x15] sm:$0xff]
      %v1766 = vld [vmem:[#allocation3 + $0x1d] sm:$0xff]
      %v1767 = vld [vmem:[#allocation3 + $0x25] sm:$0xff]
      %v1768 = vld [vmem:[#allocation3 + $0x2d] sm:$0xff]
      %v1769 = vld [vmem:[#allocation3 + $0x35] sm:$0xff]
      %v1770 = vld [vmem:[#allocation3 + $0x3d] sm:$0xff]
      %v1771 = vld [vmem:[#allocation3 + $0x45] sm:$0xff]
      %v1772 = vld [vmem:[#allocation3 + $0x4d] sm:$0xff]
      %v1773 = vpack.c.bf16 %v1764, %v1763
      %v1774 = vpack.c.bf16 %v1766, %v1765
      %v1775 = vpack.c.bf16 %v1768, %v1767
      %v1776 = vpack.c.bf16 %v1770, %v1769
      %v1777 = vpack.c.bf16 %v1772, %v1771
      %v1778 = vld [vmem:[%s5] sm:$0xf]
      %v1779 = vld [vmem:[%s5 + $0x4] sm:$0xf]
      %v1780 = vld [vmem:[%s5 + $0x8] sm:$0xf]
      %v1781 = vld [vmem:[%s5 + $0xc] sm:$0xf]
      %v1782 = vld [vmem:[#allocation3 + $0x6] sm:$0xff]
      %v1783 = vld [vmem:[#allocation3 + $0xe] sm:$0xff]
      %v1784 = vld [vmem:[#allocation3 + $0x16] sm:$0xff]
      %v1785 = vld [vmem:[#allocation3 + $0x1e] sm:$0xff]
      %v1786 = vld [vmem:[#allocation3 + $0x26] sm:$0xff]
      %v1787 = vld [vmem:[#allocation3 + $0x2e] sm:$0xff]
      %v1788 = vld [vmem:[#allocation3 + $0x36] sm:$0xff]
      %v1789 = vld [vmem:[#allocation3 + $0x3e] sm:$0xff]
      %v1790 = vld [vmem:[#allocation3 + $0x46] sm:$0xff]
      %v1791 = vld [vmem:[#allocation3 + $0x4e] sm:$0xff]
      %v1792 = vpack.c.bf16 %v1783, %v1782
      %v1793 = vpack.c.bf16 %v1785, %v1784
      %v1794 = vpack.c.bf16 %v1787, %v1786
      %v1795 = vpack.c.bf16 %v1789, %v1788
      %v1796 = vpack.c.bf16 %v1791, %v1790
      %s1797 = scalar_lea.vmem %s5, 16
      %v1798 = vld [vmem:[%s1797] sm:$0xf]
      %v1799 = vld [vmem:[%s1797 + $0x4] sm:$0xf]
      %v1800 = vld [vmem:[%s1797 + $0x8] sm:$0xf]
      %v1801 = vld [vmem:[%s1797 + $0xc] sm:$0xf]
      %v1806 = vunpack.c.l.b16 %v1798
      %v1807 = vunpack.c.l.b16 %v1799
      %v1808 = vunpack.c.l.b16 %v1800
      %v1809 = vunpack.c.l.b16 %v1801
      %v1810 = vpack.c.b16 %v1807, %v1806
      %v1811 = vpack.c.b16 %v1809, %v1808
      %v1815 = vsel %vm1748, %v1792, 0
      %v1818 = vsel %vm1748, %v1793, 0
      %v1821 = vsel %vm1748, %v1794, 0
      %v1824 = vsel %vm1748, %v1795, 0
      %v1827 = vsel %vm1748, %v1796, 0
      %1829 = vmatprep.subr.bf16.mxu0 0
      %1830 = vmatpush1.bf16.msra.mxu0 %v1810
      %1831 = vmatprep.subr.bf16.mxu0 0
      %1832 = vmatpush1.bf16.msra.mxu0 %v1811
      %1833 = vmatprep.subr.bf16.mxu0 0
      %1834 = vmatpush1.bf16.msra.mxu0 0
      %1835 = vmatprep.subr.bf16.mxu0 0
      %1836 = vmatpush1.bf16.msra.mxu0 0
      %1837 = vmatprep.subr.bf16.mxu0 0
      %1838 = vmatpush1.bf16.msra.mxu0 0
      %1839 = vmatprep.subr.bf16.mxu0 0
      %1840 = vmatpush1.bf16.msra.mxu0 0
      %1841 = vmatprep.subr.bf16.mxu0 0
      %1842 = vmatpush1.bf16.msra.mxu0 0
      %1843 = vmatprep.subr.bf16.mxu0 0
      %1844 = vmatpush1.bf16.msra.mxu0 0
      %1845 = vmatprep.subr.bf16.mxu0 0
      %1846 = vmatpush1.bf16.msra.mxu0 0
      %1847 = vmatprep.subr.bf16.mxu0 0
      %1848 = vmatpush1.bf16.msra.mxu0 0
      %1849 = vmatprep.subr.bf16.mxu0 0
      %1850 = vmatpush1.bf16.msra.mxu0 0
      %1851 = vmatprep.subr.bf16.mxu0 0
      %1852 = vmatpush1.bf16.msra.mxu0 0
      %1853 = vmatprep.subr.bf16.mxu0 0
      %1854 = vmatpush1.bf16.msra.mxu0 0
      %1855 = vmatprep.subr.bf16.mxu0 0
      %1856 = vmatpush1.bf16.msra.mxu0 0
      %1857 = vmatprep.subr.bf16.mxu0 0
      %1858 = vmatpush1.bf16.msra.mxu0 0
      %1859 = vmatprep.subr.bf16.mxu0 0
      %1860 = vmatpush1.bf16.msra.mxu0 0
      %1861 = vmatprep.mubr.bf16.mxu0 0
      %1862 = vmatmul.mubr.bf16.gmra.mrb[0].mxu0 %v1815
      %v1863 = vpop.f32.mrb[0].mxu0
      %v1864 = vadd.f32 0.0, %v1863
      %v1865 = vpop.f32.mrb[0].mxu0
      %v1866 = vpop.f32.mrb[0].mxu0
      %v1867 = vadd.f32 0.0, %v1866
      %v1868 = vpop.f32.mrb[0].mxu0
      %1869 = vmatprep.mubr.bf16.mxu0 0
      %1870 = vmatmul.mubr.bf16.gmra.mrb[0].mxu0 %v1818
      %v1871 = vpop.f32.mrb[0].mxu0
      %v1872 = vadd.f32 0.0, %v1871
      %v1873 = vpop.f32.mrb[0].mxu0
      %v1874 = vpop.f32.mrb[0].mxu0
      %v1875 = vadd.f32 0.0, %v1874
      %v1876 = vpop.f32.mrb[0].mxu0
      %1877 = vmatprep.mubr.bf16.mxu0 0
      %1878 = vmatmul.mubr.bf16.gmra.mrb[0].mxu0 %v1821
      %v1879 = vpop.f32.mrb[0].mxu0
      %v1880 = vadd.f32 0.0, %v1879
      %v1881 = vpop.f32.mrb[0].mxu0
      %v1882 = vpop.f32.mrb[0].mxu0
      %v1883 = vadd.f32 0.0, %v1882
      %v1884 = vpop.f32.mrb[0].mxu0
      %1885 = vmatprep.mubr.bf16.mxu0 0
      %1886 = vmatmul.mubr.bf16.gmra.mrb[0].mxu0 %v1824
      %v1887 = vpop.f32.mrb[0].mxu0
      %v1888 = vadd.f32 0.0, %v1887
      %v1889 = vpop.f32.mrb[0].mxu0
      %v1890 = vpop.f32.mrb[0].mxu0
      %v1891 = vadd.f32 0.0, %v1890
      %v1892 = vpop.f32.mrb[0].mxu0
      %1893 = vmatprep.mubr.bf16.mxu0 0
      %1894 = vmatmul.mubr.bf16.gmra.mrb[0].mxu0 %v1827
      %v1895 = vpop.f32.mrb[0].mxu0
      %v1896 = vadd.f32 0.0, %v1895
      %v1897 = vpop.f32.mrb[0].mxu0
      %v1898 = vpop.f32.mrb[0].mxu0
      %v1899 = vadd.f32 0.0, %v1898
      %v1900 = vpop.f32.mrb[0].mxu0
      %1901 = vdwg.mxu0
      %v1906 = vunpack.c.l.b16 %v1778
      %v1907 = vunpack.c.l.b16 %v1779
      %v1908 = vunpack.c.l.b16 %v1780
      %v1909 = vunpack.c.l.b16 %v1781
      %v1910 = vpack.c.b16 %v1907, %v1906
      %v1911 = vpack.c.b16 %v1909, %v1908
      %v1915 = vsel %vm1748, %v1773, 0
      %v1918 = vsel %vm1748, %v1774, 0
      %v1921 = vsel %vm1748, %v1775, 0
      %v1924 = vsel %vm1748, %v1776, 0
      %v1927 = vsel %vm1748, %v1777, 0
      %1929 = vmatprep.subr.bf16.mxu0 0
      %1930 = vmatpush1.bf16.msra.mxu0 %v1910
      %1931 = vmatprep.subr.bf16.mxu0 0
      %1932 = vmatpush1.bf16.msra.mxu0 %v1911
      %1933 = vmatprep.subr.bf16.mxu0 0
      %1934 = vmatpush1.bf16.msra.mxu0 0
      %1935 = vmatprep.subr.bf16.mxu0 0
      %1936 = vmatpush1.bf16.msra.mxu0 0
      %1937 = vmatprep.subr.bf16.mxu0 0
      %1938 = vmatpush1.bf16.msra.mxu0 0
      %1939 = vmatprep.subr.bf16.mxu0 0
      %1940 = vmatpush1.bf16.msra.mxu0 0
      %1941 = vmatprep.subr.bf16.mxu0 0
      %1942 = vmatpush1.bf16.msra.mxu0 0
      %1943 = vmatprep.subr.bf16.mxu0 0
      %1944 = vmatpush1.bf16.msra.mxu0 0
      %1945 = vmatprep.subr.bf16.mxu0 0
      %1946 = vmatpush1.bf16.msra.mxu0 0
      %1947 = vmatprep.subr.bf16.mxu0 0
      %1948 = vmatpush1.bf16.msra.mxu0 0
      %1949 = vmatprep.subr.bf16.mxu0 0
      %1950 = vmatpush1.bf16.msra.mxu0 0
      %1951 = vmatprep.subr.bf16.mxu0 0
      %1952 = vmatpush1.bf16.msra.mxu0 0
      %1953 = vmatprep.subr.bf16.mxu0 0
      %1954 = vmatpush1.bf16.msra.mxu0 0
      %1955 = vmatprep.subr.bf16.mxu0 0
      %1956 = vmatpush1.bf16.msra.mxu0 0
      %1957 = vmatprep.subr.bf16.mxu0 0
      %1958 = vmatpush1.bf16.msra.mxu0 0
      %1959 = vmatprep.subr.bf16.mxu0 0
      %1960 = vmatpush1.bf16.msra.mxu0 0
      %1961 = vmatprep.mubr.bf16.mxu0 0
      %1962 = vmatmul.mubr.bf16.gmra.mrb[0].mxu0 %v1915
      %v1963 = vpop.f32.mrb[0].mxu0
      %v1964 = vadd.f32 %v1864, %v1963
      %v1965 = vpop.f32.mrb[0].mxu0
      %v1966 = vpop.f32.mrb[0].mxu0
      %v1967 = vadd.f32 %v1867, %v1966
      %v1968 = vpop.f32.mrb[0].mxu0
      %1969 = vmatprep.mubr.bf16.mxu0 0
      %1970 = vmatmul.mubr.bf16.gmra.mrb[0].mxu0 %v1918
      %v1971 = vpop.f32.mrb[0].mxu0
      %v1972 = vadd.f32 %v1872, %v1971
      %v1973 = vpop.f32.mrb[0].mxu0
      %v1974 = vpop.f32.mrb[0].mxu0
      %v1975 = vadd.f32 %v1875, %v1974
      %v1976 = vpop.f32.mrb[0].mxu0
      %1977 = vmatprep.mubr.bf16.mxu0 0
      %1978 = vmatmul.mubr.bf16.gmra.mrb[0].mxu0 %v1921
      %v1979 = vpop.f32.mrb[0].mxu0
      %v1980 = vadd.f32 %v1880, %v1979
      %v1981 = vpop.f32.mrb[0].mxu0
      %v1982 = vpop.f32.mrb[0].mxu0
      %v1983 = vadd.f32 %v1883, %v1982
      %v1984 = vpop.f32.mrb[0].mxu0
      %1985 = vmatprep.mubr.bf16.mxu0 0
      %1986 = vmatmul.mubr.bf16.gmra.mrb[0].mxu0 %v1924
      %v1987 = vpop.f32.mrb[0].mxu0
      %v1988 = vadd.f32 %v1888, %v1987
      %v1989 = vpop.f32.mrb[0].mxu0
      %v1990 = vpop.f32.mrb[0].mxu0
      %v1991 = vadd.f32 %v1891, %v1990
      %v1992 = vpop.f32.mrb[0].mxu0
      %1993 = vmatprep.mubr.bf16.mxu0 0
      %1994 = vmatmul.mubr.bf16.gmra.mrb[0].mxu0 %v1927
      %v1995 = vpop.f32.mrb[0].mxu0
      %v1996 = vadd.f32 %v1896, %v1995
      %v1997 = vpop.f32.mrb[0].mxu0
      %v1998 = vpop.f32.mrb[0].mxu0
      %v1999 = vadd.f32 %v1899, %v1998
      %v2000 = vpop.f32.mrb[0].mxu0
      %2001 = vdwg.mxu0
      %v2002 = vld [vmem:[#allocation3 + $0x7] sm:$0xff]
      %v2003 = vld [vmem:[#allocation3 + $0xf] sm:$0xff]
      %v2004 = vld [vmem:[#allocation3 + $0x17] sm:$0xff]
      %v2005 = vld [vmem:[#allocation3 + $0x1f] sm:$0xff]
      %v2006 = vld [vmem:[#allocation3 + $0x27] sm:$0xff]
      %v2007 = vld [vmem:[#allocation3 + $0x2f] sm:$0xff]
      %v2008 = vld [vmem:[#allocation3 + $0x37] sm:$0xff]
      %v2009 = vld [vmem:[#allocation3 + $0x3f] sm:$0xff]
      %v2010 = vld [vmem:[#allocation3 + $0x47] sm:$0xff]
      %v2011 = vld [vmem:[#allocation3 + $0x4f] sm:$0xff]
      %v2012 = vpack.c.bf16 %v2003, %v2002
      %v2013 = vpack.c.bf16 %v2005, %v2004
      %v2014 = vpack.c.bf16 %v2007, %v2006
      %v2015 = vpack.c.bf16 %v2009, %v2008
      %v2016 = vpack.c.bf16 %v2011, %v2010
      %s2017 = scalar_lea.vmem %s5, 32
      %v2018 = vld [vmem:[%s2017] sm:$0xf]
      %v2019 = vld [vmem:[%s2017 + $0x4] sm:$0xf]
      %v2020 = vld [vmem:[%s2017 + $0x8] sm:$0xf]
      %v2021 = vld [vmem:[%s2017 + $0xc] sm:$0xf]
      %v2026 = vunpack.c.l.b16 %v2018
      %v2027 = vunpack.c.l.b16 %v2019
      %v2028 = vunpack.c.l.b16 %v2020
      %v2029 = vunpack.c.l.b16 %v2021
      %v2030 = vpack.c.b16 %v2027, %v2026
      %v2031 = vpack.c.b16 %v2029, %v2028
      %v2035 = vsel %vm1748, %v2012, 0
      %v2038 = vsel %vm1748, %v2013, 0
      %v2041 = vsel %vm1748, %v2014, 0
      %v2044 = vsel %vm1748, %v2015, 0
      %v2047 = vsel %vm1748, %v2016, 0
      %2049 = vmatprep.subr.bf16.mxu0 0
      %2050 = vmatpush1.bf16.msra.mxu0 %v2030
      %2051 = vmatprep.subr.bf16.mxu0 0
      %2052 = vmatpush1.bf16.msra.mxu0 %v2031
      %2053 = vmatprep.subr.bf16.mxu0 0
      %2054 = vmatpush1.bf16.msra.mxu0 0
      %2055 = vmatprep.subr.bf16.mxu0 0
      %2056 = vmatpush1.bf16.msra.mxu0 0
      %2057 = vmatprep.subr.bf16.mxu0 0
      %2058 = vmatpush1.bf16.msra.mxu0 0
      %2059 = vmatprep.subr.bf16.mxu0 0
      %2060 = vmatpush1.bf16.msra.mxu0 0
      %2061 = vmatprep.subr.bf16.mxu0 0
      %2062 = vmatpush1.bf16.msra.mxu0 0
      %2063 = vmatprep.subr.bf16.mxu0 0
      %2064 = vmatpush1.bf16.msra.mxu0 0
      %2065 = vmatprep.subr.bf16.mxu0 0
      %2066 = vmatpush1.bf16.msra.mxu0 0
      %2067 = vmatprep.subr.bf16.mxu0 0
      %2068 = vmatpush1.bf16.msra.mxu0 0
      %2069 = vmatprep.subr.bf16.mxu0 0
      %2070 = vmatpush1.bf16.msra.mxu0 0
      %2071 = vmatprep.subr.bf16.mxu0 0
      %2072 = vmatpush1.bf16.msra.mxu0 0
      %2073 = vmatprep.subr.bf16.mxu0 0
      %2074 = vmatpush1.bf16.msra.mxu0 0
      %2075 = vmatprep.subr.bf16.mxu0 0
      %2076 = vmatpush1.bf16.msra.mxu0 0
      %2077 = vmatprep.subr.bf16.mxu0 0
      %2078 = vmatpush1.bf16.msra.mxu0 0
      %2079 = vmatprep.subr.bf16.mxu0 0
      %2080 = vmatpush1.bf16.msra.mxu0 0
      %2081 = vmatprep.mubr.bf16.mxu0 0
      %2082 = vmatmul.mubr.bf16.gmra.mrb[0].mxu0 %v2035
      %v2083 = vpop.f32.mrb[0].mxu0
      %v2084 = vadd.f32 0.0, %v2083
      %v2085 = vpop.f32.mrb[0].mxu0
      %v2086 = vpop.f32.mrb[0].mxu0
      %v2087 = vadd.f32 0.0, %v2086
      %v2088 = vpop.f32.mrb[0].mxu0
      %2089 = vmatprep.mubr.bf16.mxu0 0
      %2090 = vmatmul.mubr.bf16.gmra.mrb[0].mxu0 %v2038
      %v2091 = vpop.f32.mrb[0].mxu0
      %v2092 = vadd.f32 0.0, %v2091
      %v2093 = vpop.f32.mrb[0].mxu0
      %v2094 = vpop.f32.mrb[0].mxu0
      %v2095 = vadd.f32 0.0, %v2094
      %v2096 = vpop.f32.mrb[0].mxu0
      %2097 = vmatprep.mubr.bf16.mxu0 0
      %2098 = vmatmul.mubr.bf16.gmra.mrb[0].mxu0 %v2041
      %v2099 = vpop.f32.mrb[0].mxu0
      %v2100 = vadd.f32 0.0, %v2099
      %v2101 = vpop.f32.mrb[0].mxu0
      %v2102 = vpop.f32.mrb[0].mxu0
      %v2103 = vadd.f32 0.0, %v2102
      %v2104 = vpop.f32.mrb[0].mxu0
      %2105 = vmatprep.mubr.bf16.mxu0 0
      %2106 = vmatmul.mubr.bf16.gmra.mrb[0].mxu0 %v2044
      %v2107 = vpop.f32.mrb[0].mxu0
      %v2108 = vadd.f32 0.0, %v2107
      %v2109 = vpop.f32.mrb[0].mxu0
      %v2110 = vpop.f32.mrb[0].mxu0
      %v2111 = vadd.f32 0.0, %v2110
      %v2112 = vpop.f32.mrb[0].mxu0
      %2113 = vmatprep.mubr.bf16.mxu0 0
      %2114 = vmatmul.mubr.bf16.gmra.mrb[0].mxu0 %v2047
      %v2115 = vpop.f32.mrb[0].mxu0
      %v2116 = vadd.f32 0.0, %v2115
      %v2117 = vpop.f32.mrb[0].mxu0
      %v2118 = vpop.f32.mrb[0].mxu0
      %v2119 = vadd.f32 0.0, %v2118
      %v2120 = vpop.f32.mrb[0].mxu0
      %2121 = vdwg.mxu0
      %v2122 = vadd.f32 %v1964, %v2084
      %v2123 = vadd.f32 %v1967, %v2087
      %v2124 = vadd.f32 %v1972, %v2092
      %v2125 = vadd.f32 %v1975, %v2095
      %v2126 = vadd.f32 %v1980, %v2100
      %v2127 = vadd.f32 %v1983, %v2103
      %v2128 = vadd.f32 %v1988, %v2108
      %v2129 = vadd.f32 %v1991, %v2111
      %v2130 = vadd.f32 %v1996, %v2116
      %v2131 = vadd.f32 %v1999, %v2119
      %v2132 = vld [vmem:[#allocation3 + $0xf] sm:$0xff]
      %v2133 = vld [vmem:[#allocation3 + $0x17] sm:$0xff]
      %v2134 = vld [vmem:[#allocation3 + $0x1f] sm:$0xff]
      %v2135 = vld [vmem:[#allocation3 + $0x27] sm:$0xff]
      %v2136 = vld [vmem:[#allocation3 + $0x2f] sm:$0xff]
      %v2137 = vld [vmem:[#allocation3 + $0x37] sm:$0xff]
      %v2138 = vld [vmem:[#allocation3 + $0x3f] sm:$0xff]
      %v2139 = vld [vmem:[#allocation3 + $0x47] sm:$0xff]
      %v2140 = vld [vmem:[#allocation3 + $0x4f] sm:$0xff]
      %v2141 = vld [vmem:[#allocation3 + $0x57] sm:$0xff]
      %v2142 = vpack.c.bf16 %v2133, %v2132
      %v2143 = vpack.c.bf16 %v2135, %v2134
      %v2144 = vpack.c.bf16 %v2137, %v2136
      %v2145 = vpack.c.bf16 %v2139, %v2138
      %v2146 = vpack.c.bf16 %v2141, %v2140
      %s2147 = scalar_lea.vmem %s5, 48
      %v2148 = vld [vmem:[%s2147] sm:$0xf]
      %v2149 = vld [vmem:[%s2147 + $0x4] sm:$0xf]
      %v2150 = vld [vmem:[%s2147 + $0x8] sm:$0xf]
      %v2151 = vld [vmem:[%s2147 + $0xc] sm:$0xf]
      %v2156 = vunpack.c.l.b16 %v2148
      %v2157 = vunpack.c.l.b16 %v2149
      %v2158 = vunpack.c.l.b16 %v2150
      %v2159 = vunpack.c.l.b16 %v2151
      %v2160 = vpack.c.b16 %v2157, %v2156
      %v2161 = vpack.c.b16 %v2159, %v2158
      %v2165 = vsel %vm1748, %v2142, 0
      %v2168 = vsel %vm1748, %v2143, 0
      %v2171 = vsel %vm1748, %v2144, 0
      %v2174 = vsel %vm1748, %v2145, 0
      %v2177 = vsel %vm1748, %v2146, 0
      %2179 = vmatprep.subr.bf16.mxu0 0
      %2180 = vmatpush1.bf16.msra.mxu0 %v2160
      %2181 = vmatprep.subr.bf16.mxu0 0
      %2182 = vmatpush1.bf16.msra.mxu0 %v2161
      %2183 = vmatprep.subr.bf16.mxu0 0
      %2184 = vmatpush1.bf16.msra.mxu0 0
      %2185 = vmatprep.subr.bf16.mxu0 0
      %2186 = vmatpush1.bf16.msra.mxu0 0
      %2187 = vmatprep.subr.bf16.mxu0 0
      %2188 = vmatpush1.bf16.msra.mxu0 0
      %2189 = vmatprep.subr.bf16.mxu0 0
      %2190 = vmatpush1.bf16.msra.mxu0 0
      %2191 = vmatprep.subr.bf16.mxu0 0
      %2192 = vmatpush1.bf16.msra.mxu0 0
      %2193 = vmatprep.subr.bf16.mxu0 0
      %2194 = vmatpush1.bf16.msra.mxu0 0
      %2195 = vmatprep.subr.bf16.mxu0 0
      %2196 = vmatpush1.bf16.msra.mxu0 0
      %2197 = vmatprep.subr.bf16.mxu0 0
      %2198 = vmatpush1.bf16.msra.mxu0 0
      %2199 = vmatprep.subr.bf16.mxu0 0
      %2200 = vmatpush1.bf16.msra.mxu0 0
      %2201 = vmatprep.subr.bf16.mxu0 0
      %2202 = vmatpush1.bf16.msra.mxu0 0
      %2203 = vmatprep.subr.bf16.mxu0 0
      %2204 = vmatpush1.bf16.msra.mxu0 0
      %2205 = vmatprep.subr.bf16.mxu0 0
      %2206 = vmatpush1.bf16.msra.mxu0 0
      %2207 = vmatprep.subr.bf16.mxu0 0
      %2208 = vmatpush1.bf16.msra.mxu0 0
      %2209 = vmatprep.subr.bf16.mxu0 0
      %2210 = vmatpush1.bf16.msra.mxu0 0
      %2211 = vmatprep.mubr.bf16.mxu0 0
      %2212 = vmatmul.mubr.bf16.gmra.mrb[0].mxu0 %v2165
      %v2213 = vpop.f32.mrb[0].mxu0
      %v2214 = vadd.f32 0.0, %v2213
      %v2215 = vpop.f32.mrb[0].mxu0
      %v2216 = vpop.f32.mrb[0].mxu0
      %v2217 = vadd.f32 0.0, %v2216
      %v2218 = vpop.f32.mrb[0].mxu0
      %2219 = vmatprep.mubr.bf16.mxu0 0
      %2220 = vmatmul.mubr.bf16.gmra.mrb[0].mxu0 %v2168
      %v2221 = vpop.f32.mrb[0].mxu0
      %v2222 = vadd.f32 0.0, %v2221
      %v2223 = vpop.f32.mrb[0].mxu0
      %v2224 = vpop.f32.mrb[0].mxu0
      %v2225 = vadd.f32 0.0, %v2224
      %v2226 = vpop.f32.mrb[0].mxu0
      %2227 = vmatprep.mubr.bf16.mxu0 0
      %2228 = vmatmul.mubr.bf16.gmra.mrb[0].mxu0 %v2171
      %v2229 = vpop.f32.mrb[0].mxu0
      %v2230 = vadd.f32 0.0, %v2229
      %v2231 = vpop.f32.mrb[0].mxu0
      %v2232 = vpop.f32.mrb[0].mxu0
      %v2233 = vadd.f32 0.0, %v2232
      %v2234 = vpop.f32.mrb[0].mxu0
      %2235 = vmatprep.mubr.bf16.mxu0 0
      %2236 = vmatmul.mubr.bf16.gmra.mrb[0].mxu0 %v2174
      %v2237 = vpop.f32.mrb[0].mxu0
      %v2238 = vadd.f32 0.0, %v2237
      %v2239 = vpop.f32.mrb[0].mxu0
      %v2240 = vpop.f32.mrb[0].mxu0
      %v2241 = vadd.f32 0.0, %v2240
      %v2242 = vpop.f32.mrb[0].mxu0
      %2243 = vmatprep.mubr.bf16.mxu0 0
      %2244 = vmatmul.mubr.bf16.gmra.mrb[0].mxu0 %v2177
      %v2245 = vpop.f32.mrb[0].mxu0
      %v2246 = vadd.f32 0.0, %v2245
      %v2247 = vpop.f32.mrb[0].mxu0
      %v2248 = vpop.f32.mrb[0].mxu0
      %v2249 = vadd.f32 0.0, %v2248
      %v2250 = vpop.f32.mrb[0].mxu0
      %2251 = vdwg.mxu0
      %v2252 = vadd.f32 %v2122, %v2214
      %v2253 = vadd.f32 %v2123, %v2217
      %v2254 = vadd.f32 %v2124, %v2222
      %v2255 = vadd.f32 %v2125, %v2225
      %v2256 = vadd.f32 %v2126, %v2230
      %v2257 = vadd.f32 %v2127, %v2233
      %v2258 = vadd.f32 %v2128, %v2238
      %v2259 = vadd.f32 %v2129, %v2241
      %v2260 = vadd.f32 %v2130, %v2246
      %v2261 = vadd.f32 %v2131, %v2249
      %v2262 = vld [vmem:[#allocation3 + $0x10] sm:$0xff]
      %v2263 = vld [vmem:[#allocation3 + $0x18] sm:$0xff]
      %v2264 = vld [vmem:[#allocation3 + $0x20] sm:$0xff]
      %v2265 = vld [vmem:[#allocation3 + $0x28] sm:$0xff]
      %v2266 = vld [vmem:[#allocation3 + $0x30] sm:$0xff]
      %v2267 = vld [vmem:[#allocation3 + $0x38] sm:$0xff]
      %v2268 = vld [vmem:[#allocation3 + $0x40] sm:$0xff]
      %v2269 = vld [vmem:[#allocation3 + $0x48] sm:$0xff]
      %v2270 = vld [vmem:[#allocation3 + $0x50] sm:$0xff]
      %v2271 = vld [vmem:[#allocation3 + $0x58] sm:$0xff]
      %v2272 = vpack.c.bf16 %v2263, %v2262
      %v2273 = vpack.c.bf16 %v2265, %v2264
      %v2274 = vpack.c.bf16 %v2267, %v2266
      %v2275 = vpack.c.bf16 %v2269, %v2268
      %v2276 = vpack.c.bf16 %v2271, %v2270
      %s2277 = scalar_lea.vmem %s5, 64
      %v2278 = vld [vmem:[%s2277] sm:$0xf]
      %v2279 = vld [vmem:[%s2277 + $0x4] sm:$0xf]
      %v2280 = vld [vmem:[%s2277 + $0x8] sm:$0xf]
      %v2281 = vld [vmem:[%s2277 + $0xc] sm:$0xf]
      %v2286 = vunpack.c.l.b16 %v2278
      %v2287 = vunpack.c.l.b16 %v2279
      %v2288 = vunpack.c.l.b16 %v2280
      %v2289 = vunpack.c.l.b16 %v2281
      %v2290 = vpack.c.b16 %v2287, %v2286
      %v2291 = vpack.c.b16 %v2289, %v2288
      %v2295 = vsel %vm1748, %v2272, 0
      %v2298 = vsel %vm1748, %v2273, 0
      %v2301 = vsel %vm1748, %v2274, 0
      %v2304 = vsel %vm1748, %v2275, 0
      %v2307 = vsel %vm1748, %v2276, 0
      %2309 = vmatprep.subr.bf16.mxu0 0
      %2310 = vmatpush1.bf16.msra.mxu0 %v2290
      %2311 = vmatprep.subr.bf16.mxu0 0
      %2312 = vmatpush1.bf16.msra.mxu0 %v2291
      %2313 = vmatprep.subr.bf16.mxu0 0
      %2314 = vmatpush1.bf16.msra.mxu0 0
      %2315 = vmatprep.subr.bf16.mxu0 0
      %2316 = vmatpush1.bf16.msra.mxu0 0
      %2317 = vmatprep.subr.bf16.mxu0 0
      %2318 = vmatpush1.bf16.msra.mxu0 0
      %2319 = vmatprep.subr.bf16.mxu0 0
      %2320 = vmatpush1.bf16.msra.mxu0 0
      %2321 = vmatprep.subr.bf16.mxu0 0
      %2322 = vmatpush1.bf16.msra.mxu0 0
      %2323 = vmatprep.subr.bf16.mxu0 0
      %2324 = vmatpush1.bf16.msra.mxu0 0
      %2325 = vmatprep.subr.bf16.mxu0 0
      %2326 = vmatpush1.bf16.msra.mxu0 0
      %2327 = vmatprep.subr.bf16.mxu0 0
      %2328 = vmatpush1.bf16.msra.mxu0 0
      %2329 = vmatprep.subr.bf16.mxu0 0
      %2330 = vmatpush1.bf16.msra.mxu0 0
      %2331 = vmatprep.subr.bf16.mxu0 0
      %2332 = vmatpush1.bf16.msra.mxu0 0
      %2333 = vmatprep.subr.bf16.mxu0 0
      %2334 = vmatpush1.bf16.msra.mxu0 0
      %2335 = vmatprep.subr.bf16.mxu0 0
      %2336 = vmatpush1.bf16.msra.mxu0 0
      %2337 = vmatprep.subr.bf16.mxu0 0
      %2338 = vmatpush1.bf16.msra.mxu0 0
      %2339 = vmatprep.subr.bf16.mxu0 0
      %2340 = vmatpush1.bf16.msra.mxu0 0
      %2341 = vmatprep.mubr.bf16.mxu0 0
      %2342 = vmatmul.mubr.bf16.gmra.mrb[0].mxu0 %v2295
      %v2343 = vpop.f32.mrb[0].mxu0
      %v2344 = vadd.f32 0.0, %v2343
      %v2345 = vpop.f32.mrb[0].mxu0
      %v2346 = vpop.f32.mrb[0].mxu0
      %v2347 = vadd.f32 0.0, %v2346
      %v2348 = vpop.f32.mrb[0].mxu0
      %2349 = vmatprep.mubr.bf16.mxu0 0
      %2350 = vmatmul.mubr.bf16.gmra.mrb[0].mxu0 %v2298
      %v2351 = vpop.f32.mrb[0].mxu0
      %v2352 = vadd.f32 0.0, %v2351
      %v2353 = vpop.f32.mrb[0].mxu0
      %v2354 = vpop.f32.mrb[0].mxu0
      %v2355 = vadd.f32 0.0, %v2354
      %v2356 = vpop.f32.mrb[0].mxu0
      %2357 = vmatprep.mubr.bf16.mxu0 0
      %2358 = vmatmul.mubr.bf16.gmra.mrb[0].mxu0 %v2301
      %v2359 = vpop.f32.mrb[0].mxu0
      %v2360 = vadd.f32 0.0, %v2359
      %v2361 = vpop.f32.mrb[0].mxu0
      %v2362 = vpop.f32.mrb[0].mxu0
      %v2363 = vadd.f32 0.0, %v2362
      %v2364 = vpop.f32.mrb[0].mxu0
      %2365 = vmatprep.mubr.bf16.mxu0 0
      %2366 = vmatmul.mubr.bf16.gmra.mrb[0].mxu0 %v2304
      %v2367 = vpop.f32.mrb[0].mxu0
      %v2368 = vadd.f32 0.0, %v2367
      %v2369 = vpop.f32.mrb[0].mxu0
      %v2370 = vpop.f32.mrb[0].mxu0
      %v2371 = vadd.f32 0.0, %v2370
      %v2372 = vpop.f32.mrb[0].mxu0
      %2373 = vmatprep.mubr.bf16.mxu0 0
      %2374 = vmatmul.mubr.bf16.gmra.mrb[0].mxu0 %v2307
      %v2375 = vpop.f32.mrb[0].mxu0
      %v2376 = vadd.f32 0.0, %v2375
      %v2377 = vpop.f32.mrb[0].mxu0
      %v2378 = vpop.f32.mrb[0].mxu0
      %v2379 = vadd.f32 0.0, %v2378
      %v2380 = vpop.f32.mrb[0].mxu0
      %2381 = vdwg.mxu0
      %v2382 = vadd.f32 %v2252, %v2344
      %v2383 = vadd.f32 %v2253, %v2347
      %v2384 = vadd.f32 %v2254, %v2352
      %v2385 = vadd.f32 %v2255, %v2355
      %v2386 = vadd.f32 %v2256, %v2360
      %v2387 = vadd.f32 %v2257, %v2363
      %v2388 = vadd.f32 %v2258, %v2368
      %v2389 = vadd.f32 %v2259, %v2371
      %v2390 = vadd.f32 %v2260, %v2376
      %v2391 = vadd.f32 %v2261, %v2379
      %v2392 = vld [vmem:[#allocation3 + $0x11] sm:$0xff]
      %v2393 = vld [vmem:[#allocation3 + $0x19] sm:$0xff]
      %v2394 = vld [vmem:[#allocation3 + $0x21] sm:$0xff]
      %v2395 = vld [vmem:[#allocation3 + $0x29] sm:$0xff]
      %v2396 = vld [vmem:[#allocation3 + $0x31] sm:$0xff]
      %v2397 = vld [vmem:[#allocation3 + $0x39] sm:$0xff]
      %v2398 = vld [vmem:[#allocation3 + $0x41] sm:$0xff]
      %v2399 = vld [vmem:[#allocation3 + $0x49] sm:$0xff]
      %v2400 = vld [vmem:[#allocation3 + $0x51] sm:$0xff]
      %v2401 = vld [vmem:[#allocation3 + $0x59] sm:$0xff]
      %v2402 = vpack.c.bf16 %v2393, %v2392
      %v2403 = vpack.c.bf16 %v2395, %v2394
      %v2404 = vpack.c.bf16 %v2397, %v2396
      %v2405 = vpack.c.bf16 %v2399, %v2398
      %v2406 = vpack.c.bf16 %v2401, %v2400
      %s2407 = scalar_lea.vmem %s5, 80
      %v2408 = vld [vmem:[%s2407] sm:$0xf]
      %v2409 = vld [vmem:[%s2407 + $0x4] sm:$0xf]
      %v2410 = vld [vmem:[%s2407 + $0x8] sm:$0xf]
      %v2411 = vld [vmem:[%s2407 + $0xc] sm:$0xf]
      %v2416 = vunpack.c.l.b16 %v2408
      %v2417 = vunpack.c.l.b16 %v2409
      %v2418 = vunpack.c.l.b16 %v2410
      %v2419 = vunpack.c.l.b16 %v2411
      %v2420 = vpack.c.b16 %v2417, %v2416
      %v2421 = vpack.c.b16 %v2419, %v2418
      %v2425 = vsel %vm1748, %v2402, 0
      %v2428 = vsel %vm1748, %v2403, 0
      %v2431 = vsel %vm1748, %v2404, 0
      %v2434 = vsel %vm1748, %v2405, 0
      %v2437 = vsel %vm1748, %v2406, 0
      %2439 = vmatprep.subr.bf16.mxu0 0
      %2440 = vmatpush1.bf16.msra.mxu0 %v2420
      %2441 = vmatprep.subr.bf16.mxu0 0
      %2442 = vmatpush1.bf16.msra.mxu0 %v2421
      %2443 = vmatprep.subr.bf16.mxu0 0
      %2444 = vmatpush1.bf16.msra.mxu0 0
      %2445 = vmatprep.subr.bf16.mxu0 0
      %2446 = vmatpush1.bf16.msra.mxu0 0
      %2447 = vmatprep.subr.bf16.mxu0 0
      %2448 = vmatpush1.bf16.msra.mxu0 0
      %2449 = vmatprep.subr.bf16.mxu0 0
      %2450 = vmatpush1.bf16.msra.mxu0 0
      %2451 = vmatprep.subr.bf16.mxu0 0
      %2452 = vmatpush1.bf16.msra.mxu0 0
      %2453 = vmatprep.subr.bf16.mxu0 0
      %2454 = vmatpush1.bf16.msra.mxu0 0
      %2455 = vmatprep.subr.bf16.mxu0 0
      %2456 = vmatpush1.bf16.msra.mxu0 0
      %2457 = vmatprep.subr.bf16.mxu0 0
      %2458 = vmatpush1.bf16.msra.mxu0 0
      %2459 = vmatprep.subr.bf16.mxu0 0
      %2460 = vmatpush1.bf16.msra.mxu0 0
      %2461 = vmatprep.subr.bf16.mxu0 0
      %2462 = vmatpush1.bf16.msra.mxu0 0
      %2463 = vmatprep.subr.bf16.mxu0 0
      %2464 = vmatpush1.bf16.msra.mxu0 0
      %2465 = vmatprep.subr.bf16.mxu0 0
      %2466 = vmatpush1.bf16.msra.mxu0 0
      %2467 = vmatprep.subr.bf16.mxu0 0
      %2468 = vmatpush1.bf16.msra.mxu0 0
      %2469 = vmatprep.subr.bf16.mxu0 0
      %2470 = vmatpush1.bf16.msra.mxu0 0
      %2471 = vmatprep.mubr.bf16.mxu0 0
      %2472 = vmatmul.mubr.bf16.gmra.mrb[0].mxu0 %v2425
      %v2473 = vpop.f32.mrb[0].mxu0
      %v2474 = vadd.f32 0.0, %v2473
      %v2475 = vpop.f32.mrb[0].mxu0
      %v2476 = vpop.f32.mrb[0].mxu0
      %v2477 = vadd.f32 0.0, %v2476
      %v2478 = vpop.f32.mrb[0].mxu0
      %2479 = vmatprep.mubr.bf16.mxu0 0
      %2480 = vmatmul.mubr.bf16.gmra.mrb[0].mxu0 %v2428
      %v2481 = vpop.f32.mrb[0].mxu0
      %v2482 = vadd.f32 0.0, %v2481
      %v2483 = vpop.f32.mrb[0].mxu0
      %v2484 = vpop.f32.mrb[0].mxu0
      %v2485 = vadd.f32 0.0, %v2484
      %v2486 = vpop.f32.mrb[0].mxu0
      %2487 = vmatprep.mubr.bf16.mxu0 0
      %2488 = vmatmul.mubr.bf16.gmra.mrb[0].mxu0 %v2431
      %v2489 = vpop.f32.mrb[0].mxu0
      %v2490 = vadd.f32 0.0, %v2489
      %v2491 = vpop.f32.mrb[0].mxu0
      %v2492 = vpop.f32.mrb[0].mxu0
      %v2493 = vadd.f32 0.0, %v2492
      %v2494 = vpop.f32.mrb[0].mxu0
      %2495 = vmatprep.mubr.bf16.mxu0 0
      %2496 = vmatmul.mubr.bf16.gmra.mrb[0].mxu0 %v2434
      %v2497 = vpop.f32.mrb[0].mxu0
      %v2498 = vadd.f32 0.0, %v2497
      %v2499 = vpop.f32.mrb[0].mxu0
      %v2500 = vpop.f32.mrb[0].mxu0
      %v2501 = vadd.f32 0.0, %v2500
      %v2502 = vpop.f32.mrb[0].mxu0
      %2503 = vmatprep.mubr.bf16.mxu0 0
      %2504 = vmatmul.mubr.bf16.gmra.mrb[0].mxu0 %v2437
      %v2505 = vpop.f32.mrb[0].mxu0
      %v2506 = vadd.f32 0.0, %v2505
      %v2507 = vpop.f32.mrb[0].mxu0
      %v2508 = vpop.f32.mrb[0].mxu0
      %v2509 = vadd.f32 0.0, %v2508
      %v2510 = vpop.f32.mrb[0].mxu0
      %2511 = vdwg.mxu0
      %v2512 = vadd.f32 %v2382, %v2474
      %v2513 = vadd.f32 %v2383, %v2477
      %v2514 = vadd.f32 %v2384, %v2482
      %v2515 = vadd.f32 %v2385, %v2485
      %v2516 = vadd.f32 %v2386, %v2490
      %v2517 = vadd.f32 %v2387, %v2493
      %v2518 = vadd.f32 %v2388, %v2498
      %v2519 = vadd.f32 %v2389, %v2501
      %v2520 = vadd.f32 %v2390, %v2506
      %v2521 = vadd.f32 %v2391, %v2509
      %v2522 = vld [vmem:[#allocation3 + $0x19] sm:$0xff]
      %v2523 = vld [vmem:[#allocation3 + $0x21] sm:$0xff]
      %v2524 = vld [vmem:[#allocation3 + $0x29] sm:$0xff]
      %v2525 = vld [vmem:[#allocation3 + $0x31] sm:$0xff]
      %v2526 = vld [vmem:[#allocation3 + $0x39] sm:$0xff]
      %v2527 = vld [vmem:[#allocation3 + $0x41] sm:$0xff]
      %v2528 = vld [vmem:[#allocation3 + $0x49] sm:$0xff]
      %v2529 = vld [vmem:[#allocation3 + $0x51] sm:$0xff]
      %v2530 = vld [vmem:[#allocation3 + $0x59] sm:$0xff]
      %v2531 = vld [vmem:[#allocation3 + $0x61] sm:$0xff]
      %v2532 = vpack.c.bf16 %v2523, %v2522
      %v2533 = vpack.c.bf16 %v2525, %v2524
      %v2534 = vpack.c.bf16 %v2527, %v2526
      %v2535 = vpack.c.bf16 %v2529, %v2528
      %v2536 = vpack.c.bf16 %v2531, %v2530
      %s2537 = scalar_lea.vmem %s5, 96
      %v2538 = vld [vmem:[%s2537] sm:$0xf]
      %v2539 = vld [vmem:[%s2537 + $0x4] sm:$0xf]
      %v2540 = vld [vmem:[%s2537 + $0x8] sm:$0xf]
      %v2541 = vld [vmem:[%s2537 + $0xc] sm:$0xf]
      %v2546 = vunpack.c.l.b16 %v2538
      %v2547 = vunpack.c.l.b16 %v2539
      %v2548 = vunpack.c.l.b16 %v2540
      %v2549 = vunpack.c.l.b16 %v2541
      %v2550 = vpack.c.b16 %v2547, %v2546
      %v2551 = vpack.c.b16 %v2549, %v2548
      %v2555 = vsel %vm1748, %v2532, 0
      %v2558 = vsel %vm1748, %v2533, 0
      %v2561 = vsel %vm1748, %v2534, 0
      %v2564 = vsel %vm1748, %v2535, 0
      %v2567 = vsel %vm1748, %v2536, 0
      %2569 = vmatprep.subr.bf16.mxu0 0
      %2570 = vmatpush1.bf16.msra.mxu0 %v2550
      %2571 = vmatprep.subr.bf16.mxu0 0
      %2572 = vmatpush1.bf16.msra.mxu0 %v2551
      %2573 = vmatprep.subr.bf16.mxu0 0
      %2574 = vmatpush1.bf16.msra.mxu0 0
      %2575 = vmatprep.subr.bf16.mxu0 0
      %2576 = vmatpush1.bf16.msra.mxu0 0
      %2577 = vmatprep.subr.bf16.mxu0 0
      %2578 = vmatpush1.bf16.msra.mxu0 0
      %2579 = vmatprep.subr.bf16.mxu0 0
      %2580 = vmatpush1.bf16.msra.mxu0 0
      %2581 = vmatprep.subr.bf16.mxu0 0
      %2582 = vmatpush1.bf16.msra.mxu0 0
      %2583 = vmatprep.subr.bf16.mxu0 0
      %2584 = vmatpush1.bf16.msra.mxu0 0
      %2585 = vmatprep.subr.bf16.mxu0 0
      %2586 = vmatpush1.bf16.msra.mxu0 0
      %2587 = vmatprep.subr.bf16.mxu0 0
      %2588 = vmatpush1.bf16.msra.mxu0 0
      %2589 = vmatprep.subr.bf16.mxu0 0
      %2590 = vmatpush1.bf16.msra.mxu0 0
      %2591 = vmatprep.subr.bf16.mxu0 0
      %2592 = vmatpush1.bf16.msra.mxu0 0
      %2593 = vmatprep.subr.bf16.mxu0 0
      %2594 = vmatpush1.bf16.msra.mxu0 0
      %2595 = vmatprep.subr.bf16.mxu0 0
      %2596 = vmatpush1.bf16.msra.mxu0 0
      %2597 = vmatprep.subr.bf16.mxu0 0
      %2598 = vmatpush1.bf16.msra.mxu0 0
      %2599 = vmatprep.subr.bf16.mxu0 0
      %2600 = vmatpush1.bf16.msra.mxu0 0
      %2601 = vmatprep.mubr.bf16.mxu0 0
      %2602 = vmatmul.mubr.bf16.gmra.mrb[0].mxu0 %v2555
      %v2603 = vpop.f32.mrb[0].mxu0
      %v2604 = vadd.f32 0.0, %v2603
      %v2605 = vpop.f32.mrb[0].mxu0
      %v2606 = vpop.f32.mrb[0].mxu0
      %v2607 = vadd.f32 0.0, %v2606
      %v2608 = vpop.f32.mrb[0].mxu0
      %2609 = vmatprep.mubr.bf16.mxu0 0
      %2610 = vmatmul.mubr.bf16.gmra.mrb[0].mxu0 %v2558
      %v2611 = vpop.f32.mrb[0].mxu0
      %v2612 = vadd.f32 0.0, %v2611
      %v2613 = vpop.f32.mrb[0].mxu0
      %v2614 = vpop.f32.mrb[0].mxu0
      %v2615 = vadd.f32 0.0, %v2614
      %v2616 = vpop.f32.mrb[0].mxu0
      %2617 = vmatprep.mubr.bf16.mxu0 0
      %2618 = vmatmul.mubr.bf16.gmra.mrb[0].mxu0 %v2561
      %v2619 = vpop.f32.mrb[0].mxu0
      %v2620 = vadd.f32 0.0, %v2619
      %v2621 = vpop.f32.mrb[0].mxu0
      %v2622 = vpop.f32.mrb[0].mxu0
      %v2623 = vadd.f32 0.0, %v2622
      %v2624 = vpop.f32.mrb[0].mxu0
      %2625 = vmatprep.mubr.bf16.mxu0 0
      %2626 = vmatmul.mubr.bf16.gmra.mrb[0].mxu0 %v2564
      %v2627 = vpop.f32.mrb[0].mxu0
      %v2628 = vadd.f32 0.0, %v2627
      %v2629 = vpop.f32.mrb[0].mxu0
      %v2630 = vpop.f32.mrb[0].mxu0
      %v2631 = vadd.f32 0.0, %v2630
      %v2632 = vpop.f32.mrb[0].mxu0
      %2633 = vmatprep.mubr.bf16.mxu0 0
      %2634 = vmatmul.mubr.bf16.gmra.mrb[0].mxu0 %v2567
      %v2635 = vpop.f32.mrb[0].mxu0
      %v2636 = vadd.f32 0.0, %v2635
      %v2637 = vpop.f32.mrb[0].mxu0
      %v2638 = vpop.f32.mrb[0].mxu0
      %v2639 = vadd.f32 0.0, %v2638
      %v2640 = vpop.f32.mrb[0].mxu0
      %2641 = vdwg.mxu0
      %v2642 = vadd.f32 %v2512, %v2604
      %v2643 = vadd.f32 %v2513, %v2607
      %v2644 = vadd.f32 %v2514, %v2612
      %v2645 = vadd.f32 %v2515, %v2615
      %v2646 = vadd.f32 %v2516, %v2620
      %v2647 = vadd.f32 %v2517, %v2623
      %v2648 = vadd.f32 %v2518, %v2628
      %v2649 = vadd.f32 %v2519, %v2631
      %v2650 = vadd.f32 %v2520, %v2636
      %v2651 = vadd.f32 %v2521, %v2639
      %v2652 = vld [vmem:[#allocation3 + $0x1a] sm:$0xff]
      %v2653 = vld [vmem:[#allocation3 + $0x22] sm:$0xff]
      %v2654 = vld [vmem:[#allocation3 + $0x2a] sm:$0xff]
      %v2655 = vld [vmem:[#allocation3 + $0x32] sm:$0xff]
      %v2656 = vld [vmem:[#allocation3 + $0x3a] sm:$0xff]
      %v2657 = vld [vmem:[#allocation3 + $0x42] sm:$0xff]
      %v2658 = vld [vmem:[#allocation3 + $0x4a] sm:$0xff]
      %v2659 = vld [vmem:[#allocation3 + $0x52] sm:$0xff]
      %v2660 = vld [vmem:[#allocation3 + $0x5a] sm:$0xff]
      %v2661 = vld [vmem:[#allocation3 + $0x62] sm:$0xff]
      %v2662 = vpack.c.bf16 %v2653, %v2652
      %v2663 = vpack.c.bf16 %v2655, %v2654
      %v2664 = vpack.c.bf16 %v2657, %v2656
      %v2665 = vpack.c.bf16 %v2659, %v2658
      %v2666 = vpack.c.bf16 %v2661, %v2660
      %s2667 = scalar_lea.vmem %s5, 112
      %v2668 = vld [vmem:[%s2667] sm:$0xf]
      %v2669 = vld [vmem:[%s2667 + $0x4] sm:$0xf]
      %v2670 = vld [vmem:[%s2667 + $0x8] sm:$0xf]
      %v2671 = vld [vmem:[%s2667 + $0xc] sm:$0xf]
      %v2676 = vunpack.c.l.b16 %v2668
      %v2677 = vunpack.c.l.b16 %v2669
      %v2678 = vunpack.c.l.b16 %v2670
      %v2679 = vunpack.c.l.b16 %v2671
      %v2680 = vpack.c.b16 %v2677, %v2676
      %v2681 = vpack.c.b16 %v2679, %v2678
      %v2685 = vsel %vm1748, %v2662, 0
      %v2688 = vsel %vm1748, %v2663, 0
      %v2691 = vsel %vm1748, %v2664, 0
      %v2694 = vsel %vm1748, %v2665, 0
      %v2697 = vsel %vm1748, %v2666, 0
      %2699 = vmatprep.subr.bf16.mxu0 0
      %2700 = vmatpush1.bf16.msra.mxu0 %v2680
      %2701 = vmatprep.subr.bf16.mxu0 0
      %2702 = vmatpush1.bf16.msra.mxu0 %v2681
      %2703 = vmatprep.subr.bf16.mxu0 0
      %2704 = vmatpush1.bf16.msra.mxu0 0
      %2705 = vmatprep.subr.bf16.mxu0 0
      %2706 = vmatpush1.bf16.msra.mxu0 0
      %2707 = vmatprep.subr.bf16.mxu0 0
      %2708 = vmatpush1.bf16.msra.mxu0 0
      %2709 = vmatprep.subr.bf16.mxu0 0
      %2710 = vmatpush1.bf16.msra.mxu0 0
      %2711 = vmatprep.subr.bf16.mxu0 0
      %2712 = vmatpush1.bf16.msra.mxu0 0
      %2713 = vmatprep.subr.bf16.mxu0 0
      %2714 = vmatpush1.bf16.msra.mxu0 0
      %2715 = vmatprep.subr.bf16.mxu0 0
      %2716 = vmatpush1.bf16.msra.mxu0 0
      %2717 = vmatprep.subr.bf16.mxu0 0
      %2718 = vmatpush1.bf16.msra.mxu0 0
      %2719 = vmatprep.subr.bf16.mxu0 0
      %2720 = vmatpush1.bf16.msra.mxu0 0
      %2721 = vmatprep.subr.bf16.mxu0 0
      %2722 = vmatpush1.bf16.msra.mxu0 0
      %2723 = vmatprep.subr.bf16.mxu0 0
      %2724 = vmatpush1.bf16.msra.mxu0 0
      %2725 = vmatprep.subr.bf16.mxu0 0
      %2726 = vmatpush1.bf16.msra.mxu0 0
      %2727 = vmatprep.subr.bf16.mxu0 0
      %2728 = vmatpush1.bf16.msra.mxu0 0
      %2729 = vmatprep.subr.bf16.mxu0 0
      %2730 = vmatpush1.bf16.msra.mxu0 0
      %2731 = vmatprep.mubr.bf16.mxu0 0
      %2732 = vmatmul.mubr.bf16.gmra.mrb[0].mxu0 %v2685
      %v2733 = vpop.f32.mrb[0].mxu0
      %v2734 = vadd.f32 0.0, %v2733
      %v2735 = vpop.f32.mrb[0].mxu0
      %v2736 = vpop.f32.mrb[0].mxu0
      %v2737 = vadd.f32 0.0, %v2736
      %v2738 = vpop.f32.mrb[0].mxu0
      %2739 = vmatprep.mubr.bf16.mxu0 0
      %2740 = vmatmul.mubr.bf16.gmra.mrb[0].mxu0 %v2688
      %v2741 = vpop.f32.mrb[0].mxu0
      %v2742 = vadd.f32 0.0, %v2741
      %v2743 = vpop.f32.mrb[0].mxu0
      %v2744 = vpop.f32.mrb[0].mxu0
      %v2745 = vadd.f32 0.0, %v2744
      %v2746 = vpop.f32.mrb[0].mxu0
      %2747 = vmatprep.mubr.bf16.mxu0 0
      %2748 = vmatmul.mubr.bf16.gmra.mrb[0].mxu0 %v2691
      %v2749 = vpop.f32.mrb[0].mxu0
      %v2750 = vadd.f32 0.0, %v2749
      %v2751 = vpop.f32.mrb[0].mxu0
      %v2752 = vpop.f32.mrb[0].mxu0
      %v2753 = vadd.f32 0.0, %v2752
      %v2754 = vpop.f32.mrb[0].mxu0
      %2755 = vmatprep.mubr.bf16.mxu0 0
      %2756 = vmatmul.mubr.bf16.gmra.mrb[0].mxu0 %v2694
      %v2757 = vpop.f32.mrb[0].mxu0
      %v2758 = vadd.f32 0.0, %v2757
      %v2759 = vpop.f32.mrb[0].mxu0
      %v2760 = vpop.f32.mrb[0].mxu0
      %v2761 = vadd.f32 0.0, %v2760
      %v2762 = vpop.f32.mrb[0].mxu0
      %2763 = vmatprep.mubr.bf16.mxu0 0
      %2764 = vmatmul.mubr.bf16.gmra.mrb[0].mxu0 %v2697
      %v2765 = vpop.f32.mrb[0].mxu0
      %v2766 = vadd.f32 0.0, %v2765
      %v2767 = vpop.f32.mrb[0].mxu0
      %v2768 = vpop.f32.mrb[0].mxu0
      %v2769 = vadd.f32 0.0, %v2768
      %v2770 = vpop.f32.mrb[0].mxu0
      %2771 = vdwg.mxu0
      %v2772 = vadd.f32 %v2642, %v2734
      %v2773 = vadd.f32 %v2643, %v2737
      %v2774 = vadd.f32 %v2644, %v2742
      %v2775 = vadd.f32 %v2645, %v2745
      %v2776 = vadd.f32 %v2646, %v2750
      %v2777 = vadd.f32 %v2647, %v2753
      %v2778 = vadd.f32 %v2648, %v2758
      %v2779 = vadd.f32 %v2649, %v2761
      %v2780 = vadd.f32 %v2650, %v2766
      %v2781 = vadd.f32 %v2651, %v2769
      %v2782 = vld [vmem:[#allocation3 + $0x1b] sm:$0xff]
      %v2783 = vld [vmem:[#allocation3 + $0x23] sm:$0xff]
      %v2784 = vld [vmem:[#allocation3 + $0x2b] sm:$0xff]
      %v2785 = vld [vmem:[#allocation3 + $0x33] sm:$0xff]
      %v2786 = vld [vmem:[#allocation3 + $0x3b] sm:$0xff]
      %v2787 = vld [vmem:[#allocation3 + $0x43] sm:$0xff]
      %v2788 = vld [vmem:[#allocation3 + $0x4b] sm:$0xff]
      %v2789 = vld [vmem:[#allocation3 + $0x53] sm:$0xff]
      %v2790 = vld [vmem:[#allocation3 + $0x5b] sm:$0xff]
      %v2791 = vld [vmem:[#allocation3 + $0x63] sm:$0xff]
      %v2792 = vpack.c.bf16 %v2783, %v2782
      %v2793 = vpack.c.bf16 %v2785, %v2784
      %v2794 = vpack.c.bf16 %v2787, %v2786
      %v2795 = vpack.c.bf16 %v2789, %v2788
      %v2796 = vpack.c.bf16 %v2791, %v2790
      %s2797 = scalar_lea.vmem %s5, 128
      %v2798 = vld [vmem:[%s2797] sm:$0xf]
      %v2799 = vld [vmem:[%s2797 + $0x4] sm:$0xf]
      %v2800 = vld [vmem:[%s2797 + $0x8] sm:$0xf]
      %v2801 = vld [vmem:[%s2797 + $0xc] sm:$0xf]
      %v2806 = vunpack.c.l.b16 %v2798
      %v2807 = vunpack.c.l.b16 %v2799
      %v2808 = vunpack.c.l.b16 %v2800
      %v2809 = vunpack.c.l.b16 %v2801
      %v2810 = vpack.c.b16 %v2807, %v2806
      %v2811 = vpack.c.b16 %v2809, %v2808
      %v2815 = vsel %vm1748, %v2792, 0
      %v2818 = vsel %vm1748, %v2793, 0
      %v2821 = vsel %vm1748, %v2794, 0
      %v2824 = vsel %vm1748, %v2795, 0
      %v2827 = vsel %vm1748, %v2796, 0
      %2829 = vmatprep.subr.bf16.mxu0 0
      %2830 = vmatpush1.bf16.msra.mxu0 %v2810
      %2831 = vmatprep.subr.bf16.mxu0 0
      %2832 = vmatpush1.bf16.msra.mxu0 %v2811
      %2833 = vmatprep.subr.bf16.mxu0 0
      %2834 = vmatpush1.bf16.msra.mxu0 0
      %2835 = vmatprep.subr.bf16.mxu0 0
      %2836 = vmatpush1.bf16.msra.mxu0 0
      %2837 = vmatprep.subr.bf16.mxu0 0
      %2838 = vmatpush1.bf16.msra.mxu0 0
      %2839 = vmatprep.subr.bf16.mxu0 0
      %2840 = vmatpush1.bf16.msra.mxu0 0
      %2841 = vmatprep.subr.bf16.mxu0 0
      %2842 = vmatpush1.bf16.msra.mxu0 0
      %2843 = vmatprep.subr.bf16.mxu0 0
      %2844 = vmatpush1.bf16.msra.mxu0 0
      %2845 = vmatprep.subr.bf16.mxu0 0
      %2846 = vmatpush1.bf16.msra.mxu0 0
      %2847 = vmatprep.subr.bf16.mxu0 0
      %2848 = vmatpush1.bf16.msra.mxu0 0
      %2849 = vmatprep.subr.bf16.mxu0 0
      %2850 = vmatpush1.bf16.msra.mxu0 0
      %2851 = vmatprep.subr.bf16.mxu0 0
      %2852 = vmatpush1.bf16.msra.mxu0 0
      %2853 = vmatprep.subr.bf16.mxu0 0
      %2854 = vmatpush1.bf16.msra.mxu0 0
      %2855 = vmatprep.subr.bf16.mxu0 0
      %2856 = vmatpush1.bf16.msra.mxu0 0
      %2857 = vmatprep.subr.bf16.mxu0 0
      %2858 = vmatpush1.bf16.msra.mxu0 0
      %2859 = vmatprep.subr.bf16.mxu0 0
      %2860 = vmatpush1.bf16.msra.mxu0 0
      %2861 = vmatprep.mubr.bf16.mxu0 0
      %2862 = vmatmul.mubr.bf16.gmra.mrb[0].mxu0 %v2815
      %v2863 = vpop.f32.mrb[0].mxu0
      %v2864 = vadd.f32 0.0, %v2863
      %v2865 = vpop.f32.mrb[0].mxu0
      %v2866 = vpop.f32.mrb[0].mxu0
      %v2867 = vadd.f32 0.0, %v2866
      %v2868 = vpop.f32.mrb[0].mxu0
      %2869 = vmatprep.mubr.bf16.mxu0 0
      %2870 = vmatmul.mubr.bf16.gmra.mrb[0].mxu0 %v2818
      %v2871 = vpop.f32.mrb[0].mxu0
      %v2872 = vadd.f32 0.0, %v2871
      %v2873 = vpop.f32.mrb[0].mxu0
      %v2874 = vpop.f32.mrb[0].mxu0
      %v2875 = vadd.f32 0.0, %v2874
      %v2876 = vpop.f32.mrb[0].mxu0
      %2877 = vmatprep.mubr.bf16.mxu0 0
      %2878 = vmatmul.mubr.bf16.gmra.mrb[0].mxu0 %v2821
      %v2879 = vpop.f32.mrb[0].mxu0
      %v2880 = vadd.f32 0.0, %v2879
      %v2881 = vpop.f32.mrb[0].mxu0
      %v2882 = vpop.f32.mrb[0].mxu0
      %v2883 = vadd.f32 0.0, %v2882
      %v2884 = vpop.f32.mrb[0].mxu0
      %2885 = vmatprep.mubr.bf16.mxu0 0
      %2886 = vmatmul.mubr.bf16.gmra.mrb[0].mxu0 %v2824
      %v2887 = vpop.f32.mrb[0].mxu0
      %v2888 = vadd.f32 0.0, %v2887
      %v2889 = vpop.f32.mrb[0].mxu0
      %v2890 = vpop.f32.mrb[0].mxu0
      %v2891 = vadd.f32 0.0, %v2890
      %v2892 = vpop.f32.mrb[0].mxu0
      %2893 = vmatprep.mubr.bf16.mxu0 0
      %2894 = vmatmul.mubr.bf16.gmra.mrb[0].mxu0 %v2827
      %v2895 = vpop.f32.mrb[0].mxu0
      %v2896 = vadd.f32 0.0, %v2895
      %v2897 = vpop.f32.mrb[0].mxu0
      %v2898 = vpop.f32.mrb[0].mxu0
      %v2899 = vadd.f32 0.0, %v2898
      %v2900 = vpop.f32.mrb[0].mxu0
      %2901 = vdwg.mxu0
      %v2902 = vadd.f32 %v2772, %v2864
      %v2903 = vadd.f32 %v2773, %v2867
      %v2904 = vadd.f32 %v2774, %v2872
      %v2905 = vadd.f32 %v2775, %v2875
      %v2906 = vadd.f32 %v2776, %v2880
      %v2907 = vadd.f32 %v2777, %v2883
      %v2908 = vadd.f32 %v2778, %v2888
      %v2909 = vadd.f32 %v2779, %v2891
      %v2910 = vadd.f32 %v2780, %v2896
      %v2911 = vadd.f32 %v2781, %v2899
      %v2912 = vld [vmem:[%s6] sm:$0x1]
      %v2914 = vlaneseq
      %v2915 = vshrl.u32 %v2914, 7
      %v2916 = vsub.s32 0, %v2915
      %v2917 = vrot.slane %v2912, %v2916
      %v2919 = vadd.f32 %v2902, %v2917
      %v2920 = vadd.f32 %v2903, %v2917
      %v2921 = vadd.f32 %v2904, %v2917
      %v2922 = vadd.f32 %v2905, %v2917
      %v2923 = vadd.f32 %v2906, %v2917
      %v2924 = vadd.f32 %v2907, %v2917
      %v2925 = vadd.f32 %v2908, %v2917
      %v2926 = vadd.f32 %v2909, %v2917
      %v2927 = vadd.f32 %v2910, %v2917
      %v2928 = vadd.f32 %v2911, %v2917
      %v2929 = vmul.f32 %v2919, %v1691
      %v2930 = vmul.f32 %v2920, %v1696
      %v2931 = vmul.f32 %v2921, %v1701
      %v2932 = vmul.f32 %v2922, %v1706
      %v2933 = vmul.f32 %v2923, %v1711
      %v2934 = vmul.f32 %v2924, %v1716
      %v2935 = vmul.f32 %v2925, %v1721
      %v2936 = vmul.f32 %v2926, %v1726
      %v2937 = vmul.f32 %v2927, %v1731
      %v2938 = vmul.f32 %v2928, %v1736
      %v2939 = vsel %vm1748, %v2929, 0.0
      %v2940 = vsel %vm1748, %v2930, 0.0
      %v2941 = vadd.f32 %v2939, %v2940
      %v2942 = vsel %vm1748, %v2931, 0.0
      %v2943 = vadd.f32 %v2941, %v2942
      %v2944 = vsel %vm1748, %v2932, 0.0
      %v2945 = vadd.f32 %v2943, %v2944
      %v2946 = vsel %vm1748, %v2933, 0.0
      %v2947 = vadd.f32 %v2945, %v2946
      %v2948 = vsel %vm1748, %v2934, 0.0
      %v2949 = vadd.f32 %v2947, %v2948
      %v2950 = vsel %vm1748, %v2935, 0.0
      %v2951 = vadd.f32 %v2949, %v2950
      %v2952 = vsel %vm1748, %v2936, 0.0
      %v2953 = vadd.f32 %v2951, %v2952
      %v2954 = vsel %vm1748, %v2937, 0.0
      %v2955 = vadd.f32 %v2953, %v2954
      %v2956 = vsel %vm1748, %v2938, 0.0
      %v2957 = vadd.f32 %v2955, %v2956
      %v2958 = vrot.slane %v2957, 4
      %v2959 = vadd.f32 %v2957, %v2958
      %v2960 = vrot.slane %v2959, 2
      %v2961 = vadd.f32 %v2959, %v2960
      %v2962 = vrot.slane %v2961, 1
      %v2963 = vadd.f32 %v2961, %v2962
      %v2964 = vmul.f32 %v2963, 0.015625
      %v2965 = vld [vmem:[%s7] sm:$0xff]
      %v2966 = vld [vmem:[%s7 + $0x8] sm:$0xff]
      %v2967 = vld [vmem:[%s7 + $0x10] sm:$0xff]
      %v2968 = vld [vmem:[%s7 + $0x18] sm:$0xff]
      %v2970 = vsel %vm1748, %v2964, 0
      %2972 = vmatprep.subr.mxu0 0.0
      %2973 = vmatpush1.msra.mxu0 %v2965
      %2974 = vmatprep.subr.mxu0 0.0
      %2975 = vmatpush1.msra.mxu0 %v2966
      %2976 = vmatprep.subr.mxu0 0.0
      %2977 = vmatpush1.msra.mxu0 %v2967
      %2978 = vmatprep.subr.mxu0 0.0
      %2979 = vmatpush1.msra.mxu0 %v2968
      %2980 = vmatprep.subr.mxu0 0.0
      %2981 = vmatpush1.msra.mxu0 0.0
      %2982 = vmatprep.subr.mxu0 0.0
      %2983 = vmatpush1.msra.mxu0 0.0
      %2984 = vmatprep.subr.mxu0 0.0
      %2985 = vmatpush1.msra.mxu0 0.0
      %2986 = vmatprep.subr.mxu0 0.0
      %2987 = vmatpush1.msra.mxu0 0.0
      %2988 = vmatprep.subr.mxu0 0.0
      %2989 = vmatpush1.msra.mxu0 0.0
      %2990 = vmatprep.subr.mxu0 0.0
      %2991 = vmatpush1.msra.mxu0 0.0
      %2992 = vmatprep.subr.mxu0 0.0
      %2993 = vmatpush1.msra.mxu0 0.0
      %2994 = vmatprep.subr.mxu0 0.0
      %2995 = vmatpush1.msra.mxu0 0.0
      %2996 = vmatprep.subr.mxu0 0.0
      %2997 = vmatpush1.msra.mxu0 0.0
      %2998 = vmatprep.subr.mxu0 0.0
      %2999 = vmatpush1.msra.mxu0 0.0
      %3000 = vmatprep.subr.mxu0 0.0
      %3001 = vmatpush1.msra.mxu0 0.0
      %3002 = vmatprep.subr.mxu0 0.0
      %3003 = vmatpush1.msra.mxu0 0.0
      %3004 = vmatprep.subr.mxu0 0.0
      %3005 = vmatpush1.msra.mxu0 0.0
      %3006 = vmatprep.subr.mxu0 0.0
      %3007 = vmatpush1.msra.mxu0 0.0
      %3008 = vmatprep.subr.mxu0 0.0
      %3009 = vmatpush1.msra.mxu0 0.0
      %3010 = vmatprep.subr.mxu0 0.0
      %3011 = vmatpush1.msra.mxu0 0.0
      %3012 = vmatprep.subr.mxu0 0.0
      %3013 = vmatpush1.msra.mxu0 0.0
      %3014 = vmatprep.subr.mxu0 0.0
      %3015 = vmatpush1.msra.mxu0 0.0
      %3016 = vmatprep.subr.mxu0 0.0
      %3017 = vmatpush1.msra.mxu0 0.0
      %3018 = vmatprep.subr.mxu0 0.0
      %3019 = vmatpush1.msra.mxu0 0.0
      %3020 = vmatprep.subr.mxu0 0.0
      %3021 = vmatpush1.msra.mxu0 0.0
      %3022 = vmatprep.subr.mxu0 0.0
      %3023 = vmatpush1.msra.mxu0 0.0
      %3024 = vmatprep.subr.mxu0 0.0
      %3025 = vmatpush1.msra.mxu0 0.0
      %3026 = vmatprep.subr.mxu0 0.0
      %3027 = vmatpush1.msra.mxu0 0.0
      %3028 = vmatprep.subr.mxu0 0.0
      %3029 = vmatpush1.msra.mxu0 0.0
      %3030 = vmatprep.subr.mxu0 0.0
      %3031 = vmatpush1.msra.mxu0 0.0
      %3032 = vmatprep.subr.mxu0 0.0
      %3033 = vmatpush1.msra.mxu0 0.0
      %3034 = vmatprep.subr.mxu0 0.0
      %3035 = vmatpush1.msra.mxu0 0.0
      %3036 = vmatprep.mubr.f32.mxu0 0.0
      %3037 = vmatmul.mubr.f32.gmra.mrb[0].mxu0 %v2970
      %v3038 = vpop.f32.mrb[0].mxu0
      %v3039 = vadd.f32 0.0, %v3038
      %v3040 = vpop.f32.mrb[0].mxu0
      %3041 = vdwg.mxu0
      %v3042 = vmax.f32 %v3039, 0.0
      %v3043 = vld [vmem:[%s8] sm:$0xff]
      %vm3044 = vcmask 64512
      %v3046 = vsel %vm3044, %v3042, 0
      %3048 = vmatprep.subr.mxu0 0.0
      %3049 = vmatpush1.msra.mxu0 %v3043
      %3050 = vmatprep.subr.mxu0 0.0
      %3051 = vmatpush1.msra.mxu0 0.0
      %3052 = vmatprep.subr.mxu0 0.0
      %3053 = vmatpush1.msra.mxu0 0.0
      %3054 = vmatprep.subr.mxu0 0.0
      %3055 = vmatpush1.msra.mxu0 0.0
      %3056 = vmatprep.subr.mxu0 0.0
      %3057 = vmatpush1.msra.mxu0 0.0
      %3058 = vmatprep.subr.mxu0 0.0
      %3059 = vmatpush1.msra.mxu0 0.0
      %3060 = vmatprep.subr.mxu0 0.0
      %3061 = vmatpush1.msra.mxu0 0.0
      %3062 = vmatprep.subr.mxu0 0.0
      %3063 = vmatpush1.msra.mxu0 0.0
      %3064 = vmatprep.subr.mxu0 0.0
      %3065 = vmatpush1.msra.mxu0 0.0
      %3066 = vmatprep.subr.mxu0 0.0
      %3067 = vmatpush1.msra.mxu0 0.0
      %3068 = vmatprep.subr.mxu0 0.0
      %3069 = vmatpush1.msra.mxu0 0.0
      %3070 = vmatprep.subr.mxu0 0.0
      %3071 = vmatpush1.msra.mxu0 0.0
      %3072 = vmatprep.subr.mxu0 0.0
      %3073 = vmatpush1.msra.mxu0 0.0
      %3074 = vmatprep.subr.mxu0 0.0
      %3075 = vmatpush1.msra.mxu0 0.0
      %3076 = vmatprep.subr.mxu0 0.0
      %3077 = vmatpush1.msra.mxu0 0.0
      %3078 = vmatprep.subr.mxu0 0.0
      %3079 = vmatpush1.msra.mxu0 0.0
      %3080 = vmatprep.subr.mxu0 0.0
      %3081 = vmatpush1.msra.mxu0 0.0
      %3082 = vmatprep.subr.mxu0 0.0
      %3083 = vmatpush1.msra.mxu0 0.0
      %3084 = vmatprep.subr.mxu0 0.0
      %3085 = vmatpush1.msra.mxu0 0.0
      %3086 = vmatprep.subr.mxu0 0.0
      %3087 = vmatpush1.msra.mxu0 0.0
      %3088 = vmatprep.subr.mxu0 0.0
      %3089 = vmatpush1.msra.mxu0 0.0
      %3090 = vmatprep.subr.mxu0 0.0
      %3091 = vmatpush1.msra.mxu0 0.0
      %3092 = vmatprep.subr.mxu0 0.0
      %3093 = vmatpush1.msra.mxu0 0.0
      %3094 = vmatprep.subr.mxu0 0.0
      %3095 = vmatpush1.msra.mxu0 0.0
      %3096 = vmatprep.subr.mxu0 0.0
      %3097 = vmatpush1.msra.mxu0 0.0
      %3098 = vmatprep.subr.mxu0 0.0
      %3099 = vmatpush1.msra.mxu0 0.0
      %3100 = vmatprep.subr.mxu0 0.0
      %3101 = vmatpush1.msra.mxu0 0.0
      %3102 = vmatprep.subr.mxu0 0.0
      %3103 = vmatpush1.msra.mxu0 0.0
      %3104 = vmatprep.subr.mxu0 0.0
      %3105 = vmatpush1.msra.mxu0 0.0
      %3106 = vmatprep.subr.mxu0 0.0
      %3107 = vmatpush1.msra.mxu0 0.0
      %3108 = vmatprep.subr.mxu0 0.0
      %3109 = vmatpush1.msra.mxu0 0.0
      %3110 = vmatprep.subr.mxu0 0.0
      %3111 = vmatpush1.msra.mxu0 0.0
      %3112 = vmatprep.mubr.f32.mxu0 0.0
      %3113 = vmatmul.mubr.f32.gmra.mrb[0].mxu0 %v3046
      %v3114 = vpop.f32.mrb[0].mxu0
      %v3115 = vadd.f32 0.0, %v3114
      %v3116 = vpop.f32.mrb[0].mxu0
      %3117 = vdwg.mxu0
      %v3118 = vxor.u32 %v3115, 2147483648
      %v3119 = vmul.f32 %v3118, 1.442695
      %v3120 = vpow.pop %v3119
      %v3121 = vadd.f32 %v3120, 1.0
      %v3122 = vrcp.pop %v3121
      %v3123 = vmul.f32 1.0, %v3122
      %v3124 = vld [vmem:[%s401] sm:$0xf]
      %v3125 = vld [vmem:[%s401 + $0x4] sm:$0xf]
      %v3126 = vld [vmem:[%s401 + $0x8] sm:$0xf]
      %v3127 = vld [vmem:[%s401 + $0xc] sm:$0xf]
      %v3128 = vld [vmem:[%s401 + $0x10] sm:$0xf]
      %v3129 = vld [vmem:[%s401 + $0x14] sm:$0xf]
      %v3130 = vld [vmem:[%s401 + $0x18] sm:$0xf]
      %v3131 = vld [vmem:[%s401 + $0x1c] sm:$0xf]
      %v3132 = vld [vmem:[%s401 + $0x20] sm:$0xf]
      %v3133 = vld [vmem:[%s401 + $0x24] sm:$0xf]
      %v3134 = vld [vmem:[%s9] sm:$0xf]
      %v3135 = vld [vmem:[%s9 + $0x4] sm:$0xf]
      %v3136 = vld [vmem:[%s10] sm:$0x1]
      %v3138 = vlaneseq
      %v3139 = vshrl.u32 %v3138, 7
      %v3140 = vsub.s32 0, %v3139
      %v3141 = vrot.slane %v3136, %v3140
      %v3153 = vunpack.c.l.b16 %v3124
      %v3154 = vunpack.c.l.b16 %v3125
      %v3155 = vunpack.c.l.b16 %v3126
      %v3156 = vunpack.c.l.b16 %v3127
      %v3157 = vunpack.c.l.b16 %v3128
      %v3158 = vunpack.c.l.b16 %v3129
      %v3159 = vunpack.c.l.b16 %v3130
      %v3160 = vunpack.c.l.b16 %v3131
      %v3161 = vunpack.c.l.b16 %v3132
      %v3162 = vunpack.c.l.b16 %v3133
      %v3163 = vpack.c.b16 %v3154, %v3153
      %v3164 = vpack.c.b16 %v3156, %v3155
      %v3165 = vpack.c.b16 %v3158, %v3157
      %v3166 = vpack.c.b16 %v3160, %v3159
      %v3167 = vpack.c.b16 %v3162, %v3161
      %v3170 = vunpack.c.l.b16 %v3134
      %v3171 = vunpack.c.l.b16 %v3135
      %v3172 = vpack.c.b16 %v3171, %v3170
      %v3175 = vsel %vm528, %v3163, 0
      %v3178 = vsel %vm528, %v3164, 0
      %v3181 = vsel %vm528, %v3165, 0
      %v3184 = vsel %vm528, %v3166, 0
      %v3187 = vsel %vm528, %v3167, 0
      %3189 = vmatprep.subr.bf16.mxu0 0
      %3190 = vmatpush1.bf16.msra.mxu0 %v3172
      %3191 = vmatprep.subr.bf16.mxu0 0
      %3192 = vmatpush1.bf16.msra.mxu0 0
      %3193 = vmatprep.subr.bf16.mxu0 0
      %3194 = vmatpush1.bf16.msra.mxu0 0
      %3195 = vmatprep.subr.bf16.mxu0 0
      %3196 = vmatpush1.bf16.msra.mxu0 0
      %3197 = vmatprep.subr.bf16.mxu0 0
      %3198 = vmatpush1.bf16.msra.mxu0 0
      %3199 = vmatprep.subr.bf16.mxu0 0
      %3200 = vmatpush1.bf16.msra.mxu0 0
      %3201 = vmatprep.subr.bf16.mxu0 0
      %3202 = vmatpush1.bf16.msra.mxu0 0
      %3203 = vmatprep.subr.bf16.mxu0 0
      %3204 = vmatpush1.bf16.msra.mxu0 0
      %3205 = vmatprep.subr.bf16.mxu0 0
      %3206 = vmatpush1.bf16.msra.mxu0 0
      %3207 = vmatprep.subr.bf16.mxu0 0
      %3208 = vmatpush1.bf16.msra.mxu0 0
      %3209 = vmatprep.subr.bf16.mxu0 0
      %3210 = vmatpush1.bf16.msra.mxu0 0
      %3211 = vmatprep.subr.bf16.mxu0 0
      %3212 = vmatpush1.bf16.msra.mxu0 0
      %3213 = vmatprep.subr.bf16.mxu0 0
      %3214 = vmatpush1.bf16.msra.mxu0 0
      %3215 = vmatprep.subr.bf16.mxu0 0
      %3216 = vmatpush1.bf16.msra.mxu0 0
      %3217 = vmatprep.subr.bf16.mxu0 0
      %3218 = vmatpush1.bf16.msra.mxu0 0
      %3219 = vmatprep.subr.bf16.mxu0 0
      %3220 = vmatpush1.bf16.msra.mxu0 0
      %3221 = vmatprep.mubr.bf16.mxu0 0
      %3222 = vmatmul.mubr.bf16.gmra.mrb[0].mxu0 %v3175
      %v3223 = vpop.f32.mrb[0].mxu0
      %v3224 = vadd.f32 %v3141, %v3223
      %v3225 = vpop.f32.mrb[0].mxu0
      %v3226 = vpop.f32.mrb[0].mxu0
      %v3227 = vadd.f32 %v3141, %v3226
      %v3228 = vpop.f32.mrb[0].mxu0
      %3229 = vmatprep.mubr.bf16.mxu0 0
      %3230 = vmatmul.mubr.bf16.gmra.mrb[0].mxu0 %v3178
      %v3231 = vpop.f32.mrb[0].mxu0
      %v3232 = vadd.f32 %v3141, %v3231
      %v3233 = vpop.f32.mrb[0].mxu0
      %v3234 = vpop.f32.mrb[0].mxu0
      %v3235 = vadd.f32 %v3141, %v3234
      %v3236 = vpop.f32.mrb[0].mxu0
      %3237 = vmatprep.mubr.bf16.mxu0 0
      %3238 = vmatmul.mubr.bf16.gmra.mrb[0].mxu0 %v3181
      %v3239 = vpop.f32.mrb[0].mxu0
      %v3240 = vadd.f32 %v3141, %v3239
      %v3241 = vpop.f32.mrb[0].mxu0
      %v3242 = vpop.f32.mrb[0].mxu0
      %v3243 = vadd.f32 %v3141, %v3242
      %v3244 = vpop.f32.mrb[0].mxu0
      %3245 = vmatprep.mubr.bf16.mxu0 0
      %3246 = vmatmul.mubr.bf16.gmra.mrb[0].mxu0 %v3184
      %v3247 = vpop.f32.mrb[0].mxu0
      %v3248 = vadd.f32 %v3141, %v3247
      %v3249 = vpop.f32.mrb[0].mxu0
      %v3250 = vpop.f32.mrb[0].mxu0
      %v3251 = vadd.f32 %v3141, %v3250
      %v3252 = vpop.f32.mrb[0].mxu0
      %3253 = vmatprep.mubr.bf16.mxu0 0
      %3254 = vmatmul.mubr.bf16.gmra.mrb[0].mxu0 %v3187
      %v3255 = vpop.f32.mrb[0].mxu0
      %v3256 = vadd.f32 %v3141, %v3255
      %v3257 = vpop.f32.mrb[0].mxu0
      %v3258 = vpop.f32.mrb[0].mxu0
      %v3259 = vadd.f32 %v3141, %v3258
      %v3260 = vpop.f32.mrb[0].mxu0
      %3261 = vdwg.mxu0
      %v3262 = vlaneseq
      %v3263 = vshrl.u32 %v3262, 7
      %v3264 = vsub.s32 0, %v3263
      %v3265 = vrot.slane %v3123, %v3264
      %v3266 = vmul.f32 %v2919, %v3265
      %v3267 = vmul.f32 %v2920, %v3265
      %v3268 = vmul.f32 %v2921, %v3265
      %v3269 = vmul.f32 %v2922, %v3265
      %v3270 = vmul.f32 %v2923, %v3265
      %v3271 = vmul.f32 %v2924, %v3265
      %v3272 = vmul.f32 %v2925, %v3265
      %v3273 = vmul.f32 %v2926, %v3265
      %v3274 = vmul.f32 %v2927, %v3265
      %v3275 = vmul.f32 %v2928, %v3265
      %v3276 = vadd.f32 %v3266, %v3224
      %v3277 = vadd.f32 %v3267, %v3227
      %v3278 = vadd.f32 %v3268, %v3232
      %v3279 = vadd.f32 %v3269, %v3235
      %v3280 = vadd.f32 %v3270, %v3240
      %v3281 = vadd.f32 %v3271, %v3243
      %v3282 = vadd.f32 %v3272, %v3248
      %v3283 = vadd.f32 %v3273, %v3251
      %v3284 = vadd.f32 %v3274, %v3256
      %v3285 = vadd.f32 %v3275, %v3259
      %v3286 = vmax.f32 %v3276, 0.0
      %v3287 = vmax.f32 %v3277, 0.0
      %v3288 = vmax.f32 %v3278, 0.0
      %v3289 = vmax.f32 %v3279, 0.0
      %v3290 = vmax.f32 %v3280, 0.0
      %v3291 = vmax.f32 %v3281, 0.0
      %v3292 = vmax.f32 %v3282, 0.0
      %v3293 = vmax.f32 %v3283, 0.0
      %v3294 = vmax.f32 %v3284, 0.0
      %v3295 = vmax.f32 %v3285, 0.0
      %3296 = vst.msk [vmem:[%s406] sm:$0xff] %vm1748, %v3286
      %3297 = vst.msk [vmem:[%s406 + $0x8] sm:$0xff] %vm1748, %v3287
      %3298 = vst.msk [vmem:[%s406 + $0x10] sm:$0xff] %vm1748, %v3288
      %3299 = vst.msk [vmem:[%s406 + $0x18] sm:$0xff] %vm1748, %v3289
      %3300 = vst.msk [vmem:[%s406 + $0x20] sm:$0xff] %vm1748, %v3290
      %3301 = vst.msk [vmem:[%s406 + $0x28] sm:$0xff] %vm1748, %v3291
      %3302 = vst.msk [vmem:[%s406 + $0x30] sm:$0xff] %vm1748, %v3292
      %3303 = vst.msk [vmem:[%s406 + $0x38] sm:$0xff] %vm1748, %v3293
      %3304 = vst.msk [vmem:[%s406 + $0x40] sm:$0xff] %vm1748, %v3294
      %3305 = vst.msk [vmem:[%s406 + $0x48] sm:$0xff] %vm1748, %v3295
      %p3306 = scmp.lt.s32.totalorder %s22, 1
      %s3307 = scalar_select %p3306, %s22, 1
      %s3308 = smul.addr %s3307, 10
      %s3309 = smul.addr %s3308, 8
      %s3310 = scalar_lea.vmem %s11, %s3309
      // Predicated region
      $region65: #{residual_se_basic_block.1} parent=63 // pred_check
        %p3311 = pneg %p281
      $region66: #{residual_se_basic_block.1} parent=63 // pred_check_branch
        %3313 = sbr.rel (%p3311) target = $region68
      $region67: #{residual_se_basic_block.1} parent=63 // pred_region
        _
      $region68: #{residual_se_basic_block.1} parent=63 // pred_fallthru
        _
    $region64: #{residual_se_basic_block.1} parent=5 // pred_fallthru
      _
    %p3314 = scmp.le.s32.totalorder 2, %s17
    // Predicated region
    $region69: #{residual_se_basic_block.1} parent=5 // pred_check
      %p3315 = pneg %p3314
    $region70: #{residual_se_basic_block.1} parent=5 // pred_check_branch
      %3317 = sbr.rel (%p3315) target = $region72
    $region71: #{residual_se_basic_block.1} parent=5 // pred_region
      %s3318 = ssub.s32 %s17, 2
      // Predicated region
      $region73: #{residual_se_basic_block.1} parent=71 // pred_check
        %p3319 = pneg %p287
      $region74: #{residual_se_basic_block.1} parent=71 // pred_check_branch
        %3321 = sbr.rel (%p3319) target = $region76
      $region75: #{residual_se_basic_block.1} parent=71 // pred_region
        %p3322 = scmp.lt.s32.totalorder %s23, 1
        %s3323 = scalar_select %p3322, %s23, 1
        %s3324 = smul.addr %s3323, 10
        %s3325 = smul.addr %s3324, 8
        %s3326 = scalar_lea.vmem %s11, %s3325
      $region76: #{residual_se_basic_block.1} parent=71 // pred_fallthru
        _
    $region72: #{residual_se_basic_block.1} parent=5 // pred_fallthru
      _
  $region6: #{residual_se_basic_block.1} parent=0 // loop_footer
    %s21 = sadd.s32 1, %s17
  $region7: #{residual_se_basic_block.1} parent=0 // loop_footer_branch
    %16 = sbr.rel target = $region3
  $region8: #{residual_se_basic_block.1} parent=0 // loop_exit
    _

</llo_original>
